<compile_context>
chip_gen: v6e
topology: v6e:2x2x1
jax: 0.10.0
libtpu: 0.0.40
codegen_flags: <defaults>
</compile_context>

<pallas_src>
import jax
import jax.numpy as jnp
from jax.experimental import pallas as pl
from jax.experimental.pallas import tpu as pltpu


# ----------------------------- Pallas kernel -------------------------------

def coord_pred_kernel(x_ref,
                      w_ih_e, w_hh_e, b_e,
                      w_ih_d, w_hh_d, b_d,
                      w_y, b_y,
                      out_ref,
                      h_hist):
    H = w_hh_e.shape[0]
    T = x_ref.shape[0]
    n_dec = out_ref.shape[0]

    # Hoist all weight reads into locals (vregs) once.
    w_hh_e_v = w_hh_e[...]
    w_ih_d_v = w_ih_d[...]
    w_hh_d_v = w_hh_d[...]
    b_d_v = b_d[...]
    w_y_v = w_y[...]
    b_y_v = b_y[...]

    def gates_to_state(gates, c):
        # Full-vreg transcendentals (one sigmoid + one tanh over all 4H lanes),
        # then static lane slices to extract the gates: 3 EUP pushes/step total.
        sig = jax.nn.sigmoid(gates)
        th = jnp.tanh(gates)
        i = sig[:, 0:H]
        f = sig[:, H:2 * H]
        o = sig[:, 3 * H:4 * H]
        g = th[:, 2 * H:3 * H]
        c_new = f * c + i * g
        h_new = o * jnp.tanh(c_new)
        return h_new, c_new

    # ----- encoder: for input in inputs: self.encode(input) -----
    # x @ W_ih + b has no dependence on h: one (T,in)@(in,4H) matmul up front.
    gx = (jnp.dot(x_ref[...], w_ih_e[...], preferred_element_type=jnp.float32)
          + b_e[...])

    h = jnp.zeros((1, H), jnp.float32)
    c = jnp.zeros((1, H), jnp.float32)
    for t in range(T):  # fully unrolled at trace time
        gates = gx[t:t + 1, :] + jnp.dot(h, w_hh_e_v,
                                         preferred_element_type=jnp.float32)
        h, c = gates_to_state(gates, c)

    # self.hr = (h_enc, zeros(1, H)); decode_input = zeros(1, output_size)
    c = jnp.zeros((1, H), jnp.float32)

    # Fold the output projection into the decoder recurrence (exact algebra):
    #   gates_t = y_{t-1} @ W_ih_dec + h_{t-1} @ W_hh_dec + b_dec
    #           = h_{t-1} @ (W_hh_dec + W_y @ W_ih_dec) + (b_dec + b_y @ W_ih_dec)
    # Independent of the encoder chain, so this overlaps with it.
    w_comb = w_hh_d_v + jnp.dot(w_y_v, w_ih_d_v,
                                preferred_element_type=jnp.float32)
    b_comb = b_d_v + jnp.dot(b_y_v, w_ih_d_v,
                             preferred_element_type=jnp.float32)

    # ----- decoder: 30 autoregressive steps -----
    # Step 0 peeled: decode_input is zero, so use the unfolded weights.
    gates = jnp.dot(h, w_hh_d_v, preferred_element_type=jnp.float32) + b_d_v
    h, c = gates_to_state(gates, c)
    h_hist[0:1, :] = h

    # Steps 1..n_dec-1: one matmul per step on the serial path.
    for t in range(1, n_dec):  # fully unrolled at trace time
        gates = jnp.dot(h, w_comb, preferred_element_type=jnp.float32) + b_comb
        h, c = gates_to_state(gates, c)
        h_hist[t:t + 1, :] = h

    # One batched output projection (n_dec,H)@(H,O) + one dense store.
    ys = (jnp.dot(h_hist[...], w_y_v, preferred_element_type=jnp.float32)
          + b_y_v)
    out_ref[...] = ys


# ------------------------------- wrapper ------------------------------------

def coordinate_prediction_forward(x, params, num_decode_steps=30):
    H = params["w_hh_enc"].shape[0]
    O = params["w_y"].shape[1]
    vmem = pl.BlockSpec(memory_space=pltpu.MemorySpace.VMEM)
    # No grid: total footprint (x + weights + scratch) is a few KiB, so
    # everything stays resident in VMEM; tiling/pipelining would only add
    # per-step overhead to a latency-bound kernel.
    out = pl.pallas_call(
        coord_pred_kernel,
        out_shape=jax.ShapeDtypeStruct((num_decode_steps, O), jnp.float32),
        in_specs=[vmem] * 9,
        out_specs=vmem,
        scratch_shapes=[
            pltpu.VMEM((num_decode_steps, H), jnp.float32),   # decoder h history
        ],
    )(x,
      params["w_ih_enc"], params["w_hh_enc"], params["b_enc"],
      params["w_ih_dec"], params["w_hh_dec"], params["b_dec"],
      params["w_y"], params["b_y"])
    # torch.stack of thirty (1, output_size) tensors -> (30, 1, output_size)
    return out.reshape(num_decode_steps, 1, O)


# --------------------------- pure-JAX reference ------------------------------

def reference_forward(x, params, num_decode_steps=30):
    H = params["w_hh_enc"].shape[0]
    O = params["w_y"].shape[1]

    def cell(xr, h, c, w_ih, w_hh, b):
        gates = xr @ w_ih + h @ w_hh + b
        i = jax.nn.sigmoid(gates[:, 0:H])
        f = jax.nn.sigmoid(gates[:, H:2 * H])
        g = jnp.tanh(gates[:, 2 * H:3 * H])
        o = jax.nn.sigmoid(gates[:, 3 * H:4 * H])
        c = f * c + i * g
        h = o * jnp.tanh(c)
        return h, c

    h = jnp.zeros((1, H), jnp.float32)
    c = jnp.zeros((1, H), jnp.float32)
    for t in range(x.shape[0]):
        h, c = cell(x[t:t + 1], h, c,
                    params["w_ih_enc"], params["w_hh_enc"], params["b_enc"])
    c = jnp.zeros((1, H), jnp.float32)
    y = jnp.zeros((1, O), jnp.float32)
    ys = []
    for _ in range(num_decode_steps):
        h, c = cell(y, h, c,
                    params["w_ih_dec"], params["w_hh_dec"], params["b_dec"])
        y = h @ params["w_y"] + params["b_y"]
        ys.append(y)
    return jnp.stack(ys)


# ------------------------------ param init -----------------------------------

def init_params(key, input_size, output_size, hidden_size):
    # PyTorch LSTMCell / Linear default: U(-k, k), k = 1/sqrt(fan)
    k_lstm = 1.0 / jnp.sqrt(hidden_size)
    k_lin = 1.0 / jnp.sqrt(hidden_size)
    keys = jax.random.split(key, 10)

    def u(k, shape, bound):
        return jax.random.uniform(k, shape, jnp.float32, -bound, bound)

    H4 = 4 * hidden_size
    return {
        # encoder LSTMCell (weights stored transposed: x @ W)
        "w_ih_enc": u(keys[0], (input_size, H4), k_lstm),
        "w_hh_enc": u(keys[1], (hidden_size, H4), k_lstm),
        "b_enc": (u(keys[2], (1, H4), k_lstm) + u(keys[3], (1, H4), k_lstm)),
        # decoder LSTMCell
        "w_ih_dec": u(keys[4], (output_size, H4), k_lstm),
        "w_hh_dec": u(keys[5], (hidden_size, H4), k_lstm),
        "b_dec": (u(keys[6], (1, H4), k_lstm) + u(keys[7], (1, H4), k_lstm)),
        # Linear head W_hr_y
        "w_y": u(keys[8], (hidden_size, output_size), k_lin),
        "b_y": u(keys[9], (1, output_size), k_lin),
    }


# --------------------------------- main ---------------------------------------

if __name__ == "__main__":
    # TODO(synk): training branch (outputs is not None -> accumulated MSE loss)
    # is not implemented; only the 30-step autoregressive inference path is.
    INPUT_SIZE = 8
    OUTPUT_SIZE = 4
    HIDDEN_SIZE = 32
    SEQ_LEN = 8
    NUM_DECODE = 30

    root = jax.random.PRNGKey(0)
    k_x, k_p = jax.random.split(root)
    x = jax.random.normal(k_x, (SEQ_LEN, INPUT_SIZE), jnp.float32)
    params = init_params(k_p, INPUT_SIZE, OUTPUT_SIZE, HIDDEN_SIZE)

    out = coordinate_prediction_forward(x, params, NUM_DECODE)
    out = jax.block_until_ready(out)

    ref = reference_forward(x, params, NUM_DECODE)
    assert out.shape == (NUM_DECODE, 1, OUTPUT_SIZE), out.shape
    assert bool(jnp.all(jnp.isfinite(out)))
    assert bool(jnp.allclose(out, ref, rtol=1e-2, atol=1e-2)), (
        float(jnp.max(jnp.abs(out - ref))))

    print("KERNEL_OK")
</pallas_src>

<mosaic_0001>
module attributes {stable_mosaic.version = 11 : i64} {
  func.func @coord_pred_kernel(%arg0: memref<8x8xf32, #tpu.memory_space<vmem>>, %arg1: memref<8x128xf32, #tpu.memory_space<vmem>>, %arg2: memref<32x128xf32, #tpu.memory_space<vmem>>, %arg3: memref<1x128xf32, #tpu.memory_space<vmem>>, %arg4: memref<4x128xf32, #tpu.memory_space<vmem>>, %arg5: memref<32x128xf32, #tpu.memory_space<vmem>>, %arg6: memref<1x128xf32, #tpu.memory_space<vmem>>, %arg7: memref<32x4xf32, #tpu.memory_space<vmem>>, %arg8: memref<1x4xf32, #tpu.memory_space<vmem>>, %arg9: memref<30x4xf32, #tpu.memory_space<vmem>>, %arg10: memref<30x32xf32, #tpu.memory_space<vmem>>) attributes {dimension_semantics = [], scalar_prefetch = 0 : i64, scratch_operands = 1 : i64, tpu.core_type = #tpu.core_type<tc>} {
    %c0 = arith.constant 0 : index
    %c0_0 = arith.constant 0 : index
    %0 = vector.load %arg2[%c0, %c0_0] : memref<32x128xf32, #tpu.memory_space<vmem>>, vector<32x128xf32>
    %c0_1 = arith.constant 0 : index
    %c0_2 = arith.constant 0 : index
    %1 = vector.load %arg4[%c0_1, %c0_2] : memref<4x128xf32, #tpu.memory_space<vmem>>, vector<4x128xf32>
    %c0_3 = arith.constant 0 : index
    %c0_4 = arith.constant 0 : index
    %2 = vector.load %arg5[%c0_3, %c0_4] : memref<32x128xf32, #tpu.memory_space<vmem>>, vector<32x128xf32>
    %c0_5 = arith.constant 0 : index
    %c0_6 = arith.constant 0 : index
    %3 = vector.load %arg6[%c0_5, %c0_6] : memref<1x128xf32, #tpu.memory_space<vmem>>, vector<1x128xf32>
    %c0_7 = arith.constant 0 : index
    %c0_8 = arith.constant 0 : index
    %4 = vector.load %arg7[%c0_7, %c0_8] : memref<32x4xf32, #tpu.memory_space<vmem>>, vector<32x4xf32>
    %c0_9 = arith.constant 0 : index
    %c0_10 = arith.constant 0 : index
    %5 = vector.load %arg8[%c0_9, %c0_10] : memref<1x4xf32, #tpu.memory_space<vmem>>, vector<1x4xf32>
    %c0_11 = arith.constant 0 : index
    %c0_12 = arith.constant 0 : index
    %6 = vector.load %arg0[%c0_11, %c0_12] : memref<8x8xf32, #tpu.memory_space<vmem>>, vector<8x8xf32>
    %c0_13 = arith.constant 0 : index
    %c0_14 = arith.constant 0 : index
    %7 = vector.load %arg1[%c0_13, %c0_14] : memref<8x128xf32, #tpu.memory_space<vmem>>, vector<8x128xf32>
    %cst = arith.constant dense<0.000000e+00> : vector<8x128xf32>
    %8 = tpu.matmul %6, %7, %cst {dimension_numbers = #tpu.dot_dimension_numbers<[1], [0], [0], [1], [0, 0, 1, 1], [], []>} : vector<8x8xf32>, vector<8x128xf32>, vector<8x128xf32> -> vector<8x128xf32>
    %c0_15 = arith.constant 0 : index
    %c0_16 = arith.constant 0 : index
    %9 = vector.load %arg3[%c0_15, %c0_16] : memref<1x128xf32, #tpu.memory_space<vmem>>, vector<1x128xf32>
    %10 = vector.broadcast %9 : vector<1x128xf32> to vector<8x128xf32>
    %11 = arith.addf %8, %10 : vector<8x128xf32>
    %cst_17 = arith.constant 0.000000e+00 : f32
    %12 = vector.broadcast %cst_17 : f32 to vector<1x32xf32>
    %cst_18 = arith.constant 0.000000e+00 : f32
    %13 = vector.broadcast %cst_18 : f32 to vector<1x32xf32>
    %14 = vector.extract_strided_slice %11 {offsets = [0, 0], sizes = [1, 128], strides = [1, 1]} : vector<8x128xf32> to vector<1x128xf32>
    %cst_19 = arith.constant dense<0.000000e+00> : vector<1x128xf32>
    %15 = tpu.matmul %12, %0, %cst_19 {dimension_numbers = #tpu.dot_dimension_numbers<[1], [0], [0], [1], [0, 0, 1, 1], [], []>} : vector<1x32xf32>, vector<32x128xf32>, vector<1x128xf32> -> vector<1x128xf32>
    %16 = arith.addf %14, %15 : vector<1x128xf32>
    %17 = arith.negf %16 : vector<1x128xf32>
    %18 = math.exp %17 : vector<1x128xf32>
    %cst_20 = arith.constant 1.000000e+00 : f32
    %19 = vector.broadcast %cst_20 : f32 to vector<1x128xf32>
    %20 = arith.addf %19, %18 : vector<1x128xf32>
    %21 = arith.divf %19, %20 : vector<1x128xf32>
    %22 = math.tanh %16 : vector<1x128xf32>
    %23 = vector.extract_strided_slice %21 {offsets = [0, 0], sizes = [1, 32], strides = [1, 1]} : vector<1x128xf32> to vector<1x32xf32>
    %24 = vector.extract_strided_slice %21 {offsets = [0, 32], sizes = [1, 32], strides = [1, 1]} : vector<1x128xf32> to vector<1x32xf32>
    %25 = vector.extract_strided_slice %21 {offsets = [0, 96], sizes = [1, 32], strides = [1, 1]} : vector<1x128xf32> to vector<1x32xf32>
    %26 = vector.extract_strided_slice %22 {offsets = [0, 64], sizes = [1, 32], strides = [1, 1]} : vector<1x128xf32> to vector<1x32xf32>
    %27 = arith.mulf %24, %13 : vector<1x32xf32>
    %28 = arith.mulf %23, %26 : vector<1x32xf32>
    %29 = arith.addf %27, %28 : vector<1x32xf32>
    %30 = math.tanh %29 : vector<1x32xf32>
    %31 = arith.mulf %25, %30 : vector<1x32xf32>
    %32 = vector.extract_strided_slice %11 {offsets = [1, 0], sizes = [1, 128], strides = [1, 1]} : vector<8x128xf32> to vector<1x128xf32>
    %cst_21 = arith.constant dense<0.000000e+00> : vector<1x128xf32>
    %33 = tpu.matmul %31, %0, %cst_21 {dimension_numbers = #tpu.dot_dimension_numbers<[1], [0], [0], [1], [0, 0, 1, 1], [], []>} : vector<1x32xf32>, vector<32x128xf32>, vector<1x128xf32> -> vector<1x128xf32>
    %34 = arith.addf %32, %33 : vector<1x128xf32>
    %35 = arith.negf %34 : vector<1x128xf32>
    %36 = math.exp %35 : vector<1x128xf32>
    %cst_22 = arith.constant 1.000000e+00 : f32
    %37 = vector.broadcast %cst_22 : f32 to vector<1x128xf32>
    %38 = arith.addf %37, %36 : vector<1x128xf32>
    %39 = arith.divf %37, %38 : vector<1x128xf32>
    %40 = math.tanh %34 : vector<1x128xf32>
    %41 = vector.extract_strided_slice %39 {offsets = [0, 0], sizes = [1, 32], strides = [1, 1]} : vector<1x128xf32> to vector<1x32xf32>
    %42 = vector.extract_strided_slice %39 {offsets = [0, 32], sizes = [1, 32], strides = [1, 1]} : vector<1x128xf32> to vector<1x32xf32>
    %43 = vector.extract_strided_slice %39 {offsets = [0, 96], sizes = [1, 32], strides = [1, 1]} : vector<1x128xf32> to vector<1x32xf32>
    %44 = vector.extract_strided_slice %40 {offsets = [0, 64], sizes = [1, 32], strides = [1, 1]} : vector<1x128xf32> to vector<1x32xf32>
    %45 = arith.mulf %42, %29 : vector<1x32xf32>
    %46 = arith.mulf %41, %44 : vector<1x32xf32>
    %47 = arith.addf %45, %46 : vector<1x32xf32>
    %48 = math.tanh %47 : vector<1x32xf32>
    %49 = arith.mulf %43, %48 : vector<1x32xf32>
    %50 = vector.extract_strided_slice %11 {offsets = [2, 0], sizes = [1, 128], strides = [1, 1]} : vector<8x128xf32> to vector<1x128xf32>
    %cst_23 = arith.constant dense<0.000000e+00> : vector<1x128xf32>
    %51 = tpu.matmul %49, %0, %cst_23 {dimension_numbers = #tpu.dot_dimension_numbers<[1], [0], [0], [1], [0, 0, 1, 1], [], []>} : vector<1x32xf32>, vector<32x128xf32>, vector<1x128xf32> -> vector<1x128xf32>
    %52 = arith.addf %50, %51 : vector<1x128xf32>
    %53 = arith.negf %52 : vector<1x128xf32>
    %54 = math.exp %53 : vector<1x128xf32>
    %cst_24 = arith.constant 1.000000e+00 : f32
    %55 = vector.broadcast %cst_24 : f32 to vector<1x128xf32>
    %56 = arith.addf %55, %54 : vector<1x128xf32>
    %57 = arith.divf %55, %56 : vector<1x128xf32>
    %58 = math.tanh %52 : vector<1x128xf32>
    %59 = vector.extract_strided_slice %57 {offsets = [0, 0], sizes = [1, 32], strides = [1, 1]} : vector<1x128xf32> to vector<1x32xf32>
    %60 = vector.extract_strided_slice %57 {offsets = [0, 32], sizes = [1, 32], strides = [1, 1]} : vector<1x128xf32> to vector<1x32xf32>
    %61 = vector.extract_strided_slice %57 {offsets = [0, 96], sizes = [1, 32], strides = [1, 1]} : vector<1x128xf32> to vector<1x32xf32>
    %62 = vector.extract_strided_slice %58 {offsets = [0, 64], sizes = [1, 32], strides = [1, 1]} : vector<1x128xf32> to vector<1x32xf32>
    %63 = arith.mulf %60, %47 : vector<1x32xf32>
    %64 = arith.mulf %59, %62 : vector<1x32xf32>
    %65 = arith.addf %63, %64 : vector<1x32xf32>
    %66 = math.tanh %65 : vector<1x32xf32>
    %67 = arith.mulf %61, %66 : vector<1x32xf32>
    %68 = vector.extract_strided_slice %11 {offsets = [3, 0], sizes = [1, 128], strides = [1, 1]} : vector<8x128xf32> to vector<1x128xf32>
    %cst_25 = arith.constant dense<0.000000e+00> : vector<1x128xf32>
    %69 = tpu.matmul %67, %0, %cst_25 {dimension_numbers = #tpu.dot_dimension_numbers<[1], [0], [0], [1], [0, 0, 1, 1], [], []>} : vector<1x32xf32>, vector<32x128xf32>, vector<1x128xf32> -> vector<1x128xf32>
    %70 = arith.addf %68, %69 : vector<1x128xf32>
    %71 = arith.negf %70 : vector<1x128xf32>
    %72 = math.exp %71 : vector<1x128xf32>
    %cst_26 = arith.constant 1.000000e+00 : f32
    %73 = vector.broadcast %cst_26 : f32 to vector<1x128xf32>
    %74 = arith.addf %73, %72 : vector<1x128xf32>
    %75 = arith.divf %73, %74 : vector<1x128xf32>
    %76 = math.tanh %70 : vector<1x128xf32>
    %77 = vector.extract_strided_slice %75 {offsets = [0, 0], sizes = [1, 32], strides = [1, 1]} : vector<1x128xf32> to vector<1x32xf32>
    %78 = vector.extract_strided_slice %75 {offsets = [0, 32], sizes = [1, 32], strides = [1, 1]} : vector<1x128xf32> to vector<1x32xf32>
    %79 = vector.extract_strided_slice %75 {offsets = [0, 96], sizes = [1, 32], strides = [1, 1]} : vector<1x128xf32> to vector<1x32xf32>
    %80 = vector.extract_strided_slice %76 {offsets = [0, 64], sizes = [1, 32], strides = [1, 1]} : vector<1x128xf32> to vector<1x32xf32>
    %81 = arith.mulf %78, %65 : vector<1x32xf32>
    %82 = arith.mulf %77, %80 : vector<1x32xf32>
    %83 = arith.addf %81, %82 : vector<1x32xf32>
    %84 = math.tanh %83 : vector<1x32xf32>
    %85 = arith.mulf %79, %84 : vector<1x32xf32>
    %86 = vector.extract_strided_slice %11 {offsets = [4, 0], sizes = [1, 128], strides = [1, 1]} : vector<8x128xf32> to vector<1x128xf32>
    %cst_27 = arith.constant dense<0.000000e+00> : vector<1x128xf32>
    %87 = tpu.matmul %85, %0, %cst_27 {dimension_numbers = #tpu.dot_dimension_numbers<[1], [0], [0], [1], [0, 0, 1, 1], [], []>} : vector<1x32xf32>, vector<32x128xf32>, vector<1x128xf32> -> vector<1x128xf32>
    %88 = arith.addf %86, %87 : vector<1x128xf32>
    %89 = arith.negf %88 : vector<1x128xf32>
    %90 = math.exp %89 : vector<1x128xf32>
    %cst_28 = arith.constant 1.000000e+00 : f32
    %91 = vector.broadcast %cst_28 : f32 to vector<1x128xf32>
    %92 = arith.addf %91, %90 : vector<1x128xf32>
    %93 = arith.divf %91, %92 : vector<1x128xf32>
    %94 = math.tanh %88 : vector<1x128xf32>
    %95 = vector.extract_strided_slice %93 {offsets = [0, 0], sizes = [1, 32], strides = [1, 1]} : vector<1x128xf32> to vector<1x32xf32>
    %96 = vector.extract_strided_slice %93 {offsets = [0, 32], sizes = [1, 32], strides = [1, 1]} : vector<1x128xf32> to vector<1x32xf32>
    %97 = vector.extract_strided_slice %93 {offsets = [0, 96], sizes = [1, 32], strides = [1, 1]} : vector<1x128xf32> to vector<1x32xf32>
    %98 = vector.extract_strided_slice %94 {offsets = [0, 64], sizes = [1, 32], strides = [1, 1]} : vector<1x128xf32> to vector<1x32xf32>
    %99 = arith.mulf %96, %83 : vector<1x32xf32>
    %100 = arith.mulf %95, %98 : vector<1x32xf32>
    %101 = arith.addf %99, %100 : vector<1x32xf32>
    %102 = math.tanh %101 : vector<1x32xf32>
    %103 = arith.mulf %97, %102 : vector<1x32xf32>
    %104 = vector.extract_strided_slice %11 {offsets = [5, 0], sizes = [1, 128], strides = [1, 1]} : vector<8x128xf32> to vector<1x128xf32>
    %cst_29 = arith.constant dense<0.000000e+00> : vector<1x128xf32>
    %105 = tpu.matmul %103, %0, %cst_29 {dimension_numbers = #tpu.dot_dimension_numbers<[1], [0], [0], [1], [0, 0, 1, 1], [], []>} : vector<1x32xf32>, vector<32x128xf32>, vector<1x128xf32> -> vector<1x128xf32>
    %106 = arith.addf %104, %105 : vector<1x128xf32>
    %107 = arith.negf %106 : vector<1x128xf32>
    %108 = math.exp %107 : vector<1x128xf32>
    %cst_30 = arith.constant 1.000000e+00 : f32
    %109 = vector.broadcast %cst_30 : f32 to vector<1x128xf32>
    %110 = arith.addf %109, %108 : vector<1x128xf32>
    %111 = arith.divf %109, %110 : vector<1x128xf32>
    %112 = math.tanh %106 : vector<1x128xf32>
    %113 = vector.extract_strided_slice %111 {offsets = [0, 0], sizes = [1, 32], strides = [1, 1]} : vector<1x128xf32> to vector<1x32xf32>
    %114 = vector.extract_strided_slice %111 {offsets = [0, 32], sizes = [1, 32], strides = [1, 1]} : vector<1x128xf32> to vector<1x32xf32>
    %115 = vector.extract_strided_slice %111 {offsets = [0, 96], sizes = [1, 32], strides = [1, 1]} : vector<1x128xf32> to vector<1x32xf32>
    %116 = vector.extract_strided_slice %112 {offsets = [0, 64], sizes = [1, 32], strides = [1, 1]} : vector<1x128xf32> to vector<1x32xf32>
    %117 = arith.mulf %114, %101 : vector<1x32xf32>
    %118 = arith.mulf %113, %116 : vector<1x32xf32>
    %119 = arith.addf %117, %118 : vector<1x32xf32>
    %120 = math.tanh %119 : vector<1x32xf32>
    %121 = arith.mulf %115, %120 : vector<1x32xf32>
    %122 = vector.extract_strided_slice %11 {offsets = [6, 0], sizes = [1, 128], strides = [1, 1]} : vector<8x128xf32> to vector<1x128xf32>
    %cst_31 = arith.constant dense<0.000000e+00> : vector<1x128xf32>
    %123 = tpu.matmul %121, %0, %cst_31 {dimension_numbers = #tpu.dot_dimension_numbers<[1], [0], [0], [1], [0, 0, 1, 1], [], []>} : vector<1x32xf32>, vector<32x128xf32>, vector<1x128xf32> -> vector<1x128xf32>
    %124 = arith.addf %122, %123 : vector<1x128xf32>
    %125 = arith.negf %124 : vector<1x128xf32>
    %126 = math.exp %125 : vector<1x128xf32>
    %cst_32 = arith.constant 1.000000e+00 : f32
    %127 = vector.broadcast %cst_32 : f32 to vector<1x128xf32>
    %128 = arith.addf %127, %126 : vector<1x128xf32>
    %129 = arith.divf %127, %128 : vector<1x128xf32>
    %130 = math.tanh %124 : vector<1x128xf32>
    %131 = vector.extract_strided_slice %129 {offsets = [0, 0], sizes = [1, 32], strides = [1, 1]} : vector<1x128xf32> to vector<1x32xf32>
    %132 = vector.extract_strided_slice %129 {offsets = [0, 32], sizes = [1, 32], strides = [1, 1]} : vector<1x128xf32> to vector<1x32xf32>
    %133 = vector.extract_strided_slice %129 {offsets = [0, 96], sizes = [1, 32], strides = [1, 1]} : vector<1x128xf32> to vector<1x32xf32>
    %134 = vector.extract_strided_slice %130 {offsets = [0, 64], sizes = [1, 32], strides = [1, 1]} : vector<1x128xf32> to vector<1x32xf32>
    %135 = arith.mulf %132, %119 : vector<1x32xf32>
    %136 = arith.mulf %131, %134 : vector<1x32xf32>
    %137 = arith.addf %135, %136 : vector<1x32xf32>
    %138 = math.tanh %137 : vector<1x32xf32>
    %139 = arith.mulf %133, %138 : vector<1x32xf32>
    %140 = vector.extract_strided_slice %11 {offsets = [7, 0], sizes = [1, 128], strides = [1, 1]} : vector<8x128xf32> to vector<1x128xf32>
    %cst_33 = arith.constant dense<0.000000e+00> : vector<1x128xf32>
    %141 = tpu.matmul %139, %0, %cst_33 {dimension_numbers = #tpu.dot_dimension_numbers<[1], [0], [0], [1], [0, 0, 1, 1], [], []>} : vector<1x32xf32>, vector<32x128xf32>, vector<1x128xf32> -> vector<1x128xf32>
    %142 = arith.addf %140, %141 : vector<1x128xf32>
    %143 = arith.negf %142 : vector<1x128xf32>
    %144 = math.exp %143 : vector<1x128xf32>
    %cst_34 = arith.constant 1.000000e+00 : f32
    %145 = vector.broadcast %cst_34 : f32 to vector<1x128xf32>
    %146 = arith.addf %145, %144 : vector<1x128xf32>
    %147 = arith.divf %145, %146 : vector<1x128xf32>
    %148 = math.tanh %142 : vector<1x128xf32>
    %149 = vector.extract_strided_slice %147 {offsets = [0, 0], sizes = [1, 32], strides = [1, 1]} : vector<1x128xf32> to vector<1x32xf32>
    %150 = vector.extract_strided_slice %147 {offsets = [0, 32], sizes = [1, 32], strides = [1, 1]} : vector<1x128xf32> to vector<1x32xf32>
    %151 = vector.extract_strided_slice %147 {offsets = [0, 96], sizes = [1, 32], strides = [1, 1]} : vector<1x128xf32> to vector<1x32xf32>
    %152 = vector.extract_strided_slice %148 {offsets = [0, 64], sizes = [1, 32], strides = [1, 1]} : vector<1x128xf32> to vector<1x32xf32>
    %153 = arith.mulf %150, %137 : vector<1x32xf32>
    %154 = arith.mulf %149, %152 : vector<1x32xf32>
    %155 = arith.addf %153, %154 : vector<1x32xf32>
    %156 = math.tanh %155 : vector<1x32xf32>
    %157 = arith.mulf %151, %156 : vector<1x32xf32>
    %cst_35 = arith.constant 0.000000e+00 : f32
    %158 = vector.broadcast %cst_35 : f32 to vector<1x32xf32>
    %cst_36 = arith.constant dense<0.000000e+00> : vector<32x128xf32>
    %159 = tpu.matmul %4, %1, %cst_36 {dimension_numbers = #tpu.dot_dimension_numbers<[1], [0], [0], [1], [0, 0, 1, 1], [], []>} : vector<32x4xf32>, vector<4x128xf32>, vector<32x128xf32> -> vector<32x128xf32>
    %160 = arith.addf %2, %159 : vector<32x128xf32>
    %cst_37 = arith.constant dense<0.000000e+00> : vector<1x128xf32>
    %161 = tpu.matmul %5, %1, %cst_37 {dimension_numbers = #tpu.dot_dimension_numbers<[1], [0], [0], [1], [0, 0, 1, 1], [], []>} : vector<1x4xf32>, vector<4x128xf32>, vector<1x128xf32> -> vector<1x128xf32>
    %162 = arith.addf %3, %161 : vector<1x128xf32>
    %cst_38 = arith.constant dense<0.000000e+00> : vector<1x128xf32>
    %163 = tpu.matmul %157, %2, %cst_38 {dimension_numbers = #tpu.dot_dimension_numbers<[1], [0], [0], [1], [0, 0, 1, 1], [], []>} : vector<1x32xf32>, vector<32x128xf32>, vector<1x128xf32> -> vector<1x128xf32>
    %164 = arith.addf %163, %3 : vector<1x128xf32>
    %165 = arith.negf %164 : vector<1x128xf32>
    %166 = math.exp %165 : vector<1x128xf32>
    %cst_39 = arith.constant 1.000000e+00 : f32
    %167 = vector.broadcast %cst_39 : f32 to vector<1x128xf32>
    %168 = arith.addf %167, %166 : vector<1x128xf32>
    %169 = arith.divf %167, %168 : vector<1x128xf32>
    %170 = math.tanh %164 : vector<1x128xf32>
    %171 = vector.extract_strided_slice %169 {offsets = [0, 0], sizes = [1, 32], strides = [1, 1]} : vector<1x128xf32> to vector<1x32xf32>
    %172 = vector.extract_strided_slice %169 {offsets = [0, 32], sizes = [1, 32], strides = [1, 1]} : vector<1x128xf32> to vector<1x32xf32>
    %173 = vector.extract_strided_slice %169 {offsets = [0, 96], sizes = [1, 32], strides = [1, 1]} : vector<1x128xf32> to vector<1x32xf32>
    %174 = vector.extract_strided_slice %170 {offsets = [0, 64], sizes = [1, 32], strides = [1, 1]} : vector<1x128xf32> to vector<1x32xf32>
    %175 = arith.mulf %172, %158 : vector<1x32xf32>
    %176 = arith.mulf %171, %174 : vector<1x32xf32>
    %177 = arith.addf %175, %176 : vector<1x32xf32>
    %178 = math.tanh %177 : vector<1x32xf32>
    %179 = arith.mulf %173, %178 : vector<1x32xf32>
    %c0_40 = arith.constant 0 : index
    %c0_41 = arith.constant 0 : index
    %180 = vector.load %arg10[%c0_40, %c0_41] : memref<30x32xf32, #tpu.memory_space<vmem>>, vector<1x32xf32>
    tpu.vector_store %arg10[%c0_40, %c0_41], %179 {strides = array<i32>} : memref<30x32xf32, #tpu.memory_space<vmem>>, vector<1x32xf32>,
    %cst_42 = arith.constant dense<0.000000e+00> : vector<1x128xf32>
    %181 = tpu.matmul %179, %160, %cst_42 {dimension_numbers = #tpu.dot_dimension_numbers<[1], [0], [0], [1], [0, 0, 1, 1], [], []>} : vector<1x32xf32>, vector<32x128xf32>, vector<1x128xf32> -> vector<1x128xf32>
    %182 = arith.addf %181, %162 : vector<1x128xf32>
    %183 = arith.negf %182 : vector<1x128xf32>
    %184 = math.exp %183 : vector<1x128xf32>
    %cst_43 = arith.constant 1.000000e+00 : f32
    %185 = vector.broadcast %cst_43 : f32 to vector<1x128xf32>
    %186 = arith.addf %185, %184 : vector<1x128xf32>
    %187 = arith.divf %185, %186 : vector<1x128xf32>
    %188 = math.tanh %182 : vector<1x128xf32>
    %189 = vector.extract_strided_slice %187 {offsets = [0, 0], sizes = [1, 32], strides = [1, 1]} : vector<1x128xf32> to vector<1x32xf32>
    %190 = vector.extract_strided_slice %187 {offsets = [0, 32], sizes = [1, 32], strides = [1, 1]} : vector<1x128xf32> to vector<1x32xf32>
    %191 = vector.extract_strided_slice %187 {offsets = [0, 96], sizes = [1, 32], strides = [1, 1]} : vector<1x128xf32> to vector<1x32xf32>
    %192 = vector.extract_strided_slice %188 {offsets = [0, 64], sizes = [1, 32], strides = [1, 1]} : vector<1x128xf32> to vector<1x32xf32>
    %193 = arith.mulf %190, %177 : vector<1x32xf32>
    %194 = arith.mulf %189, %192 : vector<1x32xf32>
    %195 = arith.addf %193, %194 : vector<1x32xf32>
    %196 = math.tanh %195 : vector<1x32xf32>
    %197 = arith.mulf %191, %196 : vector<1x32xf32>
    %c1 = arith.constant 1 : index
    %c0_44 = arith.constant 0 : index
    %198 = vector.load %arg10[%c1, %c0_44] : memref<30x32xf32, #tpu.memory_space<vmem>>, vector<1x32xf32>
    tpu.vector_store %arg10[%c1, %c0_44], %197 {strides = array<i32>} : memref<30x32xf32, #tpu.memory_space<vmem>>, vector<1x32xf32>,
    %cst_45 = arith.constant dense<0.000000e+00> : vector<1x128xf32>
    %199 = tpu.matmul %197, %160, %cst_45 {dimension_numbers = #tpu.dot_dimension_numbers<[1], [0], [0], [1], [0, 0, 1, 1], [], []>} : vector<1x32xf32>, vector<32x128xf32>, vector<1x128xf32> -> vector<1x128xf32>
    %200 = arith.addf %199, %162 : vector<1x128xf32>
    %201 = arith.negf %200 : vector<1x128xf32>
    %202 = math.exp %201 : vector<1x128xf32>
    %cst_46 = arith.constant 1.000000e+00 : f32
    %203 = vector.broadcast %cst_46 : f32 to vector<1x128xf32>
    %204 = arith.addf %203, %202 : vector<1x128xf32>
    %205 = arith.divf %203, %204 : vector<1x128xf32>
    %206 = math.tanh %200 : vector<1x128xf32>
    %207 = vector.extract_strided_slice %205 {offsets = [0, 0], sizes = [1, 32], strides = [1, 1]} : vector<1x128xf32> to vector<1x32xf32>
    %208 = vector.extract_strided_slice %205 {offsets = [0, 32], sizes = [1, 32], strides = [1, 1]} : vector<1x128xf32> to vector<1x32xf32>
    %209 = vector.extract_strided_slice %205 {offsets = [0, 96], sizes = [1, 32], strides = [1, 1]} : vector<1x128xf32> to vector<1x32xf32>
    %210 = vector.extract_strided_slice %206 {offsets = [0, 64], sizes = [1, 32], strides = [1, 1]} : vector<1x128xf32> to vector<1x32xf32>
    %211 = arith.mulf %208, %195 : vector<1x32xf32>
    %212 = arith.mulf %207, %210 : vector<1x32xf32>
    %213 = arith.addf %211, %212 : vector<1x32xf32>
    %214 = math.tanh %213 : vector<1x32xf32>
    %215 = arith.mulf %209, %214 : vector<1x32xf32>
    %c2 = arith.constant 2 : index
    %c0_47 = arith.constant 0 : index
    %216 = vector.load %arg10[%c2, %c0_47] : memref<30x32xf32, #tpu.memory_space<vmem>>, vector<1x32xf32>
    tpu.vector_store %arg10[%c2, %c0_47], %215 {strides = array<i32>} : memref<30x32xf32, #tpu.memory_space<vmem>>, vector<1x32xf32>,
    %cst_48 = arith.constant dense<0.000000e+00> : vector<1x128xf32>
    %217 = tpu.matmul %215, %160, %cst_48 {dimension_numbers = #tpu.dot_dimension_numbers<[1], [0], [0], [1], [0, 0, 1, 1], [], []>} : vector<1x32xf32>, vector<32x128xf32>, vector<1x128xf32> -> vector<1x128xf32>
    %218 = arith.addf %217, %162 : vector<1x128xf32>
    %219 = arith.negf %218 : vector<1x128xf32>
    %220 = math.exp %219 : vector<1x128xf32>
    %cst_49 = arith.constant 1.000000e+00 : f32
    %221 = vector.broadcast %cst_49 : f32 to vector<1x128xf32>
    %222 = arith.addf %221, %220 : vector<1x128xf32>
    %223 = arith.divf %221, %222 : vector<1x128xf32>
    %224 = math.tanh %218 : vector<1x128xf32>
    %225 = vector.extract_strided_slice %223 {offsets = [0, 0], sizes = [1, 32], strides = [1, 1]} : vector<1x128xf32> to vector<1x32xf32>
    %226 = vector.extract_strided_slice %223 {offsets = [0, 32], sizes = [1, 32], strides = [1, 1]} : vector<1x128xf32> to vector<1x32xf32>
    %227 = vector.extract_strided_slice %223 {offsets = [0, 96], sizes = [1, 32], strides = [1, 1]} : vector<1x128xf32> to vector<1x32xf32>
    %228 = vector.extract_strided_slice %224 {offsets = [0, 64], sizes = [1, 32], strides = [1, 1]} : vector<1x128xf32> to vector<1x32xf32>
    %229 = arith.mulf %226, %213 : vector<1x32xf32>
    %230 = arith.mulf %225, %228 : vector<1x32xf32>
    %231 = arith.addf %229, %230 : vector<1x32xf32>
    %232 = math.tanh %231 : vector<1x32xf32>
    %233 = arith.mulf %227, %232 : vector<1x32xf32>
    %c3 = arith.constant 3 : index
    %c0_50 = arith.constant 0 : index
    %234 = vector.load %arg10[%c3, %c0_50] : memref<30x32xf32, #tpu.memory_space<vmem>>, vector<1x32xf32>
    tpu.vector_store %arg10[%c3, %c0_50], %233 {strides = array<i32>} : memref<30x32xf32, #tpu.memory_space<vmem>>, vector<1x32xf32>,
    %cst_51 = arith.constant dense<0.000000e+00> : vector<1x128xf32>
    %235 = tpu.matmul %233, %160, %cst_51 {dimension_numbers = #tpu.dot_dimension_numbers<[1], [0], [0], [1], [0, 0, 1, 1], [], []>} : vector<1x32xf32>, vector<32x128xf32>, vector<1x128xf32> -> vector<1x128xf32>
    %236 = arith.addf %235, %162 : vector<1x128xf32>
    %237 = arith.negf %236 : vector<1x128xf32>
    %238 = math.exp %237 : vector<1x128xf32>
    %cst_52 = arith.constant 1.000000e+00 : f32
    %239 = vector.broadcast %cst_52 : f32 to vector<1x128xf32>
    %240 = arith.addf %239, %238 : vector<1x128xf32>
    %241 = arith.divf %239, %240 : vector<1x128xf32>
    %242 = math.tanh %236 : vector<1x128xf32>
    %243 = vector.extract_strided_slice %241 {offsets = [0, 0], sizes = [1, 32], strides = [1, 1]} : vector<1x128xf32> to vector<1x32xf32>
    %244 = vector.extract_strided_slice %241 {offsets = [0, 32], sizes = [1, 32], strides = [1, 1]} : vector<1x128xf32> to vector<1x32xf32>
    %245 = vector.extract_strided_slice %241 {offsets = [0, 96], sizes = [1, 32], strides = [1, 1]} : vector<1x128xf32> to vector<1x32xf32>
    %246 = vector.extract_strided_slice %242 {offsets = [0, 64], sizes = [1, 32], strides = [1, 1]} : vector<1x128xf32> to vector<1x32xf32>
    %247 = arith.mulf %244, %231 : vector<1x32xf32>
    %248 = arith.mulf %243, %246 : vector<1x32xf32>
    %249 = arith.addf %247, %248 : vector<1x32xf32>
    %250 = math.tanh %249 : vector<1x32xf32>
    %251 = arith.mulf %245, %250 : vector<1x32xf32>
    %c4 = arith.constant 4 : index
    %c0_53 = arith.constant 0 : index
    %252 = vector.load %arg10[%c4, %c0_53] : memref<30x32xf32, #tpu.memory_space<vmem>>, vector<1x32xf32>
    tpu.vector_store %arg10[%c4, %c0_53], %251 {strides = array<i32>} : memref<30x32xf32, #tpu.memory_space<vmem>>, vector<1x32xf32>,
    %cst_54 = arith.constant dense<0.000000e+00> : vector<1x128xf32>
    %253 = tpu.matmul %251, %160, %cst_54 {dimension_numbers = #tpu.dot_dimension_numbers<[1], [0], [0], [1], [0, 0, 1, 1], [], []>} : vector<1x32xf32>, vector<32x128xf32>, vector<1x128xf32> -> vector<1x128xf32>
    %254 = arith.addf %253, %162 : vector<1x128xf32>
    %255 = arith.negf %254 : vector<1x128xf32>
    %256 = math.exp %255 : vector<1x128xf32>
    %cst_55 = arith.constant 1.000000e+00 : f32
    %257 = vector.broadcast %cst_55 : f32 to vector<1x128xf32>
    %258 = arith.addf %257, %256 : vector<1x128xf32>
    %259 = arith.divf %257, %258 : vector<1x128xf32>
    %260 = math.tanh %254 : vector<1x128xf32>
    %261 = vector.extract_strided_slice %259 {offsets = [0, 0], sizes = [1, 32], strides = [1, 1]} : vector<1x128xf32> to vector<1x32xf32>
    %262 = vector.extract_strided_slice %259 {offsets = [0, 32], sizes = [1, 32], strides = [1, 1]} : vector<1x128xf32> to vector<1x32xf32>
    %263 = vector.extract_strided_slice %259 {offsets = [0, 96], sizes = [1, 32], strides = [1, 1]} : vector<1x128xf32> to vector<1x32xf32>
    %264 = vector.extract_strided_slice %260 {offsets = [0, 64], sizes = [1, 32], strides = [1, 1]} : vector<1x128xf32> to vector<1x32xf32>
    %265 = arith.mulf %262, %249 : vector<1x32xf32>
    %266 = arith.mulf %261, %264 : vector<1x32xf32>
    %267 = arith.addf %265, %266 : vector<1x32xf32>
    %268 = math.tanh %267 : vector<1x32xf32>
    %269 = arith.mulf %263, %268 : vector<1x32xf32>
    %c5 = arith.constant 5 : index
    %c0_56 = arith.constant 0 : index
    %270 = vector.load %arg10[%c5, %c0_56] : memref<30x32xf32, #tpu.memory_space<vmem>>, vector<1x32xf32>
    tpu.vector_store %arg10[%c5, %c0_56], %269 {strides = array<i32>} : memref<30x32xf32, #tpu.memory_space<vmem>>, vector<1x32xf32>,
    %cst_57 = arith.constant dense<0.000000e+00> : vector<1x128xf32>
    %271 = tpu.matmul %269, %160, %cst_57 {dimension_numbers = #tpu.dot_dimension_numbers<[1], [0], [0], [1], [0, 0, 1, 1], [], []>} : vector<1x32xf32>, vector<32x128xf32>, vector<1x128xf32> -> vector<1x128xf32>
    %272 = arith.addf %271, %162 : vector<1x128xf32>
    %273 = arith.negf %272 : vector<1x128xf32>
    %274 = math.exp %273 : vector<1x128xf32>
    %cst_58 = arith.constant 1.000000e+00 : f32
    %275 = vector.broadcast %cst_58 : f32 to vector<1x128xf32>
    %276 = arith.addf %275, %274 : vector<1x128xf32>
    %277 = arith.divf %275, %276 : vector<1x128xf32>
    %278 = math.tanh %272 : vector<1x128xf32>
    %279 = vector.extract_strided_slice %277 {offsets = [0, 0], sizes = [1, 32], strides = [1, 1]} : vector<1x128xf32> to vector<1x32xf32>
    %280 = vector.extract_strided_slice %277 {offsets = [0, 32], sizes = [1, 32], strides = [1, 1]} : vector<1x128xf32> to vector<1x32xf32>
    %281 = vector.extract_strided_slice %277 {offsets = [0, 96], sizes = [1, 32], strides = [1, 1]} : vector<1x128xf32> to vector<1x32xf32>
    %282 = vector.extract_strided_slice %278 {offsets = [0, 64], sizes = [1, 32], strides = [1, 1]} : vector<1x128xf32> to vector<1x32xf32>
    %283 = arith.mulf %280, %267 : vector<1x32xf32>
    %284 = arith.mulf %279, %282 : vector<1x32xf32>
    %285 = arith.addf %283, %284 : vector<1x32xf32>
    %286 = math.tanh %285 : vector<1x32xf32>
    %287 = arith.mulf %281, %286 : vector<1x32xf32>
    %c6 = arith.constant 6 : index
    %c0_59 = arith.constant 0 : index
    %288 = vector.load %arg10[%c6, %c0_59] : memref<30x32xf32, #tpu.memory_space<vmem>>, vector<1x32xf32>
    tpu.vector_store %arg10[%c6, %c0_59], %287 {strides = array<i32>} : memref<30x32xf32, #tpu.memory_space<vmem>>, vector<1x32xf32>,
    %cst_60 = arith.constant dense<0.000000e+00> : vector<1x128xf32>
    %289 = tpu.matmul %287, %160, %cst_60 {dimension_numbers = #tpu.dot_dimension_numbers<[1], [0], [0], [1], [0, 0, 1, 1], [], []>} : vector<1x32xf32>, vector<32x128xf32>, vector<1x128xf32> -> vector<1x128xf32>
    %290 = arith.addf %289, %162 : vector<1x128xf32>
    %291 = arith.negf %290 : vector<1x128xf32>
    %292 = math.exp %291 : vector<1x128xf32>
    %cst_61 = arith.constant 1.000000e+00 : f32
    %293 = vector.broadcast %cst_61 : f32 to vector<1x128xf32>
    %294 = arith.addf %293, %292 : vector<1x128xf32>
    %295 = arith.divf %293, %294 : vector<1x128xf32>
    %296 = math.tanh %290 : vector<1x128xf32>
    %297 = vector.extract_strided_slice %295 {offsets = [0, 0], sizes = [1, 32], strides = [1, 1]} : vector<1x128xf32> to vector<1x32xf32>
    %298 = vector.extract_strided_slice %295 {offsets = [0, 32], sizes = [1, 32], strides = [1, 1]} : vector<1x128xf32> to vector<1x32xf32>
    %299 = vector.extract_strided_slice %295 {offsets = [0, 96], sizes = [1, 32], strides = [1, 1]} : vector<1x128xf32> to vector<1x32xf32>
    %300 = vector.extract_strided_slice %296 {offsets = [0, 64], sizes = [1, 32], strides = [1, 1]} : vector<1x128xf32> to vector<1x32xf32>
    %301 = arith.mulf %298, %285 : vector<1x32xf32>
    %302 = arith.mulf %297, %300 : vector<1x32xf32>
    %303 = arith.addf %301, %302 : vector<1x32xf32>
    %304 = math.tanh %303 : vector<1x32xf32>
    %305 = arith.mulf %299, %304 : vector<1x32xf32>
    %c7 = arith.constant 7 : index
    %c0_62 = arith.constant 0 : index
    %306 = vector.load %arg10[%c7, %c0_62] : memref<30x32xf32, #tpu.memory_space<vmem>>, vector<1x32xf32>
    tpu.vector_store %arg10[%c7, %c0_62], %305 {strides = array<i32>} : memref<30x32xf32, #tpu.memory_space<vmem>>, vector<1x32xf32>,
    %cst_63 = arith.constant dense<0.000000e+00> : vector<1x128xf32>
    %307 = tpu.matmul %305, %160, %cst_63 {dimension_numbers = #tpu.dot_dimension_numbers<[1], [0], [0], [1], [0, 0, 1, 1], [], []>} : vector<1x32xf32>, vector<32x128xf32>, vector<1x128xf32> -> vector<1x128xf32>
    %308 = arith.addf %307, %162 : vector<1x128xf32>
    %309 = arith.negf %308 : vector<1x128xf32>
    %310 = math.exp %309 : vector<1x128xf32>
    %cst_64 = arith.constant 1.000000e+00 : f32
    %311 = vector.broadcast %cst_64 : f32 to vector<1x128xf32>
    %312 = arith.addf %311, %310 : vector<1x128xf32>
    %313 = arith.divf %311, %312 : vector<1x128xf32>
    %314 = math.tanh %308 : vector<1x128xf32>
    %315 = vector.extract_strided_slice %313 {offsets = [0, 0], sizes = [1, 32], strides = [1, 1]} : vector<1x128xf32> to vector<1x32xf32>
    %316 = vector.extract_strided_slice %313 {offsets = [0, 32], sizes = [1, 32], strides = [1, 1]} : vector<1x128xf32> to vector<1x32xf32>
    %317 = vector.extract_strided_slice %313 {offsets = [0, 96], sizes = [1, 32], strides = [1, 1]} : vector<1x128xf32> to vector<1x32xf32>
    %318 = vector.extract_strided_slice %314 {offsets = [0, 64], sizes = [1, 32], strides = [1, 1]} : vector<1x128xf32> to vector<1x32xf32>
    %319 = arith.mulf %316, %303 : vector<1x32xf32>
    %320 = arith.mulf %315, %318 : vector<1x32xf32>
    %321 = arith.addf %319, %320 : vector<1x32xf32>
    %322 = math.tanh %321 : vector<1x32xf32>
    %323 = arith.mulf %317, %322 : vector<1x32xf32>
    %c8 = arith.constant 8 : index
    %c0_65 = arith.constant 0 : index
    %324 = vector.load %arg10[%c8, %c0_65] : memref<30x32xf32, #tpu.memory_space<vmem>>, vector<1x32xf32>
    tpu.vector_store %arg10[%c8, %c0_65], %323 {strides = array<i32>} : memref<30x32xf32, #tpu.memory_space<vmem>>, vector<1x32xf32>,
    %cst_66 = arith.constant dense<0.000000e+00> : vector<1x128xf32>
    %325 = tpu.matmul %323, %160, %cst_66 {dimension_numbers = #tpu.dot_dimension_numbers<[1], [0], [0], [1], [0, 0, 1, 1], [], []>} : vector<1x32xf32>, vector<32x128xf32>, vector<1x128xf32> -> vector<1x128xf32>
    %326 = arith.addf %325, %162 : vector<1x128xf32>
    %327 = arith.negf %326 : vector<1x128xf32>
    %328 = math.exp %327 : vector<1x128xf32>
    %cst_67 = arith.constant 1.000000e+00 : f32
    %329 = vector.broadcast %cst_67 : f32 to vector<1x128xf32>
    %330 = arith.addf %329, %328 : vector<1x128xf32>
    %331 = arith.divf %329, %330 : vector<1x128xf32>
    %332 = math.tanh %326 : vector<1x128xf32>
    %333 = vector.extract_strided_slice %331 {offsets = [0, 0], sizes = [1, 32], strides = [1, 1]} : vector<1x128xf32> to vector<1x32xf32>
    %334 = vector.extract_strided_slice %331 {offsets = [0, 32], sizes = [1, 32], strides = [1, 1]} : vector<1x128xf32> to vector<1x32xf32>
    %335 = vector.extract_strided_slice %331 {offsets = [0, 96], sizes = [1, 32], strides = [1, 1]} : vector<1x128xf32> to vector<1x32xf32>
    %336 = vector.extract_strided_slice %332 {offsets = [0, 64], sizes = [1, 32], strides = [1, 1]} : vector<1x128xf32> to vector<1x32xf32>
    %337 = arith.mulf %334, %321 : vector<1x32xf32>
    %338 = arith.mulf %333, %336 : vector<1x32xf32>
    %339 = arith.addf %337, %338 : vector<1x32xf32>
    %340 = math.tanh %339 : vector<1x32xf32>
    %341 = arith.mulf %335, %340 : vector<1x32xf32>
    %c9 = arith.constant 9 : index
    %c0_68 = arith.constant 0 : index
    %342 = vector.load %arg10[%c9, %c0_68] : memref<30x32xf32, #tpu.memory_space<vmem>>, vector<1x32xf32>
    tpu.vector_store %arg10[%c9, %c0_68], %341 {strides = array<i32>} : memref<30x32xf32, #tpu.memory_space<vmem>>, vector<1x32xf32>,
    %cst_69 = arith.constant dense<0.000000e+00> : vector<1x128xf32>
    %343 = tpu.matmul %341, %160, %cst_69 {dimension_numbers = #tpu.dot_dimension_numbers<[1], [0], [0], [1], [0, 0, 1, 1], [], []>} : vector<1x32xf32>, vector<32x128xf32>, vector<1x128xf32> -> vector<1x128xf32>
    %344 = arith.addf %343, %162 : vector<1x128xf32>
    %345 = arith.negf %344 : vector<1x128xf32>
    %346 = math.exp %345 : vector<1x128xf32>
    %cst_70 = arith.constant 1.000000e+00 : f32
    %347 = vector.broadcast %cst_70 : f32 to vector<1x128xf32>
    %348 = arith.addf %347, %346 : vector<1x128xf32>
    %349 = arith.divf %347, %348 : vector<1x128xf32>
    %350 = math.tanh %344 : vector<1x128xf32>
    %351 = vector.extract_strided_slice %349 {offsets = [0, 0], sizes = [1, 32], strides = [1, 1]} : vector<1x128xf32> to vector<1x32xf32>
    %352 = vector.extract_strided_slice %349 {offsets = [0, 32], sizes = [1, 32], strides = [1, 1]} : vector<1x128xf32> to vector<1x32xf32>
    %353 = vector.extract_strided_slice %349 {offsets = [0, 96], sizes = [1, 32], strides = [1, 1]} : vector<1x128xf32> to vector<1x32xf32>
    %354 = vector.extract_strided_slice %350 {offsets = [0, 64], sizes = [1, 32], strides = [1, 1]} : vector<1x128xf32> to vector<1x32xf32>
    %355 = arith.mulf %352, %339 : vector<1x32xf32>
    %356 = arith.mulf %351, %354 : vector<1x32xf32>
    %357 = arith.addf %355, %356 : vector<1x32xf32>
    %358 = math.tanh %357 : vector<1x32xf32>
    %359 = arith.mulf %353, %358 : vector<1x32xf32>
    %c10 = arith.constant 10 : index
    %c0_71 = arith.constant 0 : index
    %360 = vector.load %arg10[%c10, %c0_71] : memref<30x32xf32, #tpu.memory_space<vmem>>, vector<1x32xf32>
    tpu.vector_store %arg10[%c10, %c0_71], %359 {strides = array<i32>} : memref<30x32xf32, #tpu.memory_space<vmem>>, vector<1x32xf32>,
    %cst_72 = arith.constant dense<0.000000e+00> : vector<1x128xf32>
    %361 = tpu.matmul %359, %160, %cst_72 {dimension_numbers = #tpu.dot_dimension_numbers<[1], [0], [0], [1], [0, 0, 1, 1], [], []>} : vector<1x32xf32>, vector<32x128xf32>, vector<1x128xf32> -> vector<1x128xf32>
    %362 = arith.addf %361, %162 : vector<1x128xf32>
    %363 = arith.negf %362 : vector<1x128xf32>
    %364 = math.exp %363 : vector<1x128xf32>
    %cst_73 = arith.constant 1.000000e+00 : f32
    %365 = vector.broadcast %cst_73 : f32 to vector<1x128xf32>
    %366 = arith.addf %365, %364 : vector<1x128xf32>
    %367 = arith.divf %365, %366 : vector<1x128xf32>
    %368 = math.tanh %362 : vector<1x128xf32>
    %369 = vector.extract_strided_slice %367 {offsets = [0, 0], sizes = [1, 32], strides = [1, 1]} : vector<1x128xf32> to vector<1x32xf32>
    %370 = vector.extract_strided_slice %367 {offsets = [0, 32], sizes = [1, 32], strides = [1, 1]} : vector<1x128xf32> to vector<1x32xf32>
    %371 = vector.extract_strided_slice %367 {offsets = [0, 96], sizes = [1, 32], strides = [1, 1]} : vector<1x128xf32> to vector<1x32xf32>
    %372 = vector.extract_strided_slice %368 {offsets = [0, 64], sizes = [1, 32], strides = [1, 1]} : vector<1x128xf32> to vector<1x32xf32>
    %373 = arith.mulf %370, %357 : vector<1x32xf32>
    %374 = arith.mulf %369, %372 : vector<1x32xf32>
    %375 = arith.addf %373, %374 : vector<1x32xf32>
    %376 = math.tanh %375 : vector<1x32xf32>
    %377 = arith.mulf %371, %376 : vector<1x32xf32>
    %c11 = arith.constant 11 : index
    %c0_74 = arith.constant 0 : index
    %378 = vector.load %arg10[%c11, %c0_74] : memref<30x32xf32, #tpu.memory_space<vmem>>, vector<1x32xf32>
    tpu.vector_store %arg10[%c11, %c0_74], %377 {strides = array<i32>} : memref<30x32xf32, #tpu.memory_space<vmem>>, vector<1x32xf32>,
    %cst_75 = arith.constant dense<0.000000e+00> : vector<1x128xf32>
    %379 = tpu.matmul %377, %160, %cst_75 {dimension_numbers = #tpu.dot_dimension_numbers<[1], [0], [0], [1], [0, 0, 1, 1], [], []>} : vector<1x32xf32>, vector<32x128xf32>, vector<1x128xf32> -> vector<1x128xf32>
    %380 = arith.addf %379, %162 : vector<1x128xf32>
    %381 = arith.negf %380 : vector<1x128xf32>
    %382 = math.exp %381 : vector<1x128xf32>
    %cst_76 = arith.constant 1.000000e+00 : f32
    %383 = vector.broadcast %cst_76 : f32 to vector<1x128xf32>
    %384 = arith.addf %383, %382 : vector<1x128xf32>
    %385 = arith.divf %383, %384 : vector<1x128xf32>
    %386 = math.tanh %380 : vector<1x128xf32>
    %387 = vector.extract_strided_slice %385 {offsets = [0, 0], sizes = [1, 32], strides = [1, 1]} : vector<1x128xf32> to vector<1x32xf32>
    %388 = vector.extract_strided_slice %385 {offsets = [0, 32], sizes = [1, 32], strides = [1, 1]} : vector<1x128xf32> to vector<1x32xf32>
    %389 = vector.extract_strided_slice %385 {offsets = [0, 96], sizes = [1, 32], strides = [1, 1]} : vector<1x128xf32> to vector<1x32xf32>
    %390 = vector.extract_strided_slice %386 {offsets = [0, 64], sizes = [1, 32], strides = [1, 1]} : vector<1x128xf32> to vector<1x32xf32>
    %391 = arith.mulf %388, %375 : vector<1x32xf32>
    %392 = arith.mulf %387, %390 : vector<1x32xf32>
    %393 = arith.addf %391, %392 : vector<1x32xf32>
    %394 = math.tanh %393 : vector<1x32xf32>
    %395 = arith.mulf %389, %394 : vector<1x32xf32>
    %c12 = arith.constant 12 : index
    %c0_77 = arith.constant 0 : index
    %396 = vector.load %arg10[%c12, %c0_77] : memref<30x32xf32, #tpu.memory_space<vmem>>, vector<1x32xf32>
    tpu.vector_store %arg10[%c12, %c0_77], %395 {strides = array<i32>} : memref<30x32xf32, #tpu.memory_space<vmem>>, vector<1x32xf32>,
    %cst_78 = arith.constant dense<0.000000e+00> : vector<1x128xf32>
    %397 = tpu.matmul %395, %160, %cst_78 {dimension_numbers = #tpu.dot_dimension_numbers<[1], [0], [0], [1], [0, 0, 1, 1], [], []>} : vector<1x32xf32>, vector<32x128xf32>, vector<1x128xf32> -> vector<1x128xf32>
    %398 = arith.addf %397, %162 : vector<1x128xf32>
    %399 = arith.negf %398 : vector<1x128xf32>
    %400 = math.exp %399 : vector<1x128xf32>
    %cst_79 = arith.constant 1.000000e+00 : f32
    %401 = vector.broadcast %cst_79 : f32 to vector<1x128xf32>
    %402 = arith.addf %401, %400 : vector<1x128xf32>
    %403 = arith.divf %401, %402 : vector<1x128xf32>
    %404 = math.tanh %398 : vector<1x128xf32>
    %405 = vector.extract_strided_slice %403 {offsets = [0, 0], sizes = [1, 32], strides = [1, 1]} : vector<1x128xf32> to vector<1x32xf32>
    %406 = vector.extract_strided_slice %403 {offsets = [0, 32], sizes = [1, 32], strides = [1, 1]} : vector<1x128xf32> to vector<1x32xf32>
    %407 = vector.extract_strided_slice %403 {offsets = [0, 96], sizes = [1, 32], strides = [1, 1]} : vector<1x128xf32> to vector<1x32xf32>
    %408 = vector.extract_strided_slice %404 {offsets = [0, 64], sizes = [1, 32], strides = [1, 1]} : vector<1x128xf32> to vector<1x32xf32>
    %409 = arith.mulf %406, %393 : vector<1x32xf32>
    %410 = arith.mulf %405, %408 : vector<1x32xf32>
    %411 = arith.addf %409, %410 : vector<1x32xf32>
    %412 = math.tanh %411 : vector<1x32xf32>
    %413 = arith.mulf %407, %412 : vector<1x32xf32>
    %c13 = arith.constant 13 : index
    %c0_80 = arith.constant 0 : index
    %414 = vector.load %arg10[%c13, %c0_80] : memref<30x32xf32, #tpu.memory_space<vmem>>, vector<1x32xf32>
    tpu.vector_store %arg10[%c13, %c0_80], %413 {strides = array<i32>} : memref<30x32xf32, #tpu.memory_space<vmem>>, vector<1x32xf32>,
    %cst_81 = arith.constant dense<0.000000e+00> : vector<1x128xf32>
    %415 = tpu.matmul %413, %160, %cst_81 {dimension_numbers = #tpu.dot_dimension_numbers<[1], [0], [0], [1], [0, 0, 1, 1], [], []>} : vector<1x32xf32>, vector<32x128xf32>, vector<1x128xf32> -> vector<1x128xf32>
    %416 = arith.addf %415, %162 : vector<1x128xf32>
    %417 = arith.negf %416 : vector<1x128xf32>
    %418 = math.exp %417 : vector<1x128xf32>
    %cst_82 = arith.constant 1.000000e+00 : f32
    %419 = vector.broadcast %cst_82 : f32 to vector<1x128xf32>
    %420 = arith.addf %419, %418 : vector<1x128xf32>
    %421 = arith.divf %419, %420 : vector<1x128xf32>
    %422 = math.tanh %416 : vector<1x128xf32>
    %423 = vector.extract_strided_slice %421 {offsets = [0, 0], sizes = [1, 32], strides = [1, 1]} : vector<1x128xf32> to vector<1x32xf32>
    %424 = vector.extract_strided_slice %421 {offsets = [0, 32], sizes = [1, 32], strides = [1, 1]} : vector<1x128xf32> to vector<1x32xf32>
    %425 = vector.extract_strided_slice %421 {offsets = [0, 96], sizes = [1, 32], strides = [1, 1]} : vector<1x128xf32> to vector<1x32xf32>
    %426 = vector.extract_strided_slice %422 {offsets = [0, 64], sizes = [1, 32], strides = [1, 1]} : vector<1x128xf32> to vector<1x32xf32>
    %427 = arith.mulf %424, %411 : vector<1x32xf32>
    %428 = arith.mulf %423, %426 : vector<1x32xf32>
    %429 = arith.addf %427, %428 : vector<1x32xf32>
    %430 = math.tanh %429 : vector<1x32xf32>
    %431 = arith.mulf %425, %430 : vector<1x32xf32>
    %c14 = arith.constant 14 : index
    %c0_83 = arith.constant 0 : index
    %432 = vector.load %arg10[%c14, %c0_83] : memref<30x32xf32, #tpu.memory_space<vmem>>, vector<1x32xf32>
    tpu.vector_store %arg10[%c14, %c0_83], %431 {strides = array<i32>} : memref<30x32xf32, #tpu.memory_space<vmem>>, vector<1x32xf32>,
    %cst_84 = arith.constant dense<0.000000e+00> : vector<1x128xf32>
    %433 = tpu.matmul %431, %160, %cst_84 {dimension_numbers = #tpu.dot_dimension_numbers<[1], [0], [0], [1], [0, 0, 1, 1], [], []>} : vector<1x32xf32>, vector<32x128xf32>, vector<1x128xf32> -> vector<1x128xf32>
    %434 = arith.addf %433, %162 : vector<1x128xf32>
    %435 = arith.negf %434 : vector<1x128xf32>
    %436 = math.exp %435 : vector<1x128xf32>
    %cst_85 = arith.constant 1.000000e+00 : f32
    %437 = vector.broadcast %cst_85 : f32 to vector<1x128xf32>
    %438 = arith.addf %437, %436 : vector<1x128xf32>
    %439 = arith.divf %437, %438 : vector<1x128xf32>
    %440 = math.tanh %434 : vector<1x128xf32>
    %441 = vector.extract_strided_slice %439 {offsets = [0, 0], sizes = [1, 32], strides = [1, 1]} : vector<1x128xf32> to vector<1x32xf32>
    %442 = vector.extract_strided_slice %439 {offsets = [0, 32], sizes = [1, 32], strides = [1, 1]} : vector<1x128xf32> to vector<1x32xf32>
    %443 = vector.extract_strided_slice %439 {offsets = [0, 96], sizes = [1, 32], strides = [1, 1]} : vector<1x128xf32> to vector<1x32xf32>
    %444 = vector.extract_strided_slice %440 {offsets = [0, 64], sizes = [1, 32], strides = [1, 1]} : vector<1x128xf32> to vector<1x32xf32>
    %445 = arith.mulf %442, %429 : vector<1x32xf32>
    %446 = arith.mulf %441, %444 : vector<1x32xf32>
    %447 = arith.addf %445, %446 : vector<1x32xf32>
    %448 = math.tanh %447 : vector<1x32xf32>
    %449 = arith.mulf %443, %448 : vector<1x32xf32>
    %c15 = arith.constant 15 : index
    %c0_86 = arith.constant 0 : index
    %450 = vector.load %arg10[%c15, %c0_86] : memref<30x32xf32, #tpu.memory_space<vmem>>, vector<1x32xf32>
    tpu.vector_store %arg10[%c15, %c0_86], %449 {strides = array<i32>} : memref<30x32xf32, #tpu.memory_space<vmem>>, vector<1x32xf32>,
    %cst_87 = arith.constant dense<0.000000e+00> : vector<1x128xf32>
    %451 = tpu.matmul %449, %160, %cst_87 {dimension_numbers = #tpu.dot_dimension_numbers<[1], [0], [0], [1], [0, 0, 1, 1], [], []>} : vector<1x32xf32>, vector<32x128xf32>, vector<1x128xf32> -> vector<1x128xf32>
    %452 = arith.addf %451, %162 : vector<1x128xf32>
    %453 = arith.negf %452 : vector<1x128xf32>
    %454 = math.exp %453 : vector<1x128xf32>
    %cst_88 = arith.constant 1.000000e+00 : f32
    %455 = vector.broadcast %cst_88 : f32 to vector<1x128xf32>
    %456 = arith.addf %455, %454 : vector<1x128xf32>
    %457 = arith.divf %455, %456 : vector<1x128xf32>
    %458 = math.tanh %452 : vector<1x128xf32>
    %459 = vector.extract_strided_slice %457 {offsets = [0, 0], sizes = [1, 32], strides = [1, 1]} : vector<1x128xf32> to vector<1x32xf32>
    %460 = vector.extract_strided_slice %457 {offsets = [0, 32], sizes = [1, 32], strides = [1, 1]} : vector<1x128xf32> to vector<1x32xf32>
    %461 = vector.extract_strided_slice %457 {offsets = [0, 96], sizes = [1, 32], strides = [1, 1]} : vector<1x128xf32> to vector<1x32xf32>
    %462 = vector.extract_strided_slice %458 {offsets = [0, 64], sizes = [1, 32], strides = [1, 1]} : vector<1x128xf32> to vector<1x32xf32>
    %463 = arith.mulf %460, %447 : vector<1x32xf32>
    %464 = arith.mulf %459, %462 : vector<1x32xf32>
    %465 = arith.addf %463, %464 : vector<1x32xf32>
    %466 = math.tanh %465 : vector<1x32xf32>
    %467 = arith.mulf %461, %466 : vector<1x32xf32>
    %c16 = arith.constant 16 : index
    %c0_89 = arith.constant 0 : index
    %468 = vector.load %arg10[%c16, %c0_89] : memref<30x32xf32, #tpu.memory_space<vmem>>, vector<1x32xf32>
    tpu.vector_store %arg10[%c16, %c0_89], %467 {strides = array<i32>} : memref<30x32xf32, #tpu.memory_space<vmem>>, vector<1x32xf32>,
    %cst_90 = arith.constant dense<0.000000e+00> : vector<1x128xf32>
    %469 = tpu.matmul %467, %160, %cst_90 {dimension_numbers = #tpu.dot_dimension_numbers<[1], [0], [0], [1], [0, 0, 1, 1], [], []>} : vector<1x32xf32>, vector<32x128xf32>, vector<1x128xf32> -> vector<1x128xf32>
    %470 = arith.addf %469, %162 : vector<1x128xf32>
    %471 = arith.negf %470 : vector<1x128xf32>
    %472 = math.exp %471 : vector<1x128xf32>
    %cst_91 = arith.constant 1.000000e+00 : f32
    %473 = vector.broadcast %cst_91 : f32 to vector<1x128xf32>
    %474 = arith.addf %473, %472 : vector<1x128xf32>
    %475 = arith.divf %473, %474 : vector<1x128xf32>
    %476 = math.tanh %470 : vector<1x128xf32>
    %477 = vector.extract_strided_slice %475 {offsets = [0, 0], sizes = [1, 32], strides = [1, 1]} : vector<1x128xf32> to vector<1x32xf32>
    %478 = vector.extract_strided_slice %475 {offsets = [0, 32], sizes = [1, 32], strides = [1, 1]} : vector<1x128xf32> to vector<1x32xf32>
    %479 = vector.extract_strided_slice %475 {offsets = [0, 96], sizes = [1, 32], strides = [1, 1]} : vector<1x128xf32> to vector<1x32xf32>
    %480 = vector.extract_strided_slice %476 {offsets = [0, 64], sizes = [1, 32], strides = [1, 1]} : vector<1x128xf32> to vector<1x32xf32>
    %481 = arith.mulf %478, %465 : vector<1x32xf32>
    %482 = arith.mulf %477, %480 : vector<1x32xf32>
    %483 = arith.addf %481, %482 : vector<1x32xf32>
    %484 = math.tanh %483 : vector<1x32xf32>
    %485 = arith.mulf %479, %484 : vector<1x32xf32>
    %c17 = arith.constant 17 : index
    %c0_92 = arith.constant 0 : index
    %486 = vector.load %arg10[%c17, %c0_92] : memref<30x32xf32, #tpu.memory_space<vmem>>, vector<1x32xf32>
    tpu.vector_store %arg10[%c17, %c0_92], %485 {strides = array<i32>} : memref<30x32xf32, #tpu.memory_space<vmem>>, vector<1x32xf32>,
    %cst_93 = arith.constant dense<0.000000e+00> : vector<1x128xf32>
    %487 = tpu.matmul %485, %160, %cst_93 {dimension_numbers = #tpu.dot_dimension_numbers<[1], [0], [0], [1], [0, 0, 1, 1], [], []>} : vector<1x32xf32>, vector<32x128xf32>, vector<1x128xf32> -> vector<1x128xf32>
    %488 = arith.addf %487, %162 : vector<1x128xf32>
    %489 = arith.negf %488 : vector<1x128xf32>
    %490 = math.exp %489 : vector<1x128xf32>
    %cst_94 = arith.constant 1.000000e+00 : f32
    %491 = vector.broadcast %cst_94 : f32 to vector<1x128xf32>
    %492 = arith.addf %491, %490 : vector<1x128xf32>
    %493 = arith.divf %491, %492 : vector<1x128xf32>
    %494 = math.tanh %488 : vector<1x128xf32>
    %495 = vector.extract_strided_slice %493 {offsets = [0, 0], sizes = [1, 32], strides = [1, 1]} : vector<1x128xf32> to vector<1x32xf32>
    %496 = vector.extract_strided_slice %493 {offsets = [0, 32], sizes = [1, 32], strides = [1, 1]} : vector<1x128xf32> to vector<1x32xf32>
    %497 = vector.extract_strided_slice %493 {offsets = [0, 96], sizes = [1, 32], strides = [1, 1]} : vector<1x128xf32> to vector<1x32xf32>
    %498 = vector.extract_strided_slice %494 {offsets = [0, 64], sizes = [1, 32], strides = [1, 1]} : vector<1x128xf32> to vector<1x32xf32>
    %499 = arith.mulf %496, %483 : vector<1x32xf32>
    %500 = arith.mulf %495, %498 : vector<1x32xf32>
    %501 = arith.addf %499, %500 : vector<1x32xf32>
    %502 = math.tanh %501 : vector<1x32xf32>
    %503 = arith.mulf %497, %502 : vector<1x32xf32>
    %c18 = arith.constant 18 : index
    %c0_95 = arith.constant 0 : index
    %504 = vector.load %arg10[%c18, %c0_95] : memref<30x32xf32, #tpu.memory_space<vmem>>, vector<1x32xf32>
    tpu.vector_store %arg10[%c18, %c0_95], %503 {strides = array<i32>} : memref<30x32xf32, #tpu.memory_space<vmem>>, vector<1x32xf32>,
    %cst_96 = arith.constant dense<0.000000e+00> : vector<1x128xf32>
    %505 = tpu.matmul %503, %160, %cst_96 {dimension_numbers = #tpu.dot_dimension_numbers<[1], [0], [0], [1], [0, 0, 1, 1], [], []>} : vector<1x32xf32>, vector<32x128xf32>, vector<1x128xf32> -> vector<1x128xf32>
    %506 = arith.addf %505, %162 : vector<1x128xf32>
    %507 = arith.negf %506 : vector<1x128xf32>
    %508 = math.exp %507 : vector<1x128xf32>
    %cst_97 = arith.constant 1.000000e+00 : f32
    %509 = vector.broadcast %cst_97 : f32 to vector<1x128xf32>
    %510 = arith.addf %509, %508 : vector<1x128xf32>
    %511 = arith.divf %509, %510 : vector<1x128xf32>
    %512 = math.tanh %506 : vector<1x128xf32>
    %513 = vector.extract_strided_slice %511 {offsets = [0, 0], sizes = [1, 32], strides = [1, 1]} : vector<1x128xf32> to vector<1x32xf32>
    %514 = vector.extract_strided_slice %511 {offsets = [0, 32], sizes = [1, 32], strides = [1, 1]} : vector<1x128xf32> to vector<1x32xf32>
    %515 = vector.extract_strided_slice %511 {offsets = [0, 96], sizes = [1, 32], strides = [1, 1]} : vector<1x128xf32> to vector<1x32xf32>
    %516 = vector.extract_strided_slice %512 {offsets = [0, 64], sizes = [1, 32], strides = [1, 1]} : vector<1x128xf32> to vector<1x32xf32>
    %517 = arith.mulf %514, %501 : vector<1x32xf32>
    %518 = arith.mulf %513, %516 : vector<1x32xf32>
    %519 = arith.addf %517, %518 : vector<1x32xf32>
    %520 = math.tanh %519 : vector<1x32xf32>
    %521 = arith.mulf %515, %520 : vector<1x32xf32>
    %c19 = arith.constant 19 : index
    %c0_98 = arith.constant 0 : index
    %522 = vector.load %arg10[%c19, %c0_98] : memref<30x32xf32, #tpu.memory_space<vmem>>, vector<1x32xf32>
    tpu.vector_store %arg10[%c19, %c0_98], %521 {strides = array<i32>} : memref<30x32xf32, #tpu.memory_space<vmem>>, vector<1x32xf32>,
    %cst_99 = arith.constant dense<0.000000e+00> : vector<1x128xf32>
    %523 = tpu.matmul %521, %160, %cst_99 {dimension_numbers = #tpu.dot_dimension_numbers<[1], [0], [0], [1], [0, 0, 1, 1], [], []>} : vector<1x32xf32>, vector<32x128xf32>, vector<1x128xf32> -> vector<1x128xf32>
    %524 = arith.addf %523, %162 : vector<1x128xf32>
    %525 = arith.negf %524 : vector<1x128xf32>
    %526 = math.exp %525 : vector<1x128xf32>
    %cst_100 = arith.constant 1.000000e+00 : f32
    %527 = vector.broadcast %cst_100 : f32 to vector<1x128xf32>
    %528 = arith.addf %527, %526 : vector<1x128xf32>
    %529 = arith.divf %527, %528 : vector<1x128xf32>
    %530 = math.tanh %524 : vector<1x128xf32>
    %531 = vector.extract_strided_slice %529 {offsets = [0, 0], sizes = [1, 32], strides = [1, 1]} : vector<1x128xf32> to vector<1x32xf32>
    %532 = vector.extract_strided_slice %529 {offsets = [0, 32], sizes = [1, 32], strides = [1, 1]} : vector<1x128xf32> to vector<1x32xf32>
    %533 = vector.extract_strided_slice %529 {offsets = [0, 96], sizes = [1, 32], strides = [1, 1]} : vector<1x128xf32> to vector<1x32xf32>
    %534 = vector.extract_strided_slice %530 {offsets = [0, 64], sizes = [1, 32], strides = [1, 1]} : vector<1x128xf32> to vector<1x32xf32>
    %535 = arith.mulf %532, %519 : vector<1x32xf32>
    %536 = arith.mulf %531, %534 : vector<1x32xf32>
    %537 = arith.addf %535, %536 : vector<1x32xf32>
    %538 = math.tanh %537 : vector<1x32xf32>
    %539 = arith.mulf %533, %538 : vector<1x32xf32>
    %c20 = arith.constant 20 : index
    %c0_101 = arith.constant 0 : index
    %540 = vector.load %arg10[%c20, %c0_101] : memref<30x32xf32, #tpu.memory_space<vmem>>, vector<1x32xf32>
    tpu.vector_store %arg10[%c20, %c0_101], %539 {strides = array<i32>} : memref<30x32xf32, #tpu.memory_space<vmem>>, vector<1x32xf32>,
    %cst_102 = arith.constant dense<0.000000e+00> : vector<1x128xf32>
    %541 = tpu.matmul %539, %160, %cst_102 {dimension_numbers = #tpu.dot_dimension_numbers<[1], [0], [0], [1], [0, 0, 1, 1], [], []>} : vector<1x32xf32>, vector<32x128xf32>, vector<1x128xf32> -> vector<1x128xf32>
    %542 = arith.addf %541, %162 : vector<1x128xf32>
    %543 = arith.negf %542 : vector<1x128xf32>
    %544 = math.exp %543 : vector<1x128xf32>
    %cst_103 = arith.constant 1.000000e+00 : f32
    %545 = vector.broadcast %cst_103 : f32 to vector<1x128xf32>
    %546 = arith.addf %545, %544 : vector<1x128xf32>
    %547 = arith.divf %545, %546 : vector<1x128xf32>
    %548 = math.tanh %542 : vector<1x128xf32>
    %549 = vector.extract_strided_slice %547 {offsets = [0, 0], sizes = [1, 32], strides = [1, 1]} : vector<1x128xf32> to vector<1x32xf32>
    %550 = vector.extract_strided_slice %547 {offsets = [0, 32], sizes = [1, 32], strides = [1, 1]} : vector<1x128xf32> to vector<1x32xf32>
    %551 = vector.extract_strided_slice %547 {offsets = [0, 96], sizes = [1, 32], strides = [1, 1]} : vector<1x128xf32> to vector<1x32xf32>
    %552 = vector.extract_strided_slice %548 {offsets = [0, 64], sizes = [1, 32], strides = [1, 1]} : vector<1x128xf32> to vector<1x32xf32>
    %553 = arith.mulf %550, %537 : vector<1x32xf32>
    %554 = arith.mulf %549, %552 : vector<1x32xf32>
    %555 = arith.addf %553, %554 : vector<1x32xf32>
    %556 = math.tanh %555 : vector<1x32xf32>
    %557 = arith.mulf %551, %556 : vector<1x32xf32>
    %c21 = arith.constant 21 : index
    %c0_104 = arith.constant 0 : index
    %558 = vector.load %arg10[%c21, %c0_104] : memref<30x32xf32, #tpu.memory_space<vmem>>, vector<1x32xf32>
    tpu.vector_store %arg10[%c21, %c0_104], %557 {strides = array<i32>} : memref<30x32xf32, #tpu.memory_space<vmem>>, vector<1x32xf32>,
    %cst_105 = arith.constant dense<0.000000e+00> : vector<1x128xf32>
    %559 = tpu.matmul %557, %160, %cst_105 {dimension_numbers = #tpu.dot_dimension_numbers<[1], [0], [0], [1], [0, 0, 1, 1], [], []>} : vector<1x32xf32>, vector<32x128xf32>, vector<1x128xf32> -> vector<1x128xf32>
    %560 = arith.addf %559, %162 : vector<1x128xf32>
    %561 = arith.negf %560 : vector<1x128xf32>
    %562 = math.exp %561 : vector<1x128xf32>
    %cst_106 = arith.constant 1.000000e+00 : f32
    %563 = vector.broadcast %cst_106 : f32 to vector<1x128xf32>
    %564 = arith.addf %563, %562 : vector<1x128xf32>
    %565 = arith.divf %563, %564 : vector<1x128xf32>
    %566 = math.tanh %560 : vector<1x128xf32>
    %567 = vector.extract_strided_slice %565 {offsets = [0, 0], sizes = [1, 32], strides = [1, 1]} : vector<1x128xf32> to vector<1x32xf32>
    %568 = vector.extract_strided_slice %565 {offsets = [0, 32], sizes = [1, 32], strides = [1, 1]} : vector<1x128xf32> to vector<1x32xf32>
    %569 = vector.extract_strided_slice %565 {offsets = [0, 96], sizes = [1, 32], strides = [1, 1]} : vector<1x128xf32> to vector<1x32xf32>
    %570 = vector.extract_strided_slice %566 {offsets = [0, 64], sizes = [1, 32], strides = [1, 1]} : vector<1x128xf32> to vector<1x32xf32>
    %571 = arith.mulf %568, %555 : vector<1x32xf32>
    %572 = arith.mulf %567, %570 : vector<1x32xf32>
    %573 = arith.addf %571, %572 : vector<1x32xf32>
    %574 = math.tanh %573 : vector<1x32xf32>
    %575 = arith.mulf %569, %574 : vector<1x32xf32>
    %c22 = arith.constant 22 : index
    %c0_107 = arith.constant 0 : index
    %576 = vector.load %arg10[%c22, %c0_107] : memref<30x32xf32, #tpu.memory_space<vmem>>, vector<1x32xf32>
    tpu.vector_store %arg10[%c22, %c0_107], %575 {strides = array<i32>} : memref<30x32xf32, #tpu.memory_space<vmem>>, vector<1x32xf32>,
    %cst_108 = arith.constant dense<0.000000e+00> : vector<1x128xf32>
    %577 = tpu.matmul %575, %160, %cst_108 {dimension_numbers = #tpu.dot_dimension_numbers<[1], [0], [0], [1], [0, 0, 1, 1], [], []>} : vector<1x32xf32>, vector<32x128xf32>, vector<1x128xf32> -> vector<1x128xf32>
    %578 = arith.addf %577, %162 : vector<1x128xf32>
    %579 = arith.negf %578 : vector<1x128xf32>
    %580 = math.exp %579 : vector<1x128xf32>
    %cst_109 = arith.constant 1.000000e+00 : f32
    %581 = vector.broadcast %cst_109 : f32 to vector<1x128xf32>
    %582 = arith.addf %581, %580 : vector<1x128xf32>
    %583 = arith.divf %581, %582 : vector<1x128xf32>
    %584 = math.tanh %578 : vector<1x128xf32>
    %585 = vector.extract_strided_slice %583 {offsets = [0, 0], sizes = [1, 32], strides = [1, 1]} : vector<1x128xf32> to vector<1x32xf32>
    %586 = vector.extract_strided_slice %583 {offsets = [0, 32], sizes = [1, 32], strides = [1, 1]} : vector<1x128xf32> to vector<1x32xf32>
    %587 = vector.extract_strided_slice %583 {offsets = [0, 96], sizes = [1, 32], strides = [1, 1]} : vector<1x128xf32> to vector<1x32xf32>
    %588 = vector.extract_strided_slice %584 {offsets = [0, 64], sizes = [1, 32], strides = [1, 1]} : vector<1x128xf32> to vector<1x32xf32>
    %589 = arith.mulf %586, %573 : vector<1x32xf32>
    %590 = arith.mulf %585, %588 : vector<1x32xf32>
    %591 = arith.addf %589, %590 : vector<1x32xf32>
    %592 = math.tanh %591 : vector<1x32xf32>
    %593 = arith.mulf %587, %592 : vector<1x32xf32>
    %c23 = arith.constant 23 : index
    %c0_110 = arith.constant 0 : index
    %594 = vector.load %arg10[%c23, %c0_110] : memref<30x32xf32, #tpu.memory_space<vmem>>, vector<1x32xf32>
    tpu.vector_store %arg10[%c23, %c0_110], %593 {strides = array<i32>} : memref<30x32xf32, #tpu.memory_space<vmem>>, vector<1x32xf32>,
    %cst_111 = arith.constant dense<0.000000e+00> : vector<1x128xf32>
    %595 = tpu.matmul %593, %160, %cst_111 {dimension_numbers = #tpu.dot_dimension_numbers<[1], [0], [0], [1], [0, 0, 1, 1], [], []>} : vector<1x32xf32>, vector<32x128xf32>, vector<1x128xf32> -> vector<1x128xf32>
    %596 = arith.addf %595, %162 : vector<1x128xf32>
    %597 = arith.negf %596 : vector<1x128xf32>
    %598 = math.exp %597 : vector<1x128xf32>
    %cst_112 = arith.constant 1.000000e+00 : f32
    %599 = vector.broadcast %cst_112 : f32 to vector<1x128xf32>
    %600 = arith.addf %599, %598 : vector<1x128xf32>
    %601 = arith.divf %599, %600 : vector<1x128xf32>
    %602 = math.tanh %596 : vector<1x128xf32>
    %603 = vector.extract_strided_slice %601 {offsets = [0, 0], sizes = [1, 32], strides = [1, 1]} : vector<1x128xf32> to vector<1x32xf32>
    %604 = vector.extract_strided_slice %601 {offsets = [0, 32], sizes = [1, 32], strides = [1, 1]} : vector<1x128xf32> to vector<1x32xf32>
    %605 = vector.extract_strided_slice %601 {offsets = [0, 96], sizes = [1, 32], strides = [1, 1]} : vector<1x128xf32> to vector<1x32xf32>
    %606 = vector.extract_strided_slice %602 {offsets = [0, 64], sizes = [1, 32], strides = [1, 1]} : vector<1x128xf32> to vector<1x32xf32>
    %607 = arith.mulf %604, %591 : vector<1x32xf32>
    %608 = arith.mulf %603, %606 : vector<1x32xf32>
    %609 = arith.addf %607, %608 : vector<1x32xf32>
    %610 = math.tanh %609 : vector<1x32xf32>
    %611 = arith.mulf %605, %610 : vector<1x32xf32>
    %c24 = arith.constant 24 : index
    %c0_113 = arith.constant 0 : index
    %612 = vector.load %arg10[%c24, %c0_113] : memref<30x32xf32, #tpu.memory_space<vmem>>, vector<1x32xf32>
    tpu.vector_store %arg10[%c24, %c0_113], %611 {strides = array<i32>} : memref<30x32xf32, #tpu.memory_space<vmem>>, vector<1x32xf32>,
    %cst_114 = arith.constant dense<0.000000e+00> : vector<1x128xf32>
    %613 = tpu.matmul %611, %160, %cst_114 {dimension_numbers = #tpu.dot_dimension_numbers<[1], [0], [0], [1], [0, 0, 1, 1], [], []>} : vector<1x32xf32>, vector<32x128xf32>, vector<1x128xf32> -> vector<1x128xf32>
    %614 = arith.addf %613, %162 : vector<1x128xf32>
    %615 = arith.negf %614 : vector<1x128xf32>
    %616 = math.exp %615 : vector<1x128xf32>
    %cst_115 = arith.constant 1.000000e+00 : f32
    %617 = vector.broadcast %cst_115 : f32 to vector<1x128xf32>
    %618 = arith.addf %617, %616 : vector<1x128xf32>
    %619 = arith.divf %617, %618 : vector<1x128xf32>
    %620 = math.tanh %614 : vector<1x128xf32>
    %621 = vector.extract_strided_slice %619 {offsets = [0, 0], sizes = [1, 32], strides = [1, 1]} : vector<1x128xf32> to vector<1x32xf32>
    %622 = vector.extract_strided_slice %619 {offsets = [0, 32], sizes = [1, 32], strides = [1, 1]} : vector<1x128xf32> to vector<1x32xf32>
    %623 = vector.extract_strided_slice %619 {offsets = [0, 96], sizes = [1, 32], strides = [1, 1]} : vector<1x128xf32> to vector<1x32xf32>
    %624 = vector.extract_strided_slice %620 {offsets = [0, 64], sizes = [1, 32], strides = [1, 1]} : vector<1x128xf32> to vector<1x32xf32>
    %625 = arith.mulf %622, %609 : vector<1x32xf32>
    %626 = arith.mulf %621, %624 : vector<1x32xf32>
    %627 = arith.addf %625, %626 : vector<1x32xf32>
    %628 = math.tanh %627 : vector<1x32xf32>
    %629 = arith.mulf %623, %628 : vector<1x32xf32>
    %c25 = arith.constant 25 : index
    %c0_116 = arith.constant 0 : index
    %630 = vector.load %arg10[%c25, %c0_116] : memref<30x32xf32, #tpu.memory_space<vmem>>, vector<1x32xf32>
    tpu.vector_store %arg10[%c25, %c0_116], %629 {strides = array<i32>} : memref<30x32xf32, #tpu.memory_space<vmem>>, vector<1x32xf32>,
    %cst_117 = arith.constant dense<0.000000e+00> : vector<1x128xf32>
    %631 = tpu.matmul %629, %160, %cst_117 {dimension_numbers = #tpu.dot_dimension_numbers<[1], [0], [0], [1], [0, 0, 1, 1], [], []>} : vector<1x32xf32>, vector<32x128xf32>, vector<1x128xf32> -> vector<1x128xf32>
    %632 = arith.addf %631, %162 : vector<1x128xf32>
    %633 = arith.negf %632 : vector<1x128xf32>
    %634 = math.exp %633 : vector<1x128xf32>
    %cst_118 = arith.constant 1.000000e+00 : f32
    %635 = vector.broadcast %cst_118 : f32 to vector<1x128xf32>
    %636 = arith.addf %635, %634 : vector<1x128xf32>
    %637 = arith.divf %635, %636 : vector<1x128xf32>
    %638 = math.tanh %632 : vector<1x128xf32>
    %639 = vector.extract_strided_slice %637 {offsets = [0, 0], sizes = [1, 32], strides = [1, 1]} : vector<1x128xf32> to vector<1x32xf32>
    %640 = vector.extract_strided_slice %637 {offsets = [0, 32], sizes = [1, 32], strides = [1, 1]} : vector<1x128xf32> to vector<1x32xf32>
    %641 = vector.extract_strided_slice %637 {offsets = [0, 96], sizes = [1, 32], strides = [1, 1]} : vector<1x128xf32> to vector<1x32xf32>
    %642 = vector.extract_strided_slice %638 {offsets = [0, 64], sizes = [1, 32], strides = [1, 1]} : vector<1x128xf32> to vector<1x32xf32>
    %643 = arith.mulf %640, %627 : vector<1x32xf32>
    %644 = arith.mulf %639, %642 : vector<1x32xf32>
    %645 = arith.addf %643, %644 : vector<1x32xf32>
    %646 = math.tanh %645 : vector<1x32xf32>
    %647 = arith.mulf %641, %646 : vector<1x32xf32>
    %c26 = arith.constant 26 : index
    %c0_119 = arith.constant 0 : index
    %648 = vector.load %arg10[%c26, %c0_119] : memref<30x32xf32, #tpu.memory_space<vmem>>, vector<1x32xf32>
    tpu.vector_store %arg10[%c26, %c0_119], %647 {strides = array<i32>} : memref<30x32xf32, #tpu.memory_space<vmem>>, vector<1x32xf32>,
    %cst_120 = arith.constant dense<0.000000e+00> : vector<1x128xf32>
    %649 = tpu.matmul %647, %160, %cst_120 {dimension_numbers = #tpu.dot_dimension_numbers<[1], [0], [0], [1], [0, 0, 1, 1], [], []>} : vector<1x32xf32>, vector<32x128xf32>, vector<1x128xf32> -> vector<1x128xf32>
    %650 = arith.addf %649, %162 : vector<1x128xf32>
    %651 = arith.negf %650 : vector<1x128xf32>
    %652 = math.exp %651 : vector<1x128xf32>
    %cst_121 = arith.constant 1.000000e+00 : f32
    %653 = vector.broadcast %cst_121 : f32 to vector<1x128xf32>
    %654 = arith.addf %653, %652 : vector<1x128xf32>
    %655 = arith.divf %653, %654 : vector<1x128xf32>
    %656 = math.tanh %650 : vector<1x128xf32>
    %657 = vector.extract_strided_slice %655 {offsets = [0, 0], sizes = [1, 32], strides = [1, 1]} : vector<1x128xf32> to vector<1x32xf32>
    %658 = vector.extract_strided_slice %655 {offsets = [0, 32], sizes = [1, 32], strides = [1, 1]} : vector<1x128xf32> to vector<1x32xf32>
    %659 = vector.extract_strided_slice %655 {offsets = [0, 96], sizes = [1, 32], strides = [1, 1]} : vector<1x128xf32> to vector<1x32xf32>
    %660 = vector.extract_strided_slice %656 {offsets = [0, 64], sizes = [1, 32], strides = [1, 1]} : vector<1x128xf32> to vector<1x32xf32>
    %661 = arith.mulf %658, %645 : vector<1x32xf32>
    %662 = arith.mulf %657, %660 : vector<1x32xf32>
    %663 = arith.addf %661, %662 : vector<1x32xf32>
    %664 = math.tanh %663 : vector<1x32xf32>
    %665 = arith.mulf %659, %664 : vector<1x32xf32>
    %c27 = arith.constant 27 : index
    %c0_122 = arith.constant 0 : index
    %666 = vector.load %arg10[%c27, %c0_122] : memref<30x32xf32, #tpu.memory_space<vmem>>, vector<1x32xf32>
    tpu.vector_store %arg10[%c27, %c0_122], %665 {strides = array<i32>} : memref<30x32xf32, #tpu.memory_space<vmem>>, vector<1x32xf32>,
    %cst_123 = arith.constant dense<0.000000e+00> : vector<1x128xf32>
    %667 = tpu.matmul %665, %160, %cst_123 {dimension_numbers = #tpu.dot_dimension_numbers<[1], [0], [0], [1], [0, 0, 1, 1], [], []>} : vector<1x32xf32>, vector<32x128xf32>, vector<1x128xf32> -> vector<1x128xf32>
    %668 = arith.addf %667, %162 : vector<1x128xf32>
    %669 = arith.negf %668 : vector<1x128xf32>
    %670 = math.exp %669 : vector<1x128xf32>
    %cst_124 = arith.constant 1.000000e+00 : f32
    %671 = vector.broadcast %cst_124 : f32 to vector<1x128xf32>
    %672 = arith.addf %671, %670 : vector<1x128xf32>
    %673 = arith.divf %671, %672 : vector<1x128xf32>
    %674 = math.tanh %668 : vector<1x128xf32>
    %675 = vector.extract_strided_slice %673 {offsets = [0, 0], sizes = [1, 32], strides = [1, 1]} : vector<1x128xf32> to vector<1x32xf32>
    %676 = vector.extract_strided_slice %673 {offsets = [0, 32], sizes = [1, 32], strides = [1, 1]} : vector<1x128xf32> to vector<1x32xf32>
    %677 = vector.extract_strided_slice %673 {offsets = [0, 96], sizes = [1, 32], strides = [1, 1]} : vector<1x128xf32> to vector<1x32xf32>
    %678 = vector.extract_strided_slice %674 {offsets = [0, 64], sizes = [1, 32], strides = [1, 1]} : vector<1x128xf32> to vector<1x32xf32>
    %679 = arith.mulf %676, %663 : vector<1x32xf32>
    %680 = arith.mulf %675, %678 : vector<1x32xf32>
    %681 = arith.addf %679, %680 : vector<1x32xf32>
    %682 = math.tanh %681 : vector<1x32xf32>
    %683 = arith.mulf %677, %682 : vector<1x32xf32>
    %c28 = arith.constant 28 : index
    %c0_125 = arith.constant 0 : index
    %684 = vector.load %arg10[%c28, %c0_125] : memref<30x32xf32, #tpu.memory_space<vmem>>, vector<1x32xf32>
    tpu.vector_store %arg10[%c28, %c0_125], %683 {strides = array<i32>} : memref<30x32xf32, #tpu.memory_space<vmem>>, vector<1x32xf32>,
    %cst_126 = arith.constant dense<0.000000e+00> : vector<1x128xf32>
    %685 = tpu.matmul %683, %160, %cst_126 {dimension_numbers = #tpu.dot_dimension_numbers<[1], [0], [0], [1], [0, 0, 1, 1], [], []>} : vector<1x32xf32>, vector<32x128xf32>, vector<1x128xf32> -> vector<1x128xf32>
    %686 = arith.addf %685, %162 : vector<1x128xf32>
    %687 = arith.negf %686 : vector<1x128xf32>
    %688 = math.exp %687 : vector<1x128xf32>
    %cst_127 = arith.constant 1.000000e+00 : f32
    %689 = vector.broadcast %cst_127 : f32 to vector<1x128xf32>
    %690 = arith.addf %689, %688 : vector<1x128xf32>
    %691 = arith.divf %689, %690 : vector<1x128xf32>
    %692 = math.tanh %686 : vector<1x128xf32>
    %693 = vector.extract_strided_slice %691 {offsets = [0, 0], sizes = [1, 32], strides = [1, 1]} : vector<1x128xf32> to vector<1x32xf32>
    %694 = vector.extract_strided_slice %691 {offsets = [0, 32], sizes = [1, 32], strides = [1, 1]} : vector<1x128xf32> to vector<1x32xf32>
    %695 = vector.extract_strided_slice %691 {offsets = [0, 96], sizes = [1, 32], strides = [1, 1]} : vector<1x128xf32> to vector<1x32xf32>
    %696 = vector.extract_strided_slice %692 {offsets = [0, 64], sizes = [1, 32], strides = [1, 1]} : vector<1x128xf32> to vector<1x32xf32>
    %697 = arith.mulf %694, %681 : vector<1x32xf32>
    %698 = arith.mulf %693, %696 : vector<1x32xf32>
    %699 = arith.addf %697, %698 : vector<1x32xf32>
    %700 = math.tanh %699 : vector<1x32xf32>
    %701 = arith.mulf %695, %700 : vector<1x32xf32>
    %c29 = arith.constant 29 : index
    %c0_128 = arith.constant 0 : index
    %702 = vector.load %arg10[%c29, %c0_128] : memref<30x32xf32, #tpu.memory_space<vmem>>, vector<1x32xf32>
    tpu.vector_store %arg10[%c29, %c0_128], %701 {strides = array<i32>} : memref<30x32xf32, #tpu.memory_space<vmem>>, vector<1x32xf32>,
    %c0_129 = arith.constant 0 : index
    %c0_130 = arith.constant 0 : index
    %703 = vector.load %arg10[%c0_129, %c0_130] : memref<30x32xf32, #tpu.memory_space<vmem>>, vector<30x32xf32>
    %cst_131 = arith.constant dense<0.000000e+00> : vector<30x4xf32>
    %704 = tpu.matmul %703, %4, %cst_131 {dimension_numbers = #tpu.dot_dimension_numbers<[1], [0], [0], [1], [0, 0, 1, 1], [], []>} : vector<30x32xf32>, vector<32x4xf32>, vector<30x4xf32> -> vector<30x4xf32>
    %705 = vector.broadcast %5 : vector<1x4xf32> to vector<30x4xf32>
    %706 = arith.addf %704, %705 : vector<30x4xf32>
    %c0_132 = arith.constant 0 : index
    %c0_133 = arith.constant 0 : index
    %707 = vector.load %arg9[%c0_132, %c0_133] : memref<30x4xf32, #tpu.memory_space<vmem>>, vector<30x4xf32>
    tpu.vector_store %arg9[%c0_132, %c0_133], %706 {strides = array<i32>} : memref<30x4xf32, #tpu.memory_space<vmem>>, vector<30x4xf32>,
    return
  }
}

</mosaic_0001>

<llo_original>
// kernel: tpu_custom_call.1
$region0: #{tpu_custom_call.1}
  #allocation0 [shape = 'u32[]', space=smem, size = 0x4, offset = 0x4, fixed_abs, tag = 'smem constant byte address 0x4 - core index']
  #allocation1 [shape = 'u32[144,128]{1,0:T(1,128)}', space=vmem, size = 0x12000, scoped, tag = 'internal scratch']
  #allocation2 [shape = 'f32[30,32]{1,0:T(8,128)}', space=vmem, size = 0x4000, scoped, tag = 'scratch operand']
  %s0 = inlined_call_operand.hbm [shape: f32[8,8], index: 0, kind: input, shape index: {}]
  %s1 = inlined_call_operand.hbm [shape: f32[8,128], index: 1, kind: input, shape index: {}]
  %s2 = inlined_call_operand.vmem [shape: f32[32,128], index: 2, kind: input, shape index: {}]
  %s3 = inlined_call_operand.vmem [shape: f32[1,128], index: 3, kind: input, shape index: {}]
  %s4 = inlined_call_operand.vmem [shape: f32[4,128], index: 4, kind: input, shape index: {}]
  %s5 = inlined_call_operand.hbm [shape: f32[32,128], index: 5, kind: input, shape index: {}]
  %s6 = inlined_call_operand.vmem [shape: f32[1,128], index: 6, kind: input, shape index: {}]
  %s7 = inlined_call_operand.vmem [shape: f32[32,4], index: 7, kind: input, shape index: {}]
  %s8 = inlined_call_operand.vmem [shape: f32[1,4], index: 8, kind: input, shape index: {}]
  %s9 = inlined_call_operand.vmem [shape: f32[30,4], index: 9, kind: output, shape index: {}]
  %s10 = sld [smem:[#allocation0]]
  $region58: #{tpu_custom_call.1} parent=0
    _
  %s12 = ssub.s32 1, %s10
  %s13 = scalar_select 0, %s12, %s10
  $region1: #{tpu_custom_call.1} parent=0
    #allocation3 [shape = 'u8[4096]{0}', space=vmem, size = 0x1000, scoped, tag = 'input window, operand 0, single buffered']
    #allocation4 [shape = 's32[1]{0}', space=sflag, size = 0x4, scoped, tag = 'scoped memory for tpu_custom_call.1']
    #allocation5 [shape = 'u8[4096]{0}', space=vmem, size = 0x1000, scoped, tag = 'input window, operand 1, single buffered']
    #allocation6 [shape = 's32[1]{0}', space=sflag, size = 0x4, scoped, tag = 'scoped memory for tpu_custom_call.1']
    #allocation7 [shape = 'u8[16384]{0}', space=vmem, size = 0x4000, scoped, tag = 'input window, operand 5, single buffered']
    %14 = vsyncpa [#allocation4], 0
    %15 = vsyncpa [#allocation6], 0
    // Predicated region
    $region2: #{tpu_custom_call.1} parent=1 // pred_check
      _
    $region3: #{tpu_custom_call.1} parent=1 // pred_check_branch
      %17 = sbr.rel (0) target = $region5
    $region4: #{tpu_custom_call.1} parent=1 // pred_region
      %s19 = ssub.s32 128, 128
      %20 = vsyncadd [#allocation4], %s19
      %s22 = sshll.u32 [#allocation3], 4
      %s23 = int_to_ptr.vmem [resolvable:$true] %s22
      %25 = dma.hbm_to_vmem [thread:$0]  %s0, 128, %s23, [#allocation4]
    $region5: #{tpu_custom_call.1} parent=1 // pred_fallthru
      _
    // Predicated region
    $region6: #{tpu_custom_call.1} parent=1 // pred_check
      _
    $region7: #{tpu_custom_call.1} parent=1 // pred_check_branch
      %27 = sbr.rel (0) target = $region9
    $region8: #{tpu_custom_call.1} parent=1 // pred_region
      %s29 = ssub.s32 128, 128
      %30 = vsyncadd [#allocation6], %s29
      %s32 = sshll.u32 [#allocation5], 4
      %s33 = int_to_ptr.vmem [resolvable:$true] %s32
      %35 = dma.hbm_to_vmem [thread:$0]  %s1, 128, %s33, [#allocation6]
    $region9: #{tpu_custom_call.1} parent=1 // pred_fallthru
      _
    // Predicated region
    $region10: #{tpu_custom_call.1} parent=1 // pred_check
      _
    $region11: #{tpu_custom_call.1} parent=1 // pred_check_branch
      %37 = sbr.rel (0) target = $region13
    $region12: #{tpu_custom_call.1} parent=1 // pred_region
      _
    $region13: #{tpu_custom_call.1} parent=1 // pred_fallthru
      _
    // Predicated region
    $region14: #{tpu_custom_call.1} parent=1 // pred_check
      _
    $region15: #{tpu_custom_call.1} parent=1 // pred_check_branch
      %39 = sbr.rel (0) target = $region17
    $region16: #{tpu_custom_call.1} parent=1 // pred_region
      _
    $region17: #{tpu_custom_call.1} parent=1 // pred_fallthru
      _
    // Predicated region
    $region18: #{tpu_custom_call.1} parent=1 // pred_check
      _
    $region19: #{tpu_custom_call.1} parent=1 // pred_check_branch
      %41 = sbr.rel (0) target = $region21
    $region20: #{tpu_custom_call.1} parent=1 // pred_region
      _
    $region21: #{tpu_custom_call.1} parent=1 // pred_fallthru
      _
    // Predicated region
    $region22: #{tpu_custom_call.1} parent=1 // pred_check
      _
    $region23: #{tpu_custom_call.1} parent=1 // pred_check_branch
      %43 = sbr.rel (0) target = $region25
    $region24: #{tpu_custom_call.1} parent=1 // pred_region
      %s45 = ssub.s32 512, 512
      %46 = vsyncadd [#allocation6], %s45
      %s47 = sshll.u32 [#allocation7], 4
      %s48 = int_to_ptr.vmem [resolvable:$true] %s47
      %53 = dma.hbm_to_vmem [thread:$0]  %s5, 512, %s48, [#allocation6], 128, 128, 8
    $region25: #{tpu_custom_call.1} parent=1 // pred_fallthru
      _
    // Predicated region
    $region26: #{tpu_custom_call.1} parent=1 // pred_check
      _
    $region27: #{tpu_custom_call.1} parent=1 // pred_check_branch
      %55 = sbr.rel (0) target = $region29
    $region28: #{tpu_custom_call.1} parent=1 // pred_region
      _
    $region29: #{tpu_custom_call.1} parent=1 // pred_fallthru
      _
    // Predicated region
    $region30: #{tpu_custom_call.1} parent=1 // pred_check
      _
    $region31: #{tpu_custom_call.1} parent=1 // pred_check_branch
      %57 = sbr.rel (0) target = $region33
    $region32: #{tpu_custom_call.1} parent=1 // pred_region
      _
    $region33: #{tpu_custom_call.1} parent=1 // pred_fallthru
      _
    // Predicated region
    $region34: #{tpu_custom_call.1} parent=1 // pred_check
      _
    $region35: #{tpu_custom_call.1} parent=1 // pred_check_branch
      %59 = sbr.rel (0) target = $region37
    $region36: #{tpu_custom_call.1} parent=1 // pred_region
      _
    $region37: #{tpu_custom_call.1} parent=1 // pred_fallthru
      _
    // Predicated region
    $region38: #{tpu_custom_call.1} parent=1 // pred_check
      _
    $region39: #{tpu_custom_call.1} parent=1 // pred_check_branch
      %61 = sbr.rel (0) target = $region41
    $region40: #{tpu_custom_call.1} parent=1 // pred_region
      %62 = dma.done [#allocation4], 128
    $region41: #{tpu_custom_call.1} parent=1 // pred_fallthru
      _
    // Predicated region
    $region42: #{tpu_custom_call.1} parent=1 // pred_check
      _
    $region43: #{tpu_custom_call.1} parent=1 // pred_check_branch
      %64 = sbr.rel (0) target = $region45
    $region44: #{tpu_custom_call.1} parent=1 // pred_region
      %65 = dma.done [#allocation6], 128
    $region45: #{tpu_custom_call.1} parent=1 // pred_fallthru
      _
    // Predicated region
    $region46: #{tpu_custom_call.1} parent=1 // pred_check
      _
    $region47: #{tpu_custom_call.1} parent=1 // pred_check_branch
      %67 = sbr.rel (0) target = $region49
    $region48: #{tpu_custom_call.1} parent=1 // pred_region
      %68 = dma.done [#allocation6], 512
    $region49: #{tpu_custom_call.1} parent=1 // pred_fallthru
      _
    %v69 = vld [vmem:[%s2] sm:$0xff]
    %v70 = vld [vmem:[%s2 + $0x8] sm:$0xff]
    %v71 = vld [vmem:[%s2 + $0x10] sm:$0xff]
    %v72 = vld [vmem:[%s2 + $0x18] sm:$0xff]
    %v73 = vld [vmem:[%s4] sm:$0xf]
    %v74 = vld [vmem:[#allocation7] sm:$0xff]
    %v75 = vld [vmem:[#allocation7 + $0x8] sm:$0xff]
    %v76 = vld [vmem:[#allocation7 + $0x10] sm:$0xff]
    %v77 = vld [vmem:[#allocation7 + $0x18] sm:$0xff]
    %v78 = vld [vmem:[%s6] sm:$0x1]
    %v79 = vld [vmem:[%s7] sm:$0xff]
    %v80 = vld [vmem:[%s7 + $0x8] sm:$0xff]
    %v81 = vld [vmem:[%s7 + $0x10] sm:$0xff]
    %v82 = vld [vmem:[%s7 + $0x18] sm:$0xff]
    %v83 = vld [vmem:[%s8] sm:$0x1]
    %v84 = vld [vmem:[#allocation3] sm:$0xff]
    %v85 = vld [vmem:[#allocation5] sm:$0xff]
    %v86 = vld [vmem:[%s3] sm:$0x1]
    %v88 = vlaneseq
    %v89 = vshrl.u32 %v88, 7
    %v90 = vsub.s32 0, %v89
    %v91 = vrot.slane %v86, %v90
    %vm93 = vcmask 64512
    %v95 = vsel %vm93, %v84, 0
    %97 = vmatprep.subr.mxu0 0.0
    %98 = vmatpush1.msra.mxu0 0.0
    %99 = vmatprep.subr.mxu0 0.0
    %100 = vmatpush1.msra.mxu0 0.0
    %101 = vmatprep.subr.mxu0 0.0
    %102 = vmatpush1.msra.mxu0 0.0
    %103 = vmatprep.subr.mxu0 0.0
    %104 = vmatpush1.msra.mxu0 0.0
    %105 = vmatprep.subr.mxu0 0.0
    %106 = vmatpush1.msra.mxu0 0.0
    %107 = vmatprep.subr.mxu0 0.0
    %108 = vmatpush1.msra.mxu0 0.0
    %109 = vmatprep.subr.mxu0 0.0
    %110 = vmatpush1.msra.mxu0 0.0
    %111 = vmatprep.subr.mxu0 0.0
    %112 = vmatpush1.msra.mxu0 0.0
    %113 = vmatprep.subr.mxu0 0.0
    %114 = vmatpush1.msra.mxu0 0.0
    %115 = vmatprep.subr.mxu0 0.0
    %116 = vmatpush1.msra.mxu0 0.0
    %117 = vmatprep.subr.mxu0 0.0
    %118 = vmatpush1.msra.mxu0 0.0
    %119 = vmatprep.subr.mxu0 0.0
    %120 = vmatpush1.msra.mxu0 0.0
    %121 = vmatprep.subr.mxu0 0.0
    %122 = vmatpush1.msra.mxu0 0.0
    %123 = vmatprep.subr.mxu0 0.0
    %124 = vmatpush1.msra.mxu0 0.0
    %125 = vmatprep.subr.mxu0 0.0
    %126 = vmatpush1.msra.mxu0 0.0
    %127 = vmatprep.subr.mxu0 0.0
    %128 = vmatpush1.msra.mxu0 %v85
    %129 = vmatprep.subr.mxu0 0.0
    %130 = vmatpush2.msra.mxu0 0.0
    %131 = vmatprep.subr.mxu0 0.0
    %132 = vmatpush2.msra.mxu0 0.0
    %133 = vmatprep.subr.mxu0 0.0
    %134 = vmatpush2.msra.mxu0 0.0
    %135 = vmatprep.subr.mxu0 0.0
    %136 = vmatpush2.msra.mxu0 0.0
    %137 = vmatprep.subr.mxu0 0.0
    %138 = vmatpush2.msra.mxu0 0.0
    %139 = vmatprep.subr.mxu0 0.0
    %140 = vmatpush2.msra.mxu0 0.0
    %141 = vmatprep.subr.mxu0 0.0
    %142 = vmatpush2.msra.mxu0 0.0
    %143 = vmatprep.subr.mxu0 0.0
    %144 = vmatpush2.msra.mxu0 0.0
    %145 = vmatprep.subr.mxu0 0.0
    %146 = vmatpush2.msra.mxu0 0.0
    %147 = vmatprep.subr.mxu0 0.0
    %148 = vmatpush2.msra.mxu0 0.0
    %149 = vmatprep.subr.mxu0 0.0
    %150 = vmatpush2.msra.mxu0 0.0
    %151 = vmatprep.subr.mxu0 0.0
    %152 = vmatpush2.msra.mxu0 0.0
    %153 = vmatprep.subr.mxu0 0.0
    %154 = vmatpush2.msra.mxu0 0.0
    %155 = vmatprep.subr.mxu0 0.0
    %156 = vmatpush2.msra.mxu0 0.0
    %157 = vmatprep.subr.mxu0 0.0
    %158 = vmatpush2.msra.mxu0 0.0
    %159 = vmatprep.subr.mxu0 0.0
    %160 = vmatpush2.msra.mxu0 0.0
    %161 = vmatprep.mubr.f32.mxu0 0.0
    %162 = vmatmul.mubr.f32.gmra.mxu0 %v95
    %v163 = vpop.f32.mrf.mxu0
    %v164 = vadd.f32 %v91, %v163
    %v165 = vpop.f32.mrf.mxu0
    %166 = vdwg.mxu0
    %vm167 = vcmask 261120
    %v169 = vsel %vm167, 0.0, 0
    %171 = vmatprep.subr.mxu0 0.0
    %172 = vmatpush1.msra.mxu0 0.0
    %173 = vmatprep.subr.mxu0 0.0
    %174 = vmatpush1.msra.mxu0 0.0
    %175 = vmatprep.subr.mxu0 0.0
    %176 = vmatpush1.msra.mxu0 0.0
    %177 = vmatprep.subr.mxu0 0.0
    %178 = vmatpush1.msra.mxu0 0.0
    %179 = vmatprep.subr.mxu0 0.0
    %180 = vmatpush1.msra.mxu0 0.0
    %181 = vmatprep.subr.mxu0 0.0
    %182 = vmatpush1.msra.mxu0 0.0
    %183 = vmatprep.subr.mxu0 0.0
    %184 = vmatpush1.msra.mxu0 0.0
    %185 = vmatprep.subr.mxu0 0.0
    %186 = vmatpush1.msra.mxu0 0.0
    %187 = vmatprep.subr.mxu0 0.0
    %188 = vmatpush1.msra.mxu0 0.0
    %189 = vmatprep.subr.mxu0 0.0
    %190 = vmatpush1.msra.mxu0 0.0
    %191 = vmatprep.subr.mxu0 0.0
    %192 = vmatpush1.msra.mxu0 0.0
    %193 = vmatprep.subr.mxu0 0.0
    %194 = vmatpush1.msra.mxu0 0.0
    %195 = vmatprep.subr.mxu0 0.0
    %196 = vmatpush1.msra.mxu0 %v72
    %197 = vmatprep.subr.mxu0 0.0
    %198 = vmatpush1.msra.mxu0 %v71
    %199 = vmatprep.subr.mxu0 0.0
    %200 = vmatpush1.msra.mxu0 %v70
    %201 = vmatprep.subr.mxu0 0.0
    %202 = vmatpush1.msra.mxu0 %v69
    %203 = vmatprep.subr.mxu0 0.0
    %204 = vmatpush2.msra.mxu0 0.0
    %205 = vmatprep.subr.mxu0 0.0
    %206 = vmatpush2.msra.mxu0 0.0
    %207 = vmatprep.subr.mxu0 0.0
    %208 = vmatpush2.msra.mxu0 0.0
    %209 = vmatprep.subr.mxu0 0.0
    %210 = vmatpush2.msra.mxu0 0.0
    %211 = vmatprep.subr.mxu0 0.0
    %212 = vmatpush2.msra.mxu0 0.0
    %213 = vmatprep.subr.mxu0 0.0
    %214 = vmatpush2.msra.mxu0 0.0
    %215 = vmatprep.subr.mxu0 0.0
    %216 = vmatpush2.msra.mxu0 0.0
    %217 = vmatprep.subr.mxu0 0.0
    %218 = vmatpush2.msra.mxu0 0.0
    %219 = vmatprep.subr.mxu0 0.0
    %220 = vmatpush2.msra.mxu0 0.0
    %221 = vmatprep.subr.mxu0 0.0
    %222 = vmatpush2.msra.mxu0 0.0
    %223 = vmatprep.subr.mxu0 0.0
    %224 = vmatpush2.msra.mxu0 0.0
    %225 = vmatprep.subr.mxu0 0.0
    %226 = vmatpush2.msra.mxu0 0.0
    %227 = vmatprep.subr.mxu0 0.0
    %228 = vmatpush2.msra.mxu0 0.0
    %229 = vmatprep.subr.mxu0 0.0
    %230 = vmatpush2.msra.mxu0 0.0
    %231 = vmatprep.subr.mxu0 0.0
    %232 = vmatpush2.msra.mxu0 0.0
    %233 = vmatprep.subr.mxu0 0.0
    %234 = vmatpush2.msra.mxu0 0.0
    %235 = vmatprep.mubr.f32.mxu0 0.0
    %236 = vmatmul.mubr.f32.gmra.mxu0 %v169
    %v237 = vpop.f32.mrf.mxu0
    %v238 = vadd.f32 0.0, %v237
    %v239 = vpop.f32.mrf.mxu0
    %240 = vdwg.mxu0
    %v241 = vadd.f32 %v164, %v238
    %v242 = vxor.u32 %v241, 2147483648
    %v243 = vmul.f32 %v242, 1.442695
    %v244 = vpow.pop %v243
    %v245 = vadd.f32 %v244, 1.0
    %v246 = vrcp.pop %v245
    %v247 = vmul.f32 1.0, %v246
    %v248 = vtanh.pop %v241
    %v249 = vmul.f32 %v247, 0.0
    %251 = vrot.lane.b32.xlu0 %v248, 64
    %v252 = vpop.permute.xlu0 %251
    %v254 = vmul.f32 %v247, %v252
    %256 = vrot.lane.b32.xlu0 %v254, 32
    %v257 = vpop.permute.xlu0 %256
    %v259 = vadd.f32 %v249, %v257
    %v260 = vtanh.pop %v259
    %262 = vrot.lane.b32.xlu0 %v260, 64
    %v263 = vpop.permute.xlu0 %262
    %v265 = vmul.f32 %v247, %v263
    %267 = vrot.lane.b32.xlu0 %v265, 32
    %v268 = vpop.permute.xlu0 %267
    %v269 = vsel %vm167, %v268, 0
    %271 = vmatprep.subr.mxu0 0.0
    %272 = vmatpush1.msra.mxu0 0.0
    %273 = vmatprep.subr.mxu0 0.0
    %274 = vmatpush1.msra.mxu0 0.0
    %275 = vmatprep.subr.mxu0 0.0
    %276 = vmatpush1.msra.mxu0 0.0
    %277 = vmatprep.subr.mxu0 0.0
    %278 = vmatpush1.msra.mxu0 0.0
    %279 = vmatprep.subr.mxu0 0.0
    %280 = vmatpush1.msra.mxu0 0.0
    %281 = vmatprep.subr.mxu0 0.0
    %282 = vmatpush1.msra.mxu0 0.0
    %283 = vmatprep.subr.mxu0 0.0
    %284 = vmatpush1.msra.mxu0 0.0
    %285 = vmatprep.subr.mxu0 0.0
    %286 = vmatpush1.msra.mxu0 0.0
    %287 = vmatprep.subr.mxu0 0.0
    %288 = vmatpush1.msra.mxu0 0.0
    %289 = vmatprep.subr.mxu0 0.0
    %290 = vmatpush1.msra.mxu0 0.0
    %291 = vmatprep.subr.mxu0 0.0
    %292 = vmatpush1.msra.mxu0 0.0
    %293 = vmatprep.subr.mxu0 0.0
    %294 = vmatpush1.msra.mxu0 0.0
    %295 = vmatprep.subr.mxu0 0.0
    %296 = vmatpush1.msra.mxu0 %v72
    %297 = vmatprep.subr.mxu0 0.0
    %298 = vmatpush1.msra.mxu0 %v71
    %299 = vmatprep.subr.mxu0 0.0
    %300 = vmatpush1.msra.mxu0 %v70
    %301 = vmatprep.subr.mxu0 0.0
    %302 = vmatpush1.msra.mxu0 %v69
    %303 = vmatprep.subr.mxu0 0.0
    %304 = vmatpush2.msra.mxu0 0.0
    %305 = vmatprep.subr.mxu0 0.0
    %306 = vmatpush2.msra.mxu0 0.0
    %307 = vmatprep.subr.mxu0 0.0
    %308 = vmatpush2.msra.mxu0 0.0
    %309 = vmatprep.subr.mxu0 0.0
    %310 = vmatpush2.msra.mxu0 0.0
    %311 = vmatprep.subr.mxu0 0.0
    %312 = vmatpush2.msra.mxu0 0.0
    %313 = vmatprep.subr.mxu0 0.0
    %314 = vmatpush2.msra.mxu0 0.0
    %315 = vmatprep.subr.mxu0 0.0
    %316 = vmatpush2.msra.mxu0 0.0
    %317 = vmatprep.subr.mxu0 0.0
    %318 = vmatpush2.msra.mxu0 0.0
    %319 = vmatprep.subr.mxu0 0.0
    %320 = vmatpush2.msra.mxu0 0.0
    %321 = vmatprep.subr.mxu0 0.0
    %322 = vmatpush2.msra.mxu0 0.0
    %323 = vmatprep.subr.mxu0 0.0
    %324 = vmatpush2.msra.mxu0 0.0
    %325 = vmatprep.subr.mxu0 0.0
    %326 = vmatpush2.msra.mxu0 0.0
    %327 = vmatprep.subr.mxu0 0.0
    %328 = vmatpush2.msra.mxu0 0.0
    %329 = vmatprep.subr.mxu0 0.0
    %330 = vmatpush2.msra.mxu0 0.0
    %331 = vmatprep.subr.mxu0 0.0
    %332 = vmatpush2.msra.mxu0 0.0
    %333 = vmatprep.subr.mxu0 0.0
    %334 = vmatpush2.msra.mxu0 0.0
    %335 = vmatprep.mubr.f32.mxu0 0.0
    %336 = vmatmul.mubr.f32.gmra.mxu0 %v269
    %v337 = vpop.f32.mrf.mxu0
    %v338 = vadd.f32 0.0, %v337
    %v339 = vpop.f32.mrf.mxu0
    %340 = vdwg.mxu0
    %v342 = vrot.slane %v338, 7
    %v344 = vadd.f32 %v164, %v342
    %v345 = vxor.u32 %v344, 2147483648
    %v346 = vmul.f32 %v345, 1.442695
    %v347 = vpow.pop %v346
    %v348 = vadd.f32 %v347, 1.0
    %v349 = vrcp.pop %v348
    %v350 = vmul.f32 1.0, %v349
    %v351 = vtanh.pop %v344
    %v353 = vrot.slane %v259, 7
    %v355 = vmul.f32 %v350, %v353
    %357 = vrot.lane.b32.xlu0 %v351, 64
    %v358 = vpop.permute.xlu0 %357
    %v360 = vmul.f32 %v350, %v358
    %362 = vrot.lane.b32.xlu0 %v360, 32
    %v363 = vpop.permute.xlu0 %362
    %v365 = vadd.f32 %v355, %v363
    %v366 = vtanh.pop %v365
    %368 = vrot.lane.b32.xlu0 %v366, 64
    %v369 = vpop.permute.xlu0 %368
    %v371 = vmul.f32 %v350, %v369
    %v373 = vrot.slane %v371, 1
    %374 = vrot.lane.b32.xlu0 %v373, 32
    %v375 = vpop.permute.xlu0 %374
    %v376 = vsel %vm167, %v375, 0
    %378 = vmatprep.subr.mxu0 0.0
    %379 = vmatpush1.msra.mxu0 0.0
    %380 = vmatprep.subr.mxu0 0.0
    %381 = vmatpush1.msra.mxu0 0.0
    %382 = vmatprep.subr.mxu0 0.0
    %383 = vmatpush1.msra.mxu0 0.0
    %384 = vmatprep.subr.mxu0 0.0
    %385 = vmatpush1.msra.mxu0 0.0
    %386 = vmatprep.subr.mxu0 0.0
    %387 = vmatpush1.msra.mxu0 0.0
    %388 = vmatprep.subr.mxu0 0.0
    %389 = vmatpush1.msra.mxu0 0.0
    %390 = vmatprep.subr.mxu0 0.0
    %391 = vmatpush1.msra.mxu0 0.0
    %392 = vmatprep.subr.mxu0 0.0
    %393 = vmatpush1.msra.mxu0 0.0
    %394 = vmatprep.subr.mxu0 0.0
    %395 = vmatpush1.msra.mxu0 0.0
    %396 = vmatprep.subr.mxu0 0.0
    %397 = vmatpush1.msra.mxu0 0.0
    %398 = vmatprep.subr.mxu0 0.0
    %399 = vmatpush1.msra.mxu0 0.0
    %400 = vmatprep.subr.mxu0 0.0
    %401 = vmatpush1.msra.mxu0 0.0
    %402 = vmatprep.subr.mxu0 0.0
    %403 = vmatpush1.msra.mxu0 %v72
    %404 = vmatprep.subr.mxu0 0.0
    %405 = vmatpush1.msra.mxu0 %v71
    %406 = vmatprep.subr.mxu0 0.0
    %407 = vmatpush1.msra.mxu0 %v70
    %408 = vmatprep.subr.mxu0 0.0
    %409 = vmatpush1.msra.mxu0 %v69
    %410 = vmatprep.subr.mxu0 0.0
    %411 = vmatpush2.msra.mxu0 0.0
    %412 = vmatprep.subr.mxu0 0.0
    %413 = vmatpush2.msra.mxu0 0.0
    %414 = vmatprep.subr.mxu0 0.0
    %415 = vmatpush2.msra.mxu0 0.0
    %416 = vmatprep.subr.mxu0 0.0
    %417 = vmatpush2.msra.mxu0 0.0
    %418 = vmatprep.subr.mxu0 0.0
    %419 = vmatpush2.msra.mxu0 0.0
    %420 = vmatprep.subr.mxu0 0.0
    %421 = vmatpush2.msra.mxu0 0.0
    %422 = vmatprep.subr.mxu0 0.0
    %423 = vmatpush2.msra.mxu0 0.0
    %424 = vmatprep.subr.mxu0 0.0
    %425 = vmatpush2.msra.mxu0 0.0
    %426 = vmatprep.subr.mxu0 0.0
    %427 = vmatpush2.msra.mxu0 0.0
    %428 = vmatprep.subr.mxu0 0.0
    %429 = vmatpush2.msra.mxu0 0.0
    %430 = vmatprep.subr.mxu0 0.0
    %431 = vmatpush2.msra.mxu0 0.0
    %432 = vmatprep.subr.mxu0 0.0
    %433 = vmatpush2.msra.mxu0 0.0
    %434 = vmatprep.subr.mxu0 0.0
    %435 = vmatpush2.msra.mxu0 0.0
    %436 = vmatprep.subr.mxu0 0.0
    %437 = vmatpush2.msra.mxu0 0.0
    %438 = vmatprep.subr.mxu0 0.0
    %439 = vmatpush2.msra.mxu0 0.0
    %440 = vmatprep.subr.mxu0 0.0
    %441 = vmatpush2.msra.mxu0 0.0
    %442 = vmatprep.mubr.f32.mxu0 0.0
    %443 = vmatmul.mubr.f32.gmra.mxu0 %v376
    %v444 = vpop.f32.mrf.mxu0
    %v445 = vadd.f32 0.0, %v444
    %v446 = vpop.f32.mrf.mxu0
    %447 = vdwg.mxu0
    %v449 = vrot.slane %v445, 6
    %v451 = vadd.f32 %v164, %v449
    %v452 = vxor.u32 %v451, 2147483648
    %v453 = vmul.f32 %v452, 1.442695
    %v454 = vpow.pop %v453
    %v455 = vadd.f32 %v454, 1.0
    %v456 = vrcp.pop %v455
    %v457 = vmul.f32 1.0, %v456
    %v458 = vtanh.pop %v451
    %v460 = vrot.slane %v365, 7
    %v462 = vmul.f32 %v457, %v460
    %464 = vrot.lane.b32.xlu0 %v458, 64
    %v465 = vpop.permute.xlu0 %464
    %v467 = vmul.f32 %v457, %v465
    %469 = vrot.lane.b32.xlu0 %v467, 32
    %v470 = vpop.permute.xlu0 %469
    %v472 = vadd.f32 %v462, %v470
    %v473 = vtanh.pop %v472
    %475 = vrot.lane.b32.xlu0 %v473, 64
    %v476 = vpop.permute.xlu0 %475
    %v478 = vmul.f32 %v457, %v476
    %v480 = vrot.slane %v478, 2
    %481 = vrot.lane.b32.xlu0 %v480, 32
    %v482 = vpop.permute.xlu0 %481
    %v483 = vsel %vm167, %v482, 0
    %485 = vmatprep.subr.mxu0 0.0
    %486 = vmatpush1.msra.mxu0 0.0
    %487 = vmatprep.subr.mxu0 0.0
    %488 = vmatpush1.msra.mxu0 0.0
    %489 = vmatprep.subr.mxu0 0.0
    %490 = vmatpush1.msra.mxu0 0.0
    %491 = vmatprep.subr.mxu0 0.0
    %492 = vmatpush1.msra.mxu0 0.0
    %493 = vmatprep.subr.mxu0 0.0
    %494 = vmatpush1.msra.mxu0 0.0
    %495 = vmatprep.subr.mxu0 0.0
    %496 = vmatpush1.msra.mxu0 0.0
    %497 = vmatprep.subr.mxu0 0.0
    %498 = vmatpush1.msra.mxu0 0.0
    %499 = vmatprep.subr.mxu0 0.0
    %500 = vmatpush1.msra.mxu0 0.0
    %501 = vmatprep.subr.mxu0 0.0
    %502 = vmatpush1.msra.mxu0 0.0
    %503 = vmatprep.subr.mxu0 0.0
    %504 = vmatpush1.msra.mxu0 0.0
    %505 = vmatprep.subr.mxu0 0.0
    %506 = vmatpush1.msra.mxu0 0.0
    %507 = vmatprep.subr.mxu0 0.0
    %508 = vmatpush1.msra.mxu0 0.0
    %509 = vmatprep.subr.mxu0 0.0
    %510 = vmatpush1.msra.mxu0 %v72
    %511 = vmatprep.subr.mxu0 0.0
    %512 = vmatpush1.msra.mxu0 %v71
    %513 = vmatprep.subr.mxu0 0.0
    %514 = vmatpush1.msra.mxu0 %v70
    %515 = vmatprep.subr.mxu0 0.0
    %516 = vmatpush1.msra.mxu0 %v69
    %517 = vmatprep.subr.mxu0 0.0
    %518 = vmatpush2.msra.mxu0 0.0
    %519 = vmatprep.subr.mxu0 0.0
    %520 = vmatpush2.msra.mxu0 0.0
    %521 = vmatprep.subr.mxu0 0.0
    %522 = vmatpush2.msra.mxu0 0.0
    %523 = vmatprep.subr.mxu0 0.0
    %524 = vmatpush2.msra.mxu0 0.0
    %525 = vmatprep.subr.mxu0 0.0
    %526 = vmatpush2.msra.mxu0 0.0
    %527 = vmatprep.subr.mxu0 0.0
    %528 = vmatpush2.msra.mxu0 0.0
    %529 = vmatprep.subr.mxu0 0.0
    %530 = vmatpush2.msra.mxu0 0.0
    %531 = vmatprep.subr.mxu0 0.0
    %532 = vmatpush2.msra.mxu0 0.0
    %533 = vmatprep.subr.mxu0 0.0
    %534 = vmatpush2.msra.mxu0 0.0
    %535 = vmatprep.subr.mxu0 0.0
    %536 = vmatpush2.msra.mxu0 0.0
    %537 = vmatprep.subr.mxu0 0.0
    %538 = vmatpush2.msra.mxu0 0.0
    %539 = vmatprep.subr.mxu0 0.0
    %540 = vmatpush2.msra.mxu0 0.0
    %541 = vmatprep.subr.mxu0 0.0
    %542 = vmatpush2.msra.mxu0 0.0
    %543 = vmatprep.subr.mxu0 0.0
    %544 = vmatpush2.msra.mxu0 0.0
    %545 = vmatprep.subr.mxu0 0.0
    %546 = vmatpush2.msra.mxu0 0.0
    %547 = vmatprep.subr.mxu0 0.0
    %548 = vmatpush2.msra.mxu0 0.0
    %549 = vmatprep.mubr.f32.mxu0 0.0
    %550 = vmatmul.mubr.f32.gmra.mxu0 %v483
    %v551 = vpop.f32.mrf.mxu0
    %v552 = vadd.f32 0.0, %v551
    %v553 = vpop.f32.mrf.mxu0
    %554 = vdwg.mxu0
    %v556 = vrot.slane %v552, 5
    %v558 = vadd.f32 %v164, %v556
    %v559 = vxor.u32 %v558, 2147483648
    %v560 = vmul.f32 %v559, 1.442695
    %v561 = vpow.pop %v560
    %v562 = vadd.f32 %v561, 1.0
    %v563 = vrcp.pop %v562
    %v564 = vmul.f32 1.0, %v563
    %v565 = vtanh.pop %v558
    %v567 = vrot.slane %v472, 7
    %v569 = vmul.f32 %v564, %v567
    %571 = vrot.lane.b32.xlu0 %v565, 64
    %v572 = vpop.permute.xlu0 %571
    %v574 = vmul.f32 %v564, %v572
    %576 = vrot.lane.b32.xlu0 %v574, 32
    %v577 = vpop.permute.xlu0 %576
    %v579 = vadd.f32 %v569, %v577
    %v580 = vtanh.pop %v579
    %582 = vrot.lane.b32.xlu0 %v580, 64
    %v583 = vpop.permute.xlu0 %582
    %v585 = vmul.f32 %v564, %v583
    %v587 = vrot.slane %v585, 3
    %588 = vrot.lane.b32.xlu0 %v587, 32
    %v589 = vpop.permute.xlu0 %588
    %v590 = vsel %vm167, %v589, 0
    %592 = vmatprep.subr.mxu0 0.0
    %593 = vmatpush1.msra.mxu0 0.0
    %594 = vmatprep.subr.mxu0 0.0
    %595 = vmatpush1.msra.mxu0 0.0
    %596 = vmatprep.subr.mxu0 0.0
    %597 = vmatpush1.msra.mxu0 0.0
    %598 = vmatprep.subr.mxu0 0.0
    %599 = vmatpush1.msra.mxu0 0.0
    %600 = vmatprep.subr.mxu0 0.0
    %601 = vmatpush1.msra.mxu0 0.0
    %602 = vmatprep.subr.mxu0 0.0
    %603 = vmatpush1.msra.mxu0 0.0
    %604 = vmatprep.subr.mxu0 0.0
    %605 = vmatpush1.msra.mxu0 0.0
    %606 = vmatprep.subr.mxu0 0.0
    %607 = vmatpush1.msra.mxu0 0.0
    %608 = vmatprep.subr.mxu0 0.0
    %609 = vmatpush1.msra.mxu0 0.0
    %610 = vmatprep.subr.mxu0 0.0
    %611 = vmatpush1.msra.mxu0 0.0
    %612 = vmatprep.subr.mxu0 0.0
    %613 = vmatpush1.msra.mxu0 0.0
    %614 = vmatprep.subr.mxu0 0.0
    %615 = vmatpush1.msra.mxu0 0.0
    %616 = vmatprep.subr.mxu0 0.0
    %617 = vmatpush1.msra.mxu0 %v72
    %618 = vmatprep.subr.mxu0 0.0
    %619 = vmatpush1.msra.mxu0 %v71
    %620 = vmatprep.subr.mxu0 0.0
    %621 = vmatpush1.msra.mxu0 %v70
    %622 = vmatprep.subr.mxu0 0.0
    %623 = vmatpush1.msra.mxu0 %v69
    %624 = vmatprep.subr.mxu0 0.0
    %625 = vmatpush2.msra.mxu0 0.0
    %626 = vmatprep.subr.mxu0 0.0
    %627 = vmatpush2.msra.mxu0 0.0
    %628 = vmatprep.subr.mxu0 0.0
    %629 = vmatpush2.msra.mxu0 0.0
    %630 = vmatprep.subr.mxu0 0.0
    %631 = vmatpush2.msra.mxu0 0.0
    %632 = vmatprep.subr.mxu0 0.0
    %633 = vmatpush2.msra.mxu0 0.0
    %634 = vmatprep.subr.mxu0 0.0
    %635 = vmatpush2.msra.mxu0 0.0
    %636 = vmatprep.subr.mxu0 0.0
    %637 = vmatpush2.msra.mxu0 0.0
    %638 = vmatprep.subr.mxu0 0.0
    %639 = vmatpush2.msra.mxu0 0.0
    %640 = vmatprep.subr.mxu0 0.0
    %641 = vmatpush2.msra.mxu0 0.0
    %642 = vmatprep.subr.mxu0 0.0
    %643 = vmatpush2.msra.mxu0 0.0
    %644 = vmatprep.subr.mxu0 0.0
    %645 = vmatpush2.msra.mxu0 0.0
    %646 = vmatprep.subr.mxu0 0.0
    %647 = vmatpush2.msra.mxu0 0.0
    %648 = vmatprep.subr.mxu0 0.0
    %649 = vmatpush2.msra.mxu0 0.0
    %650 = vmatprep.subr.mxu0 0.0
    %651 = vmatpush2.msra.mxu0 0.0
    %652 = vmatprep.subr.mxu0 0.0
    %653 = vmatpush2.msra.mxu0 0.0
    %654 = vmatprep.subr.mxu0 0.0
    %655 = vmatpush2.msra.mxu0 0.0
    %656 = vmatprep.mubr.f32.mxu0 0.0
    %657 = vmatmul.mubr.f32.gmra.mxu0 %v590
    %v658 = vpop.f32.mrf.mxu0
    %v659 = vadd.f32 0.0, %v658
    %v660 = vpop.f32.mrf.mxu0
    %661 = vdwg.mxu0
    %v663 = vrot.slane %v659, 4
    %v665 = vadd.f32 %v164, %v663
    %v666 = vxor.u32 %v665, 2147483648
    %v667 = vmul.f32 %v666, 1.442695
    %v668 = vpow.pop %v667
    %v669 = vadd.f32 %v668, 1.0
    %v670 = vrcp.pop %v669
    %v671 = vmul.f32 1.0, %v670
    %v672 = vtanh.pop %v665
    %v674 = vrot.slane %v579, 7
    %v676 = vmul.f32 %v671, %v674
    %678 = vrot.lane.b32.xlu0 %v672, 64
    %v679 = vpop.permute.xlu0 %678
    %v681 = vmul.f32 %v671, %v679
    %683 = vrot.lane.b32.xlu0 %v681, 32
    %v684 = vpop.permute.xlu0 %683
    %v686 = vadd.f32 %v676, %v684
    %v687 = vtanh.pop %v686
    %689 = vrot.lane.b32.xlu0 %v687, 64
    %v690 = vpop.permute.xlu0 %689
    %v692 = vmul.f32 %v671, %v690
    %v694 = vrot.slane %v692, 4
    %695 = vrot.lane.b32.xlu0 %v694, 32
    %v696 = vpop.permute.xlu0 %695
    %v697 = vsel %vm167, %v696, 0
    %699 = vmatprep.subr.mxu0 0.0
    %700 = vmatpush1.msra.mxu0 0.0
    %701 = vmatprep.subr.mxu0 0.0
    %702 = vmatpush1.msra.mxu0 0.0
    %703 = vmatprep.subr.mxu0 0.0
    %704 = vmatpush1.msra.mxu0 0.0
    %705 = vmatprep.subr.mxu0 0.0
    %706 = vmatpush1.msra.mxu0 0.0
    %707 = vmatprep.subr.mxu0 0.0
    %708 = vmatpush1.msra.mxu0 0.0
    %709 = vmatprep.subr.mxu0 0.0
    %710 = vmatpush1.msra.mxu0 0.0
    %711 = vmatprep.subr.mxu0 0.0
    %712 = vmatpush1.msra.mxu0 0.0
    %713 = vmatprep.subr.mxu0 0.0
    %714 = vmatpush1.msra.mxu0 0.0
    %715 = vmatprep.subr.mxu0 0.0
    %716 = vmatpush1.msra.mxu0 0.0
    %717 = vmatprep.subr.mxu0 0.0
    %718 = vmatpush1.msra.mxu0 0.0
    %719 = vmatprep.subr.mxu0 0.0
    %720 = vmatpush1.msra.mxu0 0.0
    %721 = vmatprep.subr.mxu0 0.0
    %722 = vmatpush1.msra.mxu0 0.0
    %723 = vmatprep.subr.mxu0 0.0
    %724 = vmatpush1.msra.mxu0 %v72
    %725 = vmatprep.subr.mxu0 0.0
    %726 = vmatpush1.msra.mxu0 %v71
    %727 = vmatprep.subr.mxu0 0.0
    %728 = vmatpush1.msra.mxu0 %v70
    %729 = vmatprep.subr.mxu0 0.0
    %730 = vmatpush1.msra.mxu0 %v69
    %731 = vmatprep.subr.mxu0 0.0
    %732 = vmatpush2.msra.mxu0 0.0
    %733 = vmatprep.subr.mxu0 0.0
    %734 = vmatpush2.msra.mxu0 0.0
    %735 = vmatprep.subr.mxu0 0.0
    %736 = vmatpush2.msra.mxu0 0.0
    %737 = vmatprep.subr.mxu0 0.0
    %738 = vmatpush2.msra.mxu0 0.0
    %739 = vmatprep.subr.mxu0 0.0
    %740 = vmatpush2.msra.mxu0 0.0
    %741 = vmatprep.subr.mxu0 0.0
    %742 = vmatpush2.msra.mxu0 0.0
    %743 = vmatprep.subr.mxu0 0.0
    %744 = vmatpush2.msra.mxu0 0.0
    %745 = vmatprep.subr.mxu0 0.0
    %746 = vmatpush2.msra.mxu0 0.0
    %747 = vmatprep.subr.mxu0 0.0
    %748 = vmatpush2.msra.mxu0 0.0
    %749 = vmatprep.subr.mxu0 0.0
    %750 = vmatpush2.msra.mxu0 0.0
    %751 = vmatprep.subr.mxu0 0.0
    %752 = vmatpush2.msra.mxu0 0.0
    %753 = vmatprep.subr.mxu0 0.0
    %754 = vmatpush2.msra.mxu0 0.0
    %755 = vmatprep.subr.mxu0 0.0
    %756 = vmatpush2.msra.mxu0 0.0
    %757 = vmatprep.subr.mxu0 0.0
    %758 = vmatpush2.msra.mxu0 0.0
    %759 = vmatprep.subr.mxu0 0.0
    %760 = vmatpush2.msra.mxu0 0.0
    %761 = vmatprep.subr.mxu0 0.0
    %762 = vmatpush2.msra.mxu0 0.0
    %763 = vmatprep.mubr.f32.mxu0 0.0
    %764 = vmatmul.mubr.f32.gmra.mxu0 %v697
    %v765 = vpop.f32.mrf.mxu0
    %v766 = vadd.f32 0.0, %v765
    %v767 = vpop.f32.mrf.mxu0
    %768 = vdwg.mxu0
    %v770 = vrot.slane %v766, 3
    %v772 = vadd.f32 %v164, %v770
    %v773 = vxor.u32 %v772, 2147483648
    %v774 = vmul.f32 %v773, 1.442695
    %v775 = vpow.pop %v774
    %v776 = vadd.f32 %v775, 1.0
    %v777 = vrcp.pop %v776
    %v778 = vmul.f32 1.0, %v777
    %v779 = vtanh.pop %v772
    %v781 = vrot.slane %v686, 7
    %v783 = vmul.f32 %v778, %v781
    %785 = vrot.lane.b32.xlu0 %v779, 64
    %v786 = vpop.permute.xlu0 %785
    %v788 = vmul.f32 %v778, %v786
    %790 = vrot.lane.b32.xlu0 %v788, 32
    %v791 = vpop.permute.xlu0 %790
    %v793 = vadd.f32 %v783, %v791
    %v794 = vtanh.pop %v793
    %796 = vrot.lane.b32.xlu0 %v794, 64
    %v797 = vpop.permute.xlu0 %796
    %v799 = vmul.f32 %v778, %v797
    %v801 = vrot.slane %v799, 5
    %802 = vrot.lane.b32.xlu0 %v801, 32
    %v803 = vpop.permute.xlu0 %802
    %v804 = vsel %vm167, %v803, 0
    %806 = vmatprep.subr.mxu0 0.0
    %807 = vmatpush1.msra.mxu0 0.0
    %808 = vmatprep.subr.mxu0 0.0
    %809 = vmatpush1.msra.mxu0 0.0
    %810 = vmatprep.subr.mxu0 0.0
    %811 = vmatpush1.msra.mxu0 0.0
    %812 = vmatprep.subr.mxu0 0.0
    %813 = vmatpush1.msra.mxu0 0.0
    %814 = vmatprep.subr.mxu0 0.0
    %815 = vmatpush1.msra.mxu0 0.0
    %816 = vmatprep.subr.mxu0 0.0
    %817 = vmatpush1.msra.mxu0 0.0
    %818 = vmatprep.subr.mxu0 0.0
    %819 = vmatpush1.msra.mxu0 0.0
    %820 = vmatprep.subr.mxu0 0.0
    %821 = vmatpush1.msra.mxu0 0.0
    %822 = vmatprep.subr.mxu0 0.0
    %823 = vmatpush1.msra.mxu0 0.0
    %824 = vmatprep.subr.mxu0 0.0
    %825 = vmatpush1.msra.mxu0 0.0
    %826 = vmatprep.subr.mxu0 0.0
    %827 = vmatpush1.msra.mxu0 0.0
    %828 = vmatprep.subr.mxu0 0.0
    %829 = vmatpush1.msra.mxu0 0.0
    %830 = vmatprep.subr.mxu0 0.0
    %831 = vmatpush1.msra.mxu0 %v72
    %832 = vmatprep.subr.mxu0 0.0
    %833 = vmatpush1.msra.mxu0 %v71
    %834 = vmatprep.subr.mxu0 0.0
    %835 = vmatpush1.msra.mxu0 %v70
    %836 = vmatprep.subr.mxu0 0.0
    %837 = vmatpush1.msra.mxu0 %v69
    %838 = vmatprep.subr.mxu0 0.0
    %839 = vmatpush2.msra.mxu0 0.0
    %840 = vmatprep.subr.mxu0 0.0
    %841 = vmatpush2.msra.mxu0 0.0
    %842 = vmatprep.subr.mxu0 0.0
    %843 = vmatpush2.msra.mxu0 0.0
    %844 = vmatprep.subr.mxu0 0.0
    %845 = vmatpush2.msra.mxu0 0.0
    %846 = vmatprep.subr.mxu0 0.0
    %847 = vmatpush2.msra.mxu0 0.0
    %848 = vmatprep.subr.mxu0 0.0
    %849 = vmatpush2.msra.mxu0 0.0
    %850 = vmatprep.subr.mxu0 0.0
    %851 = vmatpush2.msra.mxu0 0.0
    %852 = vmatprep.subr.mxu0 0.0
    %853 = vmatpush2.msra.mxu0 0.0
    %854 = vmatprep.subr.mxu0 0.0
    %855 = vmatpush2.msra.mxu0 0.0
    %856 = vmatprep.subr.mxu0 0.0
    %857 = vmatpush2.msra.mxu0 0.0
    %858 = vmatprep.subr.mxu0 0.0
    %859 = vmatpush2.msra.mxu0 0.0
    %860 = vmatprep.subr.mxu0 0.0
    %861 = vmatpush2.msra.mxu0 0.0
    %862 = vmatprep.subr.mxu0 0.0
    %863 = vmatpush2.msra.mxu0 0.0
    %864 = vmatprep.subr.mxu0 0.0
    %865 = vmatpush2.msra.mxu0 0.0
    %866 = vmatprep.subr.mxu0 0.0
    %867 = vmatpush2.msra.mxu0 0.0
    %868 = vmatprep.subr.mxu0 0.0
    %869 = vmatpush2.msra.mxu0 0.0
    %870 = vmatprep.mubr.f32.mxu0 0.0
    %871 = vmatmul.mubr.f32.gmra.mxu0 %v804
    %v872 = vpop.f32.mrf.mxu0
    %v873 = vadd.f32 0.0, %v872
    %v874 = vpop.f32.mrf.mxu0
    %875 = vdwg.mxu0
    %v877 = vrot.slane %v873, 2
    %v879 = vadd.f32 %v164, %v877
    %v880 = vxor.u32 %v879, 2147483648
    %v881 = vmul.f32 %v880, 1.442695
    %v882 = vpow.pop %v881
    %v883 = vadd.f32 %v882, 1.0
    %v884 = vrcp.pop %v883
    %v885 = vmul.f32 1.0, %v884
    %v886 = vtanh.pop %v879
    %v888 = vrot.slane %v793, 7
    %v890 = vmul.f32 %v885, %v888
    %892 = vrot.lane.b32.xlu0 %v886, 64
    %v893 = vpop.permute.xlu0 %892
    %v895 = vmul.f32 %v885, %v893
    %897 = vrot.lane.b32.xlu0 %v895, 32
    %v898 = vpop.permute.xlu0 %897
    %v900 = vadd.f32 %v890, %v898
    %v901 = vtanh.pop %v900
    %903 = vrot.lane.b32.xlu0 %v901, 64
    %v904 = vpop.permute.xlu0 %903
    %v906 = vmul.f32 %v885, %v904
    %v908 = vrot.slane %v906, 6
    %909 = vrot.lane.b32.xlu0 %v908, 32
    %v910 = vpop.permute.xlu0 %909
    %v911 = vsel %vm167, %v910, 0
    %913 = vmatprep.subr.mxu0 0.0
    %914 = vmatpush1.msra.mxu0 0.0
    %915 = vmatprep.subr.mxu0 0.0
    %916 = vmatpush1.msra.mxu0 0.0
    %917 = vmatprep.subr.mxu0 0.0
    %918 = vmatpush1.msra.mxu0 0.0
    %919 = vmatprep.subr.mxu0 0.0
    %920 = vmatpush1.msra.mxu0 0.0
    %921 = vmatprep.subr.mxu0 0.0
    %922 = vmatpush1.msra.mxu0 0.0
    %923 = vmatprep.subr.mxu0 0.0
    %924 = vmatpush1.msra.mxu0 0.0
    %925 = vmatprep.subr.mxu0 0.0
    %926 = vmatpush1.msra.mxu0 0.0
    %927 = vmatprep.subr.mxu0 0.0
    %928 = vmatpush1.msra.mxu0 0.0
    %929 = vmatprep.subr.mxu0 0.0
    %930 = vmatpush1.msra.mxu0 0.0
    %931 = vmatprep.subr.mxu0 0.0
    %932 = vmatpush1.msra.mxu0 0.0
    %933 = vmatprep.subr.mxu0 0.0
    %934 = vmatpush1.msra.mxu0 0.0
    %935 = vmatprep.subr.mxu0 0.0
    %936 = vmatpush1.msra.mxu0 0.0
    %937 = vmatprep.subr.mxu0 0.0
    %938 = vmatpush1.msra.mxu0 %v72
    %939 = vmatprep.subr.mxu0 0.0
    %940 = vmatpush1.msra.mxu0 %v71
    %941 = vmatprep.subr.mxu0 0.0
    %942 = vmatpush1.msra.mxu0 %v70
    %943 = vmatprep.subr.mxu0 0.0
    %944 = vmatpush1.msra.mxu0 %v69
    %945 = vmatprep.subr.mxu0 0.0
    %946 = vmatpush2.msra.mxu0 0.0
    %947 = vmatprep.subr.mxu0 0.0
    %948 = vmatpush2.msra.mxu0 0.0
    %949 = vmatprep.subr.mxu0 0.0
    %950 = vmatpush2.msra.mxu0 0.0
    %951 = vmatprep.subr.mxu0 0.0
    %952 = vmatpush2.msra.mxu0 0.0
    %953 = vmatprep.subr.mxu0 0.0
    %954 = vmatpush2.msra.mxu0 0.0
    %955 = vmatprep.subr.mxu0 0.0
    %956 = vmatpush2.msra.mxu0 0.0
    %957 = vmatprep.subr.mxu0 0.0
    %958 = vmatpush2.msra.mxu0 0.0
    %959 = vmatprep.subr.mxu0 0.0
    %960 = vmatpush2.msra.mxu0 0.0
    %961 = vmatprep.subr.mxu0 0.0
    %962 = vmatpush2.msra.mxu0 0.0
    %963 = vmatprep.subr.mxu0 0.0
    %964 = vmatpush2.msra.mxu0 0.0
    %965 = vmatprep.subr.mxu0 0.0
    %966 = vmatpush2.msra.mxu0 0.0
    %967 = vmatprep.subr.mxu0 0.0
    %968 = vmatpush2.msra.mxu0 0.0
    %969 = vmatprep.subr.mxu0 0.0
    %970 = vmatpush2.msra.mxu0 0.0
    %971 = vmatprep.subr.mxu0 0.0
    %972 = vmatpush2.msra.mxu0 0.0
    %973 = vmatprep.subr.mxu0 0.0
    %974 = vmatpush2.msra.mxu0 0.0
    %975 = vmatprep.subr.mxu0 0.0
    %976 = vmatpush2.msra.mxu0 0.0
    %977 = vmatprep.mubr.f32.mxu0 0.0
    %978 = vmatmul.mubr.f32.gmra.mxu0 %v911
    %v979 = vpop.f32.mrf.mxu0
    %v980 = vadd.f32 0.0, %v979
    %v981 = vpop.f32.mrf.mxu0
    %982 = vdwg.mxu0
    %v984 = vrot.slane %v980, 1
    %v986 = vadd.f32 %v164, %v984
    %v987 = vxor.u32 %v986, 2147483648
    %v988 = vmul.f32 %v987, 1.442695
    %v989 = vpow.pop %v988
    %v990 = vadd.f32 %v989, 1.0
    %v991 = vrcp.pop %v990
    %v992 = vmul.f32 1.0, %v991
    %v993 = vtanh.pop %v986
    %v995 = vrot.slane %v900, 7
    %v997 = vmul.f32 %v992, %v995
    %999 = vrot.lane.b32.xlu0 %v993, 64
    %v1000 = vpop.permute.xlu0 %999
    %v1002 = vmul.f32 %v992, %v1000
    %1004 = vrot.lane.b32.xlu0 %v1002, 32
    %v1005 = vpop.permute.xlu0 %1004
    %v1007 = vadd.f32 %v997, %v1005
    %v1008 = vtanh.pop %v1007
    %1010 = vrot.lane.b32.xlu0 %v1008, 64
    %v1011 = vpop.permute.xlu0 %1010
    %v1013 = vmul.f32 %v992, %v1011
    %vm1014 = vcmask 31744
    %v1016 = vsel %vm1014, %v79, 0
    %v1019 = vsel %vm1014, %v80, 0
    %v1022 = vsel %vm1014, %v81, 0
    %v1025 = vsel %vm1014, %v82, 0
    %vm1027 = vcmask 1043456
    %v1029 = vsel %vm1027, %v73, 0
    %1031 = vmatprep.subr.mxu0 0.0
    %1032 = vmatpush1.msra.mxu0 0.0
    %1033 = vmatprep.subr.mxu0 0.0
    %1034 = vmatpush1.msra.mxu0 0.0
    %1035 = vmatprep.subr.mxu0 0.0
    %1036 = vmatpush1.msra.mxu0 0.0
    %1037 = vmatprep.subr.mxu0 0.0
    %1038 = vmatpush1.msra.mxu0 0.0
    %1039 = vmatprep.subr.mxu0 0.0
    %1040 = vmatpush1.msra.mxu0 0.0
    %1041 = vmatprep.subr.mxu0 0.0
    %1042 = vmatpush1.msra.mxu0 0.0
    %1043 = vmatprep.subr.mxu0 0.0
    %1044 = vmatpush1.msra.mxu0 0.0
    %1045 = vmatprep.subr.mxu0 0.0
    %1046 = vmatpush1.msra.mxu0 0.0
    %1047 = vmatprep.subr.mxu0 0.0
    %1048 = vmatpush1.msra.mxu0 0.0
    %1049 = vmatprep.subr.mxu0 0.0
    %1050 = vmatpush1.msra.mxu0 0.0
    %1051 = vmatprep.subr.mxu0 0.0
    %1052 = vmatpush1.msra.mxu0 0.0
    %1053 = vmatprep.subr.mxu0 0.0
    %1054 = vmatpush1.msra.mxu0 0.0
    %1055 = vmatprep.subr.mxu0 0.0
    %1056 = vmatpush1.msra.mxu0 0.0
    %1057 = vmatprep.subr.mxu0 0.0
    %1058 = vmatpush1.msra.mxu0 0.0
    %1059 = vmatprep.subr.mxu0 0.0
    %1060 = vmatpush1.msra.mxu0 0.0
    %1061 = vmatprep.subr.mxu0 0.0
    %1062 = vmatpush1.msra.mxu0 %v1029
    %1063 = vmatprep.subr.mxu0 0.0
    %1064 = vmatpush2.msra.mxu0 0.0
    %1065 = vmatprep.subr.mxu0 0.0
    %1066 = vmatpush2.msra.mxu0 0.0
    %1067 = vmatprep.subr.mxu0 0.0
    %1068 = vmatpush2.msra.mxu0 0.0
    %1069 = vmatprep.subr.mxu0 0.0
    %1070 = vmatpush2.msra.mxu0 0.0
    %1071 = vmatprep.subr.mxu0 0.0
    %1072 = vmatpush2.msra.mxu0 0.0
    %1073 = vmatprep.subr.mxu0 0.0
    %1074 = vmatpush2.msra.mxu0 0.0
    %1075 = vmatprep.subr.mxu0 0.0
    %1076 = vmatpush2.msra.mxu0 0.0
    %1077 = vmatprep.subr.mxu0 0.0
    %1078 = vmatpush2.msra.mxu0 0.0
    %1079 = vmatprep.subr.mxu0 0.0
    %1080 = vmatpush2.msra.mxu0 0.0
    %1081 = vmatprep.subr.mxu0 0.0
    %1082 = vmatpush2.msra.mxu0 0.0
    %1083 = vmatprep.subr.mxu0 0.0
    %1084 = vmatpush2.msra.mxu0 0.0
    %1085 = vmatprep.subr.mxu0 0.0
    %1086 = vmatpush2.msra.mxu0 0.0
    %1087 = vmatprep.subr.mxu0 0.0
    %1088 = vmatpush2.msra.mxu0 0.0
    %1089 = vmatprep.subr.mxu0 0.0
    %1090 = vmatpush2.msra.mxu0 0.0
    %1091 = vmatprep.subr.mxu0 0.0
    %1092 = vmatpush2.msra.mxu0 0.0
    %1093 = vmatprep.subr.mxu0 0.0
    %1094 = vmatpush2.msra.mxu0 0.0
    %1095 = vmatprep.mubr.f32.mxu0 0.0
    %1096 = vmatmul.mubr.f32.gmra.mxu0 %v1016
    %v1097 = vpop.f32.mrf.mxu0
    %v1098 = vadd.f32 0.0, %v1097
    %v1099 = vpop.f32.mrf.mxu0
    %1100 = vmatprep.mubr.f32.mxu0 0.0
    %1101 = vmatmul.mubr.f32.gmra.mxu0 %v1019
    %v1102 = vpop.f32.mrf.mxu0
    %v1103 = vadd.f32 0.0, %v1102
    %v1104 = vpop.f32.mrf.mxu0
    %1105 = vmatprep.mubr.f32.mxu0 0.0
    %1106 = vmatmul.mubr.f32.gmra.mxu0 %v1022
    %v1107 = vpop.f32.mrf.mxu0
    %v1108 = vadd.f32 0.0, %v1107
    %v1109 = vpop.f32.mrf.mxu0
    %1110 = vmatprep.mubr.f32.mxu0 0.0
    %1111 = vmatmul.mubr.f32.gmra.mxu0 %v1025
    %v1112 = vpop.f32.mrf.mxu0
    %v1113 = vadd.f32 0.0, %v1112
    %v1114 = vpop.f32.mrf.mxu0
    %1115 = vdwg.mxu0
    %v1116 = vadd.f32 %v74, %v1098
    %v1117 = vadd.f32 %v75, %v1103
    %v1118 = vadd.f32 %v76, %v1108
    %v1119 = vadd.f32 %v77, %v1113
    %v1121 = vsel %vm1014, %v83, 0
    %1123 = vmatprep.subr.mxu0 0.0
    %1124 = vmatpush1.msra.mxu0 0.0
    %1125 = vmatprep.subr.mxu0 0.0
    %1126 = vmatpush1.msra.mxu0 0.0
    %1127 = vmatprep.subr.mxu0 0.0
    %1128 = vmatpush1.msra.mxu0 0.0
    %1129 = vmatprep.subr.mxu0 0.0
    %1130 = vmatpush1.msra.mxu0 0.0
    %1131 = vmatprep.subr.mxu0 0.0
    %1132 = vmatpush1.msra.mxu0 0.0
    %1133 = vmatprep.subr.mxu0 0.0
    %1134 = vmatpush1.msra.mxu0 0.0
    %1135 = vmatprep.subr.mxu0 0.0
    %1136 = vmatpush1.msra.mxu0 0.0
    %1137 = vmatprep.subr.mxu0 0.0
    %1138 = vmatpush1.msra.mxu0 0.0
    %1139 = vmatprep.subr.mxu0 0.0
    %1140 = vmatpush1.msra.mxu0 0.0
    %1141 = vmatprep.subr.mxu0 0.0
    %1142 = vmatpush1.msra.mxu0 0.0
    %1143 = vmatprep.subr.mxu0 0.0
    %1144 = vmatpush1.msra.mxu0 0.0
    %1145 = vmatprep.subr.mxu0 0.0
    %1146 = vmatpush1.msra.mxu0 0.0
    %1147 = vmatprep.subr.mxu0 0.0
    %1148 = vmatpush1.msra.mxu0 0.0
    %1149 = vmatprep.subr.mxu0 0.0
    %1150 = vmatpush1.msra.mxu0 0.0
    %1151 = vmatprep.subr.mxu0 0.0
    %1152 = vmatpush1.msra.mxu0 0.0
    %1153 = vmatprep.subr.mxu0 0.0
    %1154 = vmatpush1.msra.mxu0 %v1029
    %1155 = vmatprep.subr.mxu0 0.0
    %1156 = vmatpush2.msra.mxu0 0.0
    %1157 = vmatprep.subr.mxu0 0.0
    %1158 = vmatpush2.msra.mxu0 0.0
    %1159 = vmatprep.subr.mxu0 0.0
    %1160 = vmatpush2.msra.mxu0 0.0
    %1161 = vmatprep.subr.mxu0 0.0
    %1162 = vmatpush2.msra.mxu0 0.0
    %1163 = vmatprep.subr.mxu0 0.0
    %1164 = vmatpush2.msra.mxu0 0.0
    %1165 = vmatprep.subr.mxu0 0.0
    %1166 = vmatpush2.msra.mxu0 0.0
    %1167 = vmatprep.subr.mxu0 0.0
    %1168 = vmatpush2.msra.mxu0 0.0
    %1169 = vmatprep.subr.mxu0 0.0
    %1170 = vmatpush2.msra.mxu0 0.0
    %1171 = vmatprep.subr.mxu0 0.0
    %1172 = vmatpush2.msra.mxu0 0.0
    %1173 = vmatprep.subr.mxu0 0.0
    %1174 = vmatpush2.msra.mxu0 0.0
    %1175 = vmatprep.subr.mxu0 0.0
    %1176 = vmatpush2.msra.mxu0 0.0
    %1177 = vmatprep.subr.mxu0 0.0
    %1178 = vmatpush2.msra.mxu0 0.0
    %1179 = vmatprep.subr.mxu0 0.0
    %1180 = vmatpush2.msra.mxu0 0.0
    %1181 = vmatprep.subr.mxu0 0.0
    %1182 = vmatpush2.msra.mxu0 0.0
    %1183 = vmatprep.subr.mxu0 0.0
    %1184 = vmatpush2.msra.mxu0 0.0
    %1185 = vmatprep.subr.mxu0 0.0
    %1186 = vmatpush2.msra.mxu0 0.0
    %1187 = vmatprep.mubr.f32.mxu0 0.0
    %1188 = vmatmul.mubr.f32.gmra.mxu0 %v1121
    %v1189 = vpop.f32.mrf.mxu0
    %v1190 = vadd.f32 0.0, %v1189
    %v1191 = vpop.f32.mrf.mxu0
    %1192 = vdwg.mxu0
    %v1193 = vadd.f32 %v78, %v1190
    %v1195 = vrot.slane %v1013, 7
    %1196 = vrot.lane.b32.xlu0 %v1195, 32
    %v1197 = vpop.permute.xlu0 %1196
    %v1198 = vsel %vm167, %v1197, 0
    %1200 = vmatprep.subr.mxu0 0.0
    %1201 = vmatpush1.msra.mxu0 0.0
    %1202 = vmatprep.subr.mxu0 0.0
    %1203 = vmatpush1.msra.mxu0 0.0
    %1204 = vmatprep.subr.mxu0 0.0
    %1205 = vmatpush1.msra.mxu0 0.0
    %1206 = vmatprep.subr.mxu0 0.0
    %1207 = vmatpush1.msra.mxu0 0.0
    %1208 = vmatprep.subr.mxu0 0.0
    %1209 = vmatpush1.msra.mxu0 0.0
    %1210 = vmatprep.subr.mxu0 0.0
    %1211 = vmatpush1.msra.mxu0 0.0
    %1212 = vmatprep.subr.mxu0 0.0
    %1213 = vmatpush1.msra.mxu0 0.0
    %1214 = vmatprep.subr.mxu0 0.0
    %1215 = vmatpush1.msra.mxu0 0.0
    %1216 = vmatprep.subr.mxu0 0.0
    %1217 = vmatpush1.msra.mxu0 0.0
    %1218 = vmatprep.subr.mxu0 0.0
    %1219 = vmatpush1.msra.mxu0 0.0
    %1220 = vmatprep.subr.mxu0 0.0
    %1221 = vmatpush1.msra.mxu0 0.0
    %1222 = vmatprep.subr.mxu0 0.0
    %1223 = vmatpush1.msra.mxu0 0.0
    %1224 = vmatprep.subr.mxu0 0.0
    %1225 = vmatpush1.msra.mxu0 %v77
    %1226 = vmatprep.subr.mxu0 0.0
    %1227 = vmatpush1.msra.mxu0 %v76
    %1228 = vmatprep.subr.mxu0 0.0
    %1229 = vmatpush1.msra.mxu0 %v75
    %1230 = vmatprep.subr.mxu0 0.0
    %1231 = vmatpush1.msra.mxu0 %v74
    %1232 = vmatprep.subr.mxu0 0.0
    %1233 = vmatpush2.msra.mxu0 0.0
    %1234 = vmatprep.subr.mxu0 0.0
    %1235 = vmatpush2.msra.mxu0 0.0
    %1236 = vmatprep.subr.mxu0 0.0
    %1237 = vmatpush2.msra.mxu0 0.0
    %1238 = vmatprep.subr.mxu0 0.0
    %1239 = vmatpush2.msra.mxu0 0.0
    %1240 = vmatprep.subr.mxu0 0.0
    %1241 = vmatpush2.msra.mxu0 0.0
    %1242 = vmatprep.subr.mxu0 0.0
    %1243 = vmatpush2.msra.mxu0 0.0
    %1244 = vmatprep.subr.mxu0 0.0
    %1245 = vmatpush2.msra.mxu0 0.0
    %1246 = vmatprep.subr.mxu0 0.0
    %1247 = vmatpush2.msra.mxu0 0.0
    %1248 = vmatprep.subr.mxu0 0.0
    %1249 = vmatpush2.msra.mxu0 0.0
    %1250 = vmatprep.subr.mxu0 0.0
    %1251 = vmatpush2.msra.mxu0 0.0
    %1252 = vmatprep.subr.mxu0 0.0
    %1253 = vmatpush2.msra.mxu0 0.0
    %1254 = vmatprep.subr.mxu0 0.0
    %1255 = vmatpush2.msra.mxu0 0.0
    %1256 = vmatprep.subr.mxu0 0.0
    %1257 = vmatpush2.msra.mxu0 0.0
    %1258 = vmatprep.subr.mxu0 0.0
    %1259 = vmatpush2.msra.mxu0 0.0
    %1260 = vmatprep.subr.mxu0 0.0
    %1261 = vmatpush2.msra.mxu0 0.0
    %1262 = vmatprep.subr.mxu0 0.0
    %1263 = vmatpush2.msra.mxu0 0.0
    %1264 = vmatprep.mubr.f32.mxu0 0.0
    %1265 = vmatmul.mubr.f32.gmra.mxu0 %v1198
    %v1266 = vpop.f32.mrf.mxu0
    %v1267 = vadd.f32 %v78, %v1266
    %v1268 = vpop.f32.mrf.mxu0
    %1269 = vdwg.mxu0
    %v1270 = vxor.u32 %v1267, 2147483648
    %v1271 = vmul.f32 %v1270, 1.442695
    %v1272 = vpow.pop %v1271
    %v1273 = vadd.f32 %v1272, 1.0
    %v1274 = vrcp.pop %v1273
    %v1275 = vmul.f32 1.0, %v1274
    %v1276 = vtanh.pop %v1267
    %v1277 = vmul.f32 %v1275, 0.0
    %1279 = vrot.lane.b32.xlu0 %v1276, 64
    %v1280 = vpop.permute.xlu0 %1279
    %v1282 = vmul.f32 %v1275, %v1280
    %1284 = vrot.lane.b32.xlu0 %v1282, 32
    %v1285 = vpop.permute.xlu0 %1284
    %v1287 = vadd.f32 %v1277, %v1285
    %v1288 = vtanh.pop %v1287
    %1290 = vrot.lane.b32.xlu0 %v1288, 64
    %v1291 = vpop.permute.xlu0 %1290
    %v1293 = vmul.f32 %v1275, %v1291
    %1295 = vrot.lane.b32.xlu0 %v1293, 32
    %v1296 = vpop.permute.xlu0 %1295
    %vm1298 = vcmask 253952
    %1299 = vst.msk [vmem:[#allocation2] sm:$0x1] %vm1298, %v1296
    %v1300 = vsel %vm167, %v1296, 0
    %1302 = vmatprep.subr.mxu0 0.0
    %1303 = vmatpush1.msra.mxu0 0.0
    %1304 = vmatprep.subr.mxu0 0.0
    %1305 = vmatpush1.msra.mxu0 0.0
    %1306 = vmatprep.subr.mxu0 0.0
    %1307 = vmatpush1.msra.mxu0 0.0
    %1308 = vmatprep.subr.mxu0 0.0
    %1309 = vmatpush1.msra.mxu0 0.0
    %1310 = vmatprep.subr.mxu0 0.0
    %1311 = vmatpush1.msra.mxu0 0.0
    %1312 = vmatprep.subr.mxu0 0.0
    %1313 = vmatpush1.msra.mxu0 0.0
    %1314 = vmatprep.subr.mxu0 0.0
    %1315 = vmatpush1.msra.mxu0 0.0
    %1316 = vmatprep.subr.mxu0 0.0
    %1317 = vmatpush1.msra.mxu0 0.0
    %1318 = vmatprep.subr.mxu0 0.0
    %1319 = vmatpush1.msra.mxu0 0.0
    %1320 = vmatprep.subr.mxu0 0.0
    %1321 = vmatpush1.msra.mxu0 0.0
    %1322 = vmatprep.subr.mxu0 0.0
    %1323 = vmatpush1.msra.mxu0 0.0
    %1324 = vmatprep.subr.mxu0 0.0
    %1325 = vmatpush1.msra.mxu0 0.0
    %1326 = vmatprep.subr.mxu0 0.0
    %1327 = vmatpush1.msra.mxu0 %v1119
    %1328 = vmatprep.subr.mxu0 0.0
    %1329 = vmatpush1.msra.mxu0 %v1118
    %1330 = vmatprep.subr.mxu0 0.0
    %1331 = vmatpush1.msra.mxu0 %v1117
    %1332 = vmatprep.subr.mxu0 0.0
    %1333 = vmatpush1.msra.mxu0 %v1116
    %1334 = vmatprep.subr.mxu0 0.0
    %1335 = vmatpush2.msra.mxu0 0.0
    %1336 = vmatprep.subr.mxu0 0.0
    %1337 = vmatpush2.msra.mxu0 0.0
    %1338 = vmatprep.subr.mxu0 0.0
    %1339 = vmatpush2.msra.mxu0 0.0
    %1340 = vmatprep.subr.mxu0 0.0
    %1341 = vmatpush2.msra.mxu0 0.0
    %1342 = vmatprep.subr.mxu0 0.0
    %1343 = vmatpush2.msra.mxu0 0.0
    %1344 = vmatprep.subr.mxu0 0.0
    %1345 = vmatpush2.msra.mxu0 0.0
    %1346 = vmatprep.subr.mxu0 0.0
    %1347 = vmatpush2.msra.mxu0 0.0
    %1348 = vmatprep.subr.mxu0 0.0
    %1349 = vmatpush2.msra.mxu0 0.0
    %1350 = vmatprep.subr.mxu0 0.0
    %1351 = vmatpush2.msra.mxu0 0.0
    %1352 = vmatprep.subr.mxu0 0.0
    %1353 = vmatpush2.msra.mxu0 0.0
    %1354 = vmatprep.subr.mxu0 0.0
    %1355 = vmatpush2.msra.mxu0 0.0
    %1356 = vmatprep.subr.mxu0 0.0
    %1357 = vmatpush2.msra.mxu0 0.0
    %1358 = vmatprep.subr.mxu0 0.0
    %1359 = vmatpush2.msra.mxu0 0.0
    %1360 = vmatprep.subr.mxu0 0.0
    %1361 = vmatpush2.msra.mxu0 0.0
    %1362 = vmatprep.subr.mxu0 0.0
    %1363 = vmatpush2.msra.mxu0 0.0
    %1364 = vmatprep.subr.mxu0 0.0
    %1365 = vmatpush2.msra.mxu0 0.0
    %1366 = vmatprep.mubr.f32.mxu0 0.0
    %1367 = vmatmul.mubr.f32.gmra.mxu0 %v1300
    %v1368 = vpop.f32.mrf.mxu0
    %v1369 = vadd.f32 %v1193, %v1368
    %v1370 = vpop.f32.mrf.mxu0
    %1371 = vdwg.mxu0
    %v1372 = vxor.u32 %v1369, 2147483648
    %v1373 = vmul.f32 %v1372, 1.442695
    %v1374 = vpow.pop %v1373
    %v1375 = vadd.f32 %v1374, 1.0
    %v1376 = vrcp.pop %v1375
    %v1377 = vmul.f32 1.0, %v1376
    %v1378 = vtanh.pop %v1369
    %v1379 = vmul.f32 %v1377, %v1287
    %1381 = vrot.lane.b32.xlu0 %v1378, 64
    %v1382 = vpop.permute.xlu0 %1381
    %v1384 = vmul.f32 %v1377, %v1382
    %1386 = vrot.lane.b32.xlu0 %v1384, 32
    %v1387 = vpop.permute.xlu0 %1386
    %v1389 = vadd.f32 %v1379, %v1387
    %v1390 = vtanh.pop %v1389
    %1392 = vrot.lane.b32.xlu0 %v1390, 64
    %v1393 = vpop.permute.xlu0 %1392
    %v1395 = vmul.f32 %v1377, %v1393
    %1397 = vrot.lane.b32.xlu0 %v1395, 32
    %v1398 = vpop.permute.xlu0 %1397
    %1400 = vst.msk [vmem:[#allocation2 + $0x1] sm:$0x1] %vm1298, %v1398
    %v1401 = vsel %vm167, %v1398, 0
    %1403 = vmatprep.subr.mxu0 0.0
    %1404 = vmatpush1.msra.mxu0 0.0
    %1405 = vmatprep.subr.mxu0 0.0
    %1406 = vmatpush1.msra.mxu0 0.0
    %1407 = vmatprep.subr.mxu0 0.0
    %1408 = vmatpush1.msra.mxu0 0.0
    %1409 = vmatprep.subr.mxu0 0.0
    %1410 = vmatpush1.msra.mxu0 0.0
    %1411 = vmatprep.subr.mxu0 0.0
    %1412 = vmatpush1.msra.mxu0 0.0
    %1413 = vmatprep.subr.mxu0 0.0
    %1414 = vmatpush1.msra.mxu0 0.0
    %1415 = vmatprep.subr.mxu0 0.0
    %1416 = vmatpush1.msra.mxu0 0.0
    %1417 = vmatprep.subr.mxu0 0.0
    %1418 = vmatpush1.msra.mxu0 0.0
    %1419 = vmatprep.subr.mxu0 0.0
    %1420 = vmatpush1.msra.mxu0 0.0
    %1421 = vmatprep.subr.mxu0 0.0
    %1422 = vmatpush1.msra.mxu0 0.0
    %1423 = vmatprep.subr.mxu0 0.0
    %1424 = vmatpush1.msra.mxu0 0.0
    %1425 = vmatprep.subr.mxu0 0.0
    %1426 = vmatpush1.msra.mxu0 0.0
    %1427 = vmatprep.subr.mxu0 0.0
    %1428 = vmatpush1.msra.mxu0 %v1119
    %1429 = vmatprep.subr.mxu0 0.0
    %1430 = vmatpush1.msra.mxu0 %v1118
    %1431 = vmatprep.subr.mxu0 0.0
    %1432 = vmatpush1.msra.mxu0 %v1117
    %1433 = vmatprep.subr.mxu0 0.0
    %1434 = vmatpush1.msra.mxu0 %v1116
    %1435 = vmatprep.subr.mxu0 0.0
    %1436 = vmatpush2.msra.mxu0 0.0
    %1437 = vmatprep.subr.mxu0 0.0
    %1438 = vmatpush2.msra.mxu0 0.0
    %1439 = vmatprep.subr.mxu0 0.0
    %1440 = vmatpush2.msra.mxu0 0.0
    %1441 = vmatprep.subr.mxu0 0.0
    %1442 = vmatpush2.msra.mxu0 0.0
    %1443 = vmatprep.subr.mxu0 0.0
    %1444 = vmatpush2.msra.mxu0 0.0
    %1445 = vmatprep.subr.mxu0 0.0
    %1446 = vmatpush2.msra.mxu0 0.0
    %1447 = vmatprep.subr.mxu0 0.0
    %1448 = vmatpush2.msra.mxu0 0.0
    %1449 = vmatprep.subr.mxu0 0.0
    %1450 = vmatpush2.msra.mxu0 0.0
    %1451 = vmatprep.subr.mxu0 0.0
    %1452 = vmatpush2.msra.mxu0 0.0
    %1453 = vmatprep.subr.mxu0 0.0
    %1454 = vmatpush2.msra.mxu0 0.0
    %1455 = vmatprep.subr.mxu0 0.0
    %1456 = vmatpush2.msra.mxu0 0.0
    %1457 = vmatprep.subr.mxu0 0.0
    %1458 = vmatpush2.msra.mxu0 0.0
    %1459 = vmatprep.subr.mxu0 0.0
    %1460 = vmatpush2.msra.mxu0 0.0
    %1461 = vmatprep.subr.mxu0 0.0
    %1462 = vmatpush2.msra.mxu0 0.0
    %1463 = vmatprep.subr.mxu0 0.0
    %1464 = vmatpush2.msra.mxu0 0.0
    %1465 = vmatprep.subr.mxu0 0.0
    %1466 = vmatpush2.msra.mxu0 0.0
    %1467 = vmatprep.mubr.f32.mxu0 0.0
    %1468 = vmatmul.mubr.f32.gmra.mxu0 %v1401
    %v1469 = vpop.f32.mrf.mxu0
    %v1470 = vadd.f32 %v1193, %v1469
    %v1471 = vpop.f32.mrf.mxu0
    %1472 = vdwg.mxu0
    %v1473 = vxor.u32 %v1470, 2147483648
    %v1474 = vmul.f32 %v1473, 1.442695
    %v1475 = vpow.pop %v1474
    %v1476 = vadd.f32 %v1475, 1.0
    %v1477 = vrcp.pop %v1476
    %v1478 = vmul.f32 1.0, %v1477
    %v1479 = vtanh.pop %v1470
    %v1480 = vmul.f32 %v1478, %v1389
    %1482 = vrot.lane.b32.xlu0 %v1479, 64
    %v1483 = vpop.permute.xlu0 %1482
    %v1485 = vmul.f32 %v1478, %v1483
    %1487 = vrot.lane.b32.xlu0 %v1485, 32
    %v1488 = vpop.permute.xlu0 %1487
    %v1490 = vadd.f32 %v1480, %v1488
    %v1491 = vtanh.pop %v1490
    %1493 = vrot.lane.b32.xlu0 %v1491, 64
    %v1494 = vpop.permute.xlu0 %1493
    %v1496 = vmul.f32 %v1478, %v1494
    %1498 = vrot.lane.b32.xlu0 %v1496, 32
    %v1499 = vpop.permute.xlu0 %1498
    %1501 = vst.msk [vmem:[#allocation2 + $0x2] sm:$0x1] %vm1298, %v1499
    %v1502 = vsel %vm167, %v1499, 0
    %1504 = vmatprep.subr.mxu0 0.0
    %1505 = vmatpush1.msra.mxu0 0.0
    %1506 = vmatprep.subr.mxu0 0.0
    %1507 = vmatpush1.msra.mxu0 0.0
    %1508 = vmatprep.subr.mxu0 0.0
    %1509 = vmatpush1.msra.mxu0 0.0
    %1510 = vmatprep.subr.mxu0 0.0
    %1511 = vmatpush1.msra.mxu0 0.0
    %1512 = vmatprep.subr.mxu0 0.0
    %1513 = vmatpush1.msra.mxu0 0.0
    %1514 = vmatprep.subr.mxu0 0.0
    %1515 = vmatpush1.msra.mxu0 0.0
    %1516 = vmatprep.subr.mxu0 0.0
    %1517 = vmatpush1.msra.mxu0 0.0
    %1518 = vmatprep.subr.mxu0 0.0
    %1519 = vmatpush1.msra.mxu0 0.0
    %1520 = vmatprep.subr.mxu0 0.0
    %1521 = vmatpush1.msra.mxu0 0.0
    %1522 = vmatprep.subr.mxu0 0.0
    %1523 = vmatpush1.msra.mxu0 0.0
    %1524 = vmatprep.subr.mxu0 0.0
    %1525 = vmatpush1.msra.mxu0 0.0
    %1526 = vmatprep.subr.mxu0 0.0
    %1527 = vmatpush1.msra.mxu0 0.0
    %1528 = vmatprep.subr.mxu0 0.0
    %1529 = vmatpush1.msra.mxu0 %v1119
    %1530 = vmatprep.subr.mxu0 0.0
    %1531 = vmatpush1.msra.mxu0 %v1118
    %1532 = vmatprep.subr.mxu0 0.0
    %1533 = vmatpush1.msra.mxu0 %v1117
    %1534 = vmatprep.subr.mxu0 0.0
    %1535 = vmatpush1.msra.mxu0 %v1116
    %1536 = vmatprep.subr.mxu0 0.0
    %1537 = vmatpush2.msra.mxu0 0.0
    %1538 = vmatprep.subr.mxu0 0.0
    %1539 = vmatpush2.msra.mxu0 0.0
    %1540 = vmatprep.subr.mxu0 0.0
    %1541 = vmatpush2.msra.mxu0 0.0
    %1542 = vmatprep.subr.mxu0 0.0
    %1543 = vmatpush2.msra.mxu0 0.0
    %1544 = vmatprep.subr.mxu0 0.0
    %1545 = vmatpush2.msra.mxu0 0.0
    %1546 = vmatprep.subr.mxu0 0.0
    %1547 = vmatpush2.msra.mxu0 0.0
    %1548 = vmatprep.subr.mxu0 0.0
    %1549 = vmatpush2.msra.mxu0 0.0
    %1550 = vmatprep.subr.mxu0 0.0
    %1551 = vmatpush2.msra.mxu0 0.0
    %1552 = vmatprep.subr.mxu0 0.0
    %1553 = vmatpush2.msra.mxu0 0.0
    %1554 = vmatprep.subr.mxu0 0.0
    %1555 = vmatpush2.msra.mxu0 0.0
    %1556 = vmatprep.subr.mxu0 0.0
    %1557 = vmatpush2.msra.mxu0 0.0
    %1558 = vmatprep.subr.mxu0 0.0
    %1559 = vmatpush2.msra.mxu0 0.0
    %1560 = vmatprep.subr.mxu0 0.0
    %1561 = vmatpush2.msra.mxu0 0.0
    %1562 = vmatprep.subr.mxu0 0.0
    %1563 = vmatpush2.msra.mxu0 0.0
    %1564 = vmatprep.subr.mxu0 0.0
    %1565 = vmatpush2.msra.mxu0 0.0
    %1566 = vmatprep.subr.mxu0 0.0
    %1567 = vmatpush2.msra.mxu0 0.0
    %1568 = vmatprep.mubr.f32.mxu0 0.0
    %1569 = vmatmul.mubr.f32.gmra.mxu0 %v1502
    %v1570 = vpop.f32.mrf.mxu0
    %v1571 = vadd.f32 %v1193, %v1570
    %v1572 = vpop.f32.mrf.mxu0
    %1573 = vdwg.mxu0
    %v1574 = vxor.u32 %v1571, 2147483648
    %v1575 = vmul.f32 %v1574, 1.442695
    %v1576 = vpow.pop %v1575
    %v1577 = vadd.f32 %v1576, 1.0
    %v1578 = vrcp.pop %v1577
    %v1579 = vmul.f32 1.0, %v1578
    %v1580 = vtanh.pop %v1571
    %v1581 = vmul.f32 %v1579, %v1490
    %1583 = vrot.lane.b32.xlu0 %v1580, 64
    %v1584 = vpop.permute.xlu0 %1583
    %v1586 = vmul.f32 %v1579, %v1584
    %1588 = vrot.lane.b32.xlu0 %v1586, 32
    %v1589 = vpop.permute.xlu0 %1588
    %v1591 = vadd.f32 %v1581, %v1589
    %v1592 = vtanh.pop %v1591
    %1594 = vrot.lane.b32.xlu0 %v1592, 64
    %v1595 = vpop.permute.xlu0 %1594
    %v1597 = vmul.f32 %v1579, %v1595
    %1599 = vrot.lane.b32.xlu0 %v1597, 32
    %v1600 = vpop.permute.xlu0 %1599
    %1602 = vst.msk [vmem:[#allocation2 + $0x3] sm:$0x1] %vm1298, %v1600
    %v1603 = vsel %vm167, %v1600, 0
    %1605 = vmatprep.subr.mxu0 0.0
    %1606 = vmatpush1.msra.mxu0 0.0
    %1607 = vmatprep.subr.mxu0 0.0
    %1608 = vmatpush1.msra.mxu0 0.0
    %1609 = vmatprep.subr.mxu0 0.0
    %1610 = vmatpush1.msra.mxu0 0.0
    %1611 = vmatprep.subr.mxu0 0.0
    %1612 = vmatpush1.msra.mxu0 0.0
    %1613 = vmatprep.subr.mxu0 0.0
    %1614 = vmatpush1.msra.mxu0 0.0
    %1615 = vmatprep.subr.mxu0 0.0
    %1616 = vmatpush1.msra.mxu0 0.0
    %1617 = vmatprep.subr.mxu0 0.0
    %1618 = vmatpush1.msra.mxu0 0.0
    %1619 = vmatprep.subr.mxu0 0.0
    %1620 = vmatpush1.msra.mxu0 0.0
    %1621 = vmatprep.subr.mxu0 0.0
    %1622 = vmatpush1.msra.mxu0 0.0
    %1623 = vmatprep.subr.mxu0 0.0
    %1624 = vmatpush1.msra.mxu0 0.0
    %1625 = vmatprep.subr.mxu0 0.0
    %1626 = vmatpush1.msra.mxu0 0.0
    %1627 = vmatprep.subr.mxu0 0.0
    %1628 = vmatpush1.msra.mxu0 0.0
    %1629 = vmatprep.subr.mxu0 0.0
    %1630 = vmatpush1.msra.mxu0 %v1119
    %1631 = vmatprep.subr.mxu0 0.0
    %1632 = vmatpush1.msra.mxu0 %v1118
    %1633 = vmatprep.subr.mxu0 0.0
    %1634 = vmatpush1.msra.mxu0 %v1117
    %1635 = vmatprep.subr.mxu0 0.0
    %1636 = vmatpush1.msra.mxu0 %v1116
    %1637 = vmatprep.subr.mxu0 0.0
    %1638 = vmatpush2.msra.mxu0 0.0
    %1639 = vmatprep.subr.mxu0 0.0
    %1640 = vmatpush2.msra.mxu0 0.0
    %1641 = vmatprep.subr.mxu0 0.0
    %1642 = vmatpush2.msra.mxu0 0.0
    %1643 = vmatprep.subr.mxu0 0.0
    %1644 = vmatpush2.msra.mxu0 0.0
    %1645 = vmatprep.subr.mxu0 0.0
    %1646 = vmatpush2.msra.mxu0 0.0
    %1647 = vmatprep.subr.mxu0 0.0
    %1648 = vmatpush2.msra.mxu0 0.0
    %1649 = vmatprep.subr.mxu0 0.0
    %1650 = vmatpush2.msra.mxu0 0.0
    %1651 = vmatprep.subr.mxu0 0.0
    %1652 = vmatpush2.msra.mxu0 0.0
    %1653 = vmatprep.subr.mxu0 0.0
    %1654 = vmatpush2.msra.mxu0 0.0
    %1655 = vmatprep.subr.mxu0 0.0
    %1656 = vmatpush2.msra.mxu0 0.0
    %1657 = vmatprep.subr.mxu0 0.0
    %1658 = vmatpush2.msra.mxu0 0.0
    %1659 = vmatprep.subr.mxu0 0.0
    %1660 = vmatpush2.msra.mxu0 0.0
    %1661 = vmatprep.subr.mxu0 0.0
    %1662 = vmatpush2.msra.mxu0 0.0
    %1663 = vmatprep.subr.mxu0 0.0
    %1664 = vmatpush2.msra.mxu0 0.0
    %1665 = vmatprep.subr.mxu0 0.0
    %1666 = vmatpush2.msra.mxu0 0.0
    %1667 = vmatprep.subr.mxu0 0.0
    %1668 = vmatpush2.msra.mxu0 0.0
    %1669 = vmatprep.mubr.f32.mxu0 0.0
    %1670 = vmatmul.mubr.f32.gmra.mxu0 %v1603
    %v1671 = vpop.f32.mrf.mxu0
    %v1672 = vadd.f32 %v1193, %v1671
    %v1673 = vpop.f32.mrf.mxu0
    %1674 = vdwg.mxu0
    %v1675 = vxor.u32 %v1672, 2147483648
    %v1676 = vmul.f32 %v1675, 1.442695
    %v1677 = vpow.pop %v1676
    %v1678 = vadd.f32 %v1677, 1.0
    %v1679 = vrcp.pop %v1678
    %v1680 = vmul.f32 1.0, %v1679
    %v1681 = vtanh.pop %v1672
    %v1682 = vmul.f32 %v1680, %v1591
    %1684 = vrot.lane.b32.xlu0 %v1681, 64
    %v1685 = vpop.permute.xlu0 %1684
    %v1687 = vmul.f32 %v1680, %v1685
    %1689 = vrot.lane.b32.xlu0 %v1687, 32
    %v1690 = vpop.permute.xlu0 %1689
    %v1692 = vadd.f32 %v1682, %v1690
    %v1693 = vtanh.pop %v1692
    %1695 = vrot.lane.b32.xlu0 %v1693, 64
    %v1696 = vpop.permute.xlu0 %1695
    %v1698 = vmul.f32 %v1680, %v1696
    %1700 = vrot.lane.b32.xlu0 %v1698, 32
    %v1701 = vpop.permute.xlu0 %1700
    %1703 = vst.msk [vmem:[#allocation2 + $0x4] sm:$0x1] %vm1298, %v1701
    %v1704 = vsel %vm167, %v1701, 0
    %1706 = vmatprep.subr.mxu0 0.0
    %1707 = vmatpush1.msra.mxu0 0.0
    %1708 = vmatprep.subr.mxu0 0.0
    %1709 = vmatpush1.msra.mxu0 0.0
    %1710 = vmatprep.subr.mxu0 0.0
    %1711 = vmatpush1.msra.mxu0 0.0
    %1712 = vmatprep.subr.mxu0 0.0
    %1713 = vmatpush1.msra.mxu0 0.0
    %1714 = vmatprep.subr.mxu0 0.0
    %1715 = vmatpush1.msra.mxu0 0.0
    %1716 = vmatprep.subr.mxu0 0.0
    %1717 = vmatpush1.msra.mxu0 0.0
    %1718 = vmatprep.subr.mxu0 0.0
    %1719 = vmatpush1.msra.mxu0 0.0
    %1720 = vmatprep.subr.mxu0 0.0
    %1721 = vmatpush1.msra.mxu0 0.0
    %1722 = vmatprep.subr.mxu0 0.0
    %1723 = vmatpush1.msra.mxu0 0.0
    %1724 = vmatprep.subr.mxu0 0.0
    %1725 = vmatpush1.msra.mxu0 0.0
    %1726 = vmatprep.subr.mxu0 0.0
    %1727 = vmatpush1.msra.mxu0 0.0
    %1728 = vmatprep.subr.mxu0 0.0
    %1729 = vmatpush1.msra.mxu0 0.0
    %1730 = vmatprep.subr.mxu0 0.0
    %1731 = vmatpush1.msra.mxu0 %v1119
    %1732 = vmatprep.subr.mxu0 0.0
    %1733 = vmatpush1.msra.mxu0 %v1118
    %1734 = vmatprep.subr.mxu0 0.0
    %1735 = vmatpush1.msra.mxu0 %v1117
    %1736 = vmatprep.subr.mxu0 0.0
    %1737 = vmatpush1.msra.mxu0 %v1116
    %1738 = vmatprep.subr.mxu0 0.0
    %1739 = vmatpush2.msra.mxu0 0.0
    %1740 = vmatprep.subr.mxu0 0.0
    %1741 = vmatpush2.msra.mxu0 0.0
    %1742 = vmatprep.subr.mxu0 0.0
    %1743 = vmatpush2.msra.mxu0 0.0
    %1744 = vmatprep.subr.mxu0 0.0
    %1745 = vmatpush2.msra.mxu0 0.0
    %1746 = vmatprep.subr.mxu0 0.0
    %1747 = vmatpush2.msra.mxu0 0.0
    %1748 = vmatprep.subr.mxu0 0.0
    %1749 = vmatpush2.msra.mxu0 0.0
    %1750 = vmatprep.subr.mxu0 0.0
    %1751 = vmatpush2.msra.mxu0 0.0
    %1752 = vmatprep.subr.mxu0 0.0
    %1753 = vmatpush2.msra.mxu0 0.0
    %1754 = vmatprep.subr.mxu0 0.0
    %1755 = vmatpush2.msra.mxu0 0.0
    %1756 = vmatprep.subr.mxu0 0.0
    %1757 = vmatpush2.msra.mxu0 0.0
    %1758 = vmatprep.subr.mxu0 0.0
    %1759 = vmatpush2.msra.mxu0 0.0
    %1760 = vmatprep.subr.mxu0 0.0
    %1761 = vmatpush2.msra.mxu0 0.0
    %1762 = vmatprep.subr.mxu0 0.0
    %1763 = vmatpush2.msra.mxu0 0.0
    %1764 = vmatprep.subr.mxu0 0.0
    %1765 = vmatpush2.msra.mxu0 0.0
    %1766 = vmatprep.subr.mxu0 0.0
    %1767 = vmatpush2.msra.mxu0 0.0
    %1768 = vmatprep.subr.mxu0 0.0
    %1769 = vmatpush2.msra.mxu0 0.0
    %1770 = vmatprep.mubr.f32.mxu0 0.0
    %1771 = vmatmul.mubr.f32.gmra.mxu0 %v1704
    %v1772 = vpop.f32.mrf.mxu0
    %v1773 = vadd.f32 %v1193, %v1772
    %v1774 = vpop.f32.mrf.mxu0
    %1775 = vdwg.mxu0
    %v1776 = vxor.u32 %v1773, 2147483648
    %v1777 = vmul.f32 %v1776, 1.442695
    %v1778 = vpow.pop %v1777
    %v1779 = vadd.f32 %v1778, 1.0
    %v1780 = vrcp.pop %v1779
    %v1781 = vmul.f32 1.0, %v1780
    %v1782 = vtanh.pop %v1773
    %v1783 = vmul.f32 %v1781, %v1692
    %1785 = vrot.lane.b32.xlu0 %v1782, 64
    %v1786 = vpop.permute.xlu0 %1785
    %v1788 = vmul.f32 %v1781, %v1786
    %1790 = vrot.lane.b32.xlu0 %v1788, 32
    %v1791 = vpop.permute.xlu0 %1790
    %v1793 = vadd.f32 %v1783, %v1791
    %v1794 = vtanh.pop %v1793
    %1796 = vrot.lane.b32.xlu0 %v1794, 64
    %v1797 = vpop.permute.xlu0 %1796
    %v1799 = vmul.f32 %v1781, %v1797
    %1801 = vrot.lane.b32.xlu0 %v1799, 32
    %v1802 = vpop.permute.xlu0 %1801
    %1804 = vst.msk [vmem:[#allocation2 + $0x5] sm:$0x1] %vm1298, %v1802
    %v1805 = vsel %vm167, %v1802, 0
    %1807 = vmatprep.subr.mxu0 0.0
    %1808 = vmatpush1.msra.mxu0 0.0
    %1809 = vmatprep.subr.mxu0 0.0
    %1810 = vmatpush1.msra.mxu0 0.0
    %1811 = vmatprep.subr.mxu0 0.0
    %1812 = vmatpush1.msra.mxu0 0.0
    %1813 = vmatprep.subr.mxu0 0.0
    %1814 = vmatpush1.msra.mxu0 0.0
    %1815 = vmatprep.subr.mxu0 0.0
    %1816 = vmatpush1.msra.mxu0 0.0
    %1817 = vmatprep.subr.mxu0 0.0
    %1818 = vmatpush1.msra.mxu0 0.0
    %1819 = vmatprep.subr.mxu0 0.0
    %1820 = vmatpush1.msra.mxu0 0.0
    %1821 = vmatprep.subr.mxu0 0.0
    %1822 = vmatpush1.msra.mxu0 0.0
    %1823 = vmatprep.subr.mxu0 0.0
    %1824 = vmatpush1.msra.mxu0 0.0
    %1825 = vmatprep.subr.mxu0 0.0
    %1826 = vmatpush1.msra.mxu0 0.0
    %1827 = vmatprep.subr.mxu0 0.0
    %1828 = vmatpush1.msra.mxu0 0.0
    %1829 = vmatprep.subr.mxu0 0.0
    %1830 = vmatpush1.msra.mxu0 0.0
    %1831 = vmatprep.subr.mxu0 0.0
    %1832 = vmatpush1.msra.mxu0 %v1119
    %1833 = vmatprep.subr.mxu0 0.0
    %1834 = vmatpush1.msra.mxu0 %v1118
    %1835 = vmatprep.subr.mxu0 0.0
    %1836 = vmatpush1.msra.mxu0 %v1117
    %1837 = vmatprep.subr.mxu0 0.0
    %1838 = vmatpush1.msra.mxu0 %v1116
    %1839 = vmatprep.subr.mxu0 0.0
    %1840 = vmatpush2.msra.mxu0 0.0
    %1841 = vmatprep.subr.mxu0 0.0
    %1842 = vmatpush2.msra.mxu0 0.0
    %1843 = vmatprep.subr.mxu0 0.0
    %1844 = vmatpush2.msra.mxu0 0.0
    %1845 = vmatprep.subr.mxu0 0.0
    %1846 = vmatpush2.msra.mxu0 0.0
    %1847 = vmatprep.subr.mxu0 0.0
    %1848 = vmatpush2.msra.mxu0 0.0
    %1849 = vmatprep.subr.mxu0 0.0
    %1850 = vmatpush2.msra.mxu0 0.0
    %1851 = vmatprep.subr.mxu0 0.0
    %1852 = vmatpush2.msra.mxu0 0.0
    %1853 = vmatprep.subr.mxu0 0.0
    %1854 = vmatpush2.msra.mxu0 0.0
    %1855 = vmatprep.subr.mxu0 0.0
    %1856 = vmatpush2.msra.mxu0 0.0
    %1857 = vmatprep.subr.mxu0 0.0
    %1858 = vmatpush2.msra.mxu0 0.0
    %1859 = vmatprep.subr.mxu0 0.0
    %1860 = vmatpush2.msra.mxu0 0.0
    %1861 = vmatprep.subr.mxu0 0.0
    %1862 = vmatpush2.msra.mxu0 0.0
    %1863 = vmatprep.subr.mxu0 0.0
    %1864 = vmatpush2.msra.mxu0 0.0
    %1865 = vmatprep.subr.mxu0 0.0
    %1866 = vmatpush2.msra.mxu0 0.0
    %1867 = vmatprep.subr.mxu0 0.0
    %1868 = vmatpush2.msra.mxu0 0.0
    %1869 = vmatprep.subr.mxu0 0.0
    %1870 = vmatpush2.msra.mxu0 0.0
    %1871 = vmatprep.mubr.f32.mxu0 0.0
    %1872 = vmatmul.mubr.f32.gmra.mxu0 %v1805
    %v1873 = vpop.f32.mrf.mxu0
    %v1874 = vadd.f32 %v1193, %v1873
    %v1875 = vpop.f32.mrf.mxu0
    %1876 = vdwg.mxu0
    %v1877 = vxor.u32 %v1874, 2147483648
    %v1878 = vmul.f32 %v1877, 1.442695
    %v1879 = vpow.pop %v1878
    %v1880 = vadd.f32 %v1879, 1.0
    %v1881 = vrcp.pop %v1880
    %v1882 = vmul.f32 1.0, %v1881
    %v1883 = vtanh.pop %v1874
    %v1884 = vmul.f32 %v1882, %v1793
    %1886 = vrot.lane.b32.xlu0 %v1883, 64
    %v1887 = vpop.permute.xlu0 %1886
    %v1889 = vmul.f32 %v1882, %v1887
    %1891 = vrot.lane.b32.xlu0 %v1889, 32
    %v1892 = vpop.permute.xlu0 %1891
    %v1894 = vadd.f32 %v1884, %v1892
    %v1895 = vtanh.pop %v1894
    %1897 = vrot.lane.b32.xlu0 %v1895, 64
    %v1898 = vpop.permute.xlu0 %1897
    %v1900 = vmul.f32 %v1882, %v1898
    %1902 = vrot.lane.b32.xlu0 %v1900, 32
    %v1903 = vpop.permute.xlu0 %1902
    %1905 = vst.msk [vmem:[#allocation2 + $0x6] sm:$0x1] %vm1298, %v1903
    %v1906 = vsel %vm167, %v1903, 0
    %1908 = vmatprep.subr.mxu0 0.0
    %1909 = vmatpush1.msra.mxu0 0.0
    %1910 = vmatprep.subr.mxu0 0.0
    %1911 = vmatpush1.msra.mxu0 0.0
    %1912 = vmatprep.subr.mxu0 0.0
    %1913 = vmatpush1.msra.mxu0 0.0
    %1914 = vmatprep.subr.mxu0 0.0
    %1915 = vmatpush1.msra.mxu0 0.0
    %1916 = vmatprep.subr.mxu0 0.0
    %1917 = vmatpush1.msra.mxu0 0.0
    %1918 = vmatprep.subr.mxu0 0.0
    %1919 = vmatpush1.msra.mxu0 0.0
    %1920 = vmatprep.subr.mxu0 0.0
    %1921 = vmatpush1.msra.mxu0 0.0
    %1922 = vmatprep.subr.mxu0 0.0
    %1923 = vmatpush1.msra.mxu0 0.0
    %1924 = vmatprep.subr.mxu0 0.0
    %1925 = vmatpush1.msra.mxu0 0.0
    %1926 = vmatprep.subr.mxu0 0.0
    %1927 = vmatpush1.msra.mxu0 0.0
    %1928 = vmatprep.subr.mxu0 0.0
    %1929 = vmatpush1.msra.mxu0 0.0
    %1930 = vmatprep.subr.mxu0 0.0
    %1931 = vmatpush1.msra.mxu0 0.0
    %1932 = vmatprep.subr.mxu0 0.0
    %1933 = vmatpush1.msra.mxu0 %v1119
    %1934 = vmatprep.subr.mxu0 0.0
    %1935 = vmatpush1.msra.mxu0 %v1118
    %1936 = vmatprep.subr.mxu0 0.0
    %1937 = vmatpush1.msra.mxu0 %v1117
    %1938 = vmatprep.subr.mxu0 0.0
    %1939 = vmatpush1.msra.mxu0 %v1116
    %1940 = vmatprep.subr.mxu0 0.0
    %1941 = vmatpush2.msra.mxu0 0.0
    %1942 = vmatprep.subr.mxu0 0.0
    %1943 = vmatpush2.msra.mxu0 0.0
    %1944 = vmatprep.subr.mxu0 0.0
    %1945 = vmatpush2.msra.mxu0 0.0
    %1946 = vmatprep.subr.mxu0 0.0
    %1947 = vmatpush2.msra.mxu0 0.0
    %1948 = vmatprep.subr.mxu0 0.0
    %1949 = vmatpush2.msra.mxu0 0.0
    %1950 = vmatprep.subr.mxu0 0.0
    %1951 = vmatpush2.msra.mxu0 0.0
    %1952 = vmatprep.subr.mxu0 0.0
    %1953 = vmatpush2.msra.mxu0 0.0
    %1954 = vmatprep.subr.mxu0 0.0
    %1955 = vmatpush2.msra.mxu0 0.0
    %1956 = vmatprep.subr.mxu0 0.0
    %1957 = vmatpush2.msra.mxu0 0.0
    %1958 = vmatprep.subr.mxu0 0.0
    %1959 = vmatpush2.msra.mxu0 0.0
    %1960 = vmatprep.subr.mxu0 0.0
    %1961 = vmatpush2.msra.mxu0 0.0
    %1962 = vmatprep.subr.mxu0 0.0
    %1963 = vmatpush2.msra.mxu0 0.0
    %1964 = vmatprep.subr.mxu0 0.0
    %1965 = vmatpush2.msra.mxu0 0.0
    %1966 = vmatprep.subr.mxu0 0.0
    %1967 = vmatpush2.msra.mxu0 0.0
    %1968 = vmatprep.subr.mxu0 0.0
    %1969 = vmatpush2.msra.mxu0 0.0
    %1970 = vmatprep.subr.mxu0 0.0
    %1971 = vmatpush2.msra.mxu0 0.0
    %1972 = vmatprep.mubr.f32.mxu0 0.0
    %1973 = vmatmul.mubr.f32.gmra.mxu0 %v1906
    %v1974 = vpop.f32.mrf.mxu0
    %v1975 = vadd.f32 %v1193, %v1974
    %v1976 = vpop.f32.mrf.mxu0
    %1977 = vdwg.mxu0
    %v1978 = vxor.u32 %v1975, 2147483648
    %v1979 = vmul.f32 %v1978, 1.442695
    %v1980 = vpow.pop %v1979
    %v1981 = vadd.f32 %v1980, 1.0
    %v1982 = vrcp.pop %v1981
    %v1983 = vmul.f32 1.0, %v1982
    %v1984 = vtanh.pop %v1975
    %v1985 = vmul.f32 %v1983, %v1894
    %1987 = vrot.lane.b32.xlu0 %v1984, 64
    %v1988 = vpop.permute.xlu0 %1987
    %v1990 = vmul.f32 %v1983, %v1988
    %1992 = vrot.lane.b32.xlu0 %v1990, 32
    %v1993 = vpop.permute.xlu0 %1992
    %v1995 = vadd.f32 %v1985, %v1993
    %v1996 = vtanh.pop %v1995
    %1998 = vrot.lane.b32.xlu0 %v1996, 64
    %v1999 = vpop.permute.xlu0 %1998
    %v2001 = vmul.f32 %v1983, %v1999
    %2003 = vrot.lane.b32.xlu0 %v2001, 32
    %v2004 = vpop.permute.xlu0 %2003
    %2006 = vst.msk [vmem:[#allocation2 + $0x7] sm:$0x1] %vm1298, %v2004
    %v2007 = vsel %vm167, %v2004, 0
    %2009 = vmatprep.subr.mxu0 0.0
    %2010 = vmatpush1.msra.mxu0 0.0
    %2011 = vmatprep.subr.mxu0 0.0
    %2012 = vmatpush1.msra.mxu0 0.0
    %2013 = vmatprep.subr.mxu0 0.0
    %2014 = vmatpush1.msra.mxu0 0.0
    %2015 = vmatprep.subr.mxu0 0.0
    %2016 = vmatpush1.msra.mxu0 0.0
    %2017 = vmatprep.subr.mxu0 0.0
    %2018 = vmatpush1.msra.mxu0 0.0
    %2019 = vmatprep.subr.mxu0 0.0
    %2020 = vmatpush1.msra.mxu0 0.0
    %2021 = vmatprep.subr.mxu0 0.0
    %2022 = vmatpush1.msra.mxu0 0.0
    %2023 = vmatprep.subr.mxu0 0.0
    %2024 = vmatpush1.msra.mxu0 0.0
    %2025 = vmatprep.subr.mxu0 0.0
    %2026 = vmatpush1.msra.mxu0 0.0
    %2027 = vmatprep.subr.mxu0 0.0
    %2028 = vmatpush1.msra.mxu0 0.0
    %2029 = vmatprep.subr.mxu0 0.0
    %2030 = vmatpush1.msra.mxu0 0.0
    %2031 = vmatprep.subr.mxu0 0.0
    %2032 = vmatpush1.msra.mxu0 0.0
    %2033 = vmatprep.subr.mxu0 0.0
    %2034 = vmatpush1.msra.mxu0 %v1119
    %2035 = vmatprep.subr.mxu0 0.0
    %2036 = vmatpush1.msra.mxu0 %v1118
    %2037 = vmatprep.subr.mxu0 0.0
    %2038 = vmatpush1.msra.mxu0 %v1117
    %2039 = vmatprep.subr.mxu0 0.0
    %2040 = vmatpush1.msra.mxu0 %v1116
    %2041 = vmatprep.subr.mxu0 0.0
    %2042 = vmatpush2.msra.mxu0 0.0
    %2043 = vmatprep.subr.mxu0 0.0
    %2044 = vmatpush2.msra.mxu0 0.0
    %2045 = vmatprep.subr.mxu0 0.0
    %2046 = vmatpush2.msra.mxu0 0.0
    %2047 = vmatprep.subr.mxu0 0.0
    %2048 = vmatpush2.msra.mxu0 0.0
    %2049 = vmatprep.subr.mxu0 0.0
    %2050 = vmatpush2.msra.mxu0 0.0
    %2051 = vmatprep.subr.mxu0 0.0
    %2052 = vmatpush2.msra.mxu0 0.0
    %2053 = vmatprep.subr.mxu0 0.0
    %2054 = vmatpush2.msra.mxu0 0.0
    %2055 = vmatprep.subr.mxu0 0.0
    %2056 = vmatpush2.msra.mxu0 0.0
    %2057 = vmatprep.subr.mxu0 0.0
    %2058 = vmatpush2.msra.mxu0 0.0
    %2059 = vmatprep.subr.mxu0 0.0
    %2060 = vmatpush2.msra.mxu0 0.0
    %2061 = vmatprep.subr.mxu0 0.0
    %2062 = vmatpush2.msra.mxu0 0.0
    %2063 = vmatprep.subr.mxu0 0.0
    %2064 = vmatpush2.msra.mxu0 0.0
    %2065 = vmatprep.subr.mxu0 0.0
    %2066 = vmatpush2.msra.mxu0 0.0
    %2067 = vmatprep.subr.mxu0 0.0
    %2068 = vmatpush2.msra.mxu0 0.0
    %2069 = vmatprep.subr.mxu0 0.0
    %2070 = vmatpush2.msra.mxu0 0.0
    %2071 = vmatprep.subr.mxu0 0.0
    %2072 = vmatpush2.msra.mxu0 0.0
    %2073 = vmatprep.mubr.f32.mxu0 0.0
    %2074 = vmatmul.mubr.f32.gmra.mxu0 %v2007
    %v2075 = vpop.f32.mrf.mxu0
    %v2076 = vadd.f32 %v1193, %v2075
    %v2077 = vpop.f32.mrf.mxu0
    %2078 = vdwg.mxu0
    %v2079 = vxor.u32 %v2076, 2147483648
    %v2080 = vmul.f32 %v2079, 1.442695
    %v2081 = vpow.pop %v2080
    %v2082 = vadd.f32 %v2081, 1.0
    %v2083 = vrcp.pop %v2082
    %v2084 = vmul.f32 1.0, %v2083
    %v2085 = vtanh.pop %v2076
    %v2086 = vmul.f32 %v2084, %v1995
    %2088 = vrot.lane.b32.xlu0 %v2085, 64
    %v2089 = vpop.permute.xlu0 %2088
    %v2091 = vmul.f32 %v2084, %v2089
    %2093 = vrot.lane.b32.xlu0 %v2091, 32
    %v2094 = vpop.permute.xlu0 %2093
    %v2096 = vadd.f32 %v2086, %v2094
    %v2097 = vtanh.pop %v2096
    %2099 = vrot.lane.b32.xlu0 %v2097, 64
    %v2100 = vpop.permute.xlu0 %2099
    %v2102 = vmul.f32 %v2084, %v2100
    %2104 = vrot.lane.b32.xlu0 %v2102, 32
    %v2105 = vpop.permute.xlu0 %2104
    %2107 = vst.msk [vmem:[#allocation2 + $0x8] sm:$0x1] %vm1298, %v2105
    %v2108 = vsel %vm167, %v2105, 0
    %2110 = vmatprep.subr.mxu0 0.0
    %2111 = vmatpush1.msra.mxu0 0.0
    %2112 = vmatprep.subr.mxu0 0.0
    %2113 = vmatpush1.msra.mxu0 0.0
    %2114 = vmatprep.subr.mxu0 0.0
    %2115 = vmatpush1.msra.mxu0 0.0
    %2116 = vmatprep.subr.mxu0 0.0
    %2117 = vmatpush1.msra.mxu0 0.0
    %2118 = vmatprep.subr.mxu0 0.0
    %2119 = vmatpush1.msra.mxu0 0.0
    %2120 = vmatprep.subr.mxu0 0.0
    %2121 = vmatpush1.msra.mxu0 0.0
    %2122 = vmatprep.subr.mxu0 0.0
    %2123 = vmatpush1.msra.mxu0 0.0
    %2124 = vmatprep.subr.mxu0 0.0
    %2125 = vmatpush1.msra.mxu0 0.0
    %2126 = vmatprep.subr.mxu0 0.0
    %2127 = vmatpush1.msra.mxu0 0.0
    %2128 = vmatprep.subr.mxu0 0.0
    %2129 = vmatpush1.msra.mxu0 0.0
    %2130 = vmatprep.subr.mxu0 0.0
    %2131 = vmatpush1.msra.mxu0 0.0
    %2132 = vmatprep.subr.mxu0 0.0
    %2133 = vmatpush1.msra.mxu0 0.0
    %2134 = vmatprep.subr.mxu0 0.0
    %2135 = vmatpush1.msra.mxu0 %v1119
    %2136 = vmatprep.subr.mxu0 0.0
    %2137 = vmatpush1.msra.mxu0 %v1118
    %2138 = vmatprep.subr.mxu0 0.0
    %2139 = vmatpush1.msra.mxu0 %v1117
    %2140 = vmatprep.subr.mxu0 0.0
    %2141 = vmatpush1.msra.mxu0 %v1116
    %2142 = vmatprep.subr.mxu0 0.0
    %2143 = vmatpush2.msra.mxu0 0.0
    %2144 = vmatprep.subr.mxu0 0.0
    %2145 = vmatpush2.msra.mxu0 0.0
    %2146 = vmatprep.subr.mxu0 0.0
    %2147 = vmatpush2.msra.mxu0 0.0
    %2148 = vmatprep.subr.mxu0 0.0
    %2149 = vmatpush2.msra.mxu0 0.0
    %2150 = vmatprep.subr.mxu0 0.0
    %2151 = vmatpush2.msra.mxu0 0.0
    %2152 = vmatprep.subr.mxu0 0.0
    %2153 = vmatpush2.msra.mxu0 0.0
    %2154 = vmatprep.subr.mxu0 0.0
    %2155 = vmatpush2.msra.mxu0 0.0
    %2156 = vmatprep.subr.mxu0 0.0
    %2157 = vmatpush2.msra.mxu0 0.0
    %2158 = vmatprep.subr.mxu0 0.0
    %2159 = vmatpush2.msra.mxu0 0.0
    %2160 = vmatprep.subr.mxu0 0.0
    %2161 = vmatpush2.msra.mxu0 0.0
    %2162 = vmatprep.subr.mxu0 0.0
    %2163 = vmatpush2.msra.mxu0 0.0
    %2164 = vmatprep.subr.mxu0 0.0
    %2165 = vmatpush2.msra.mxu0 0.0
    %2166 = vmatprep.subr.mxu0 0.0
    %2167 = vmatpush2.msra.mxu0 0.0
    %2168 = vmatprep.subr.mxu0 0.0
    %2169 = vmatpush2.msra.mxu0 0.0
    %2170 = vmatprep.subr.mxu0 0.0
    %2171 = vmatpush2.msra.mxu0 0.0
    %2172 = vmatprep.subr.mxu0 0.0
    %2173 = vmatpush2.msra.mxu0 0.0
    %2174 = vmatprep.mubr.f32.mxu0 0.0
    %2175 = vmatmul.mubr.f32.gmra.mxu0 %v2108
    %v2176 = vpop.f32.mrf.mxu0
    %v2177 = vadd.f32 %v1193, %v2176
    %v2178 = vpop.f32.mrf.mxu0
    %2179 = vdwg.mxu0
    %v2180 = vxor.u32 %v2177, 2147483648
    %v2181 = vmul.f32 %v2180, 1.442695
    %v2182 = vpow.pop %v2181
    %v2183 = vadd.f32 %v2182, 1.0
    %v2184 = vrcp.pop %v2183
    %v2185 = vmul.f32 1.0, %v2184
    %v2186 = vtanh.pop %v2177
    %v2187 = vmul.f32 %v2185, %v2096
    %2189 = vrot.lane.b32.xlu0 %v2186, 64
    %v2190 = vpop.permute.xlu0 %2189
    %v2192 = vmul.f32 %v2185, %v2190
    %2194 = vrot.lane.b32.xlu0 %v2192, 32
    %v2195 = vpop.permute.xlu0 %2194
    %v2197 = vadd.f32 %v2187, %v2195
    %v2198 = vtanh.pop %v2197
    %2200 = vrot.lane.b32.xlu0 %v2198, 64
    %v2201 = vpop.permute.xlu0 %2200
    %v2203 = vmul.f32 %v2185, %v2201
    %2205 = vrot.lane.b32.xlu0 %v2203, 32
    %v2206 = vpop.permute.xlu0 %2205
    %2208 = vst.msk [vmem:[#allocation2 + $0x9] sm:$0x1] %vm1298, %v2206
    %v2209 = vsel %vm167, %v2206, 0
    %2211 = vmatprep.subr.mxu0 0.0
    %2212 = vmatpush1.msra.mxu0 0.0
    %2213 = vmatprep.subr.mxu0 0.0
    %2214 = vmatpush1.msra.mxu0 0.0
    %2215 = vmatprep.subr.mxu0 0.0
    %2216 = vmatpush1.msra.mxu0 0.0
    %2217 = vmatprep.subr.mxu0 0.0
    %2218 = vmatpush1.msra.mxu0 0.0
    %2219 = vmatprep.subr.mxu0 0.0
    %2220 = vmatpush1.msra.mxu0 0.0
    %2221 = vmatprep.subr.mxu0 0.0
    %2222 = vmatpush1.msra.mxu0 0.0
    %2223 = vmatprep.subr.mxu0 0.0
    %2224 = vmatpush1.msra.mxu0 0.0
    %2225 = vmatprep.subr.mxu0 0.0
    %2226 = vmatpush1.msra.mxu0 0.0
    %2227 = vmatprep.subr.mxu0 0.0
    %2228 = vmatpush1.msra.mxu0 0.0
    %2229 = vmatprep.subr.mxu0 0.0
    %2230 = vmatpush1.msra.mxu0 0.0
    %2231 = vmatprep.subr.mxu0 0.0
    %2232 = vmatpush1.msra.mxu0 0.0
    %2233 = vmatprep.subr.mxu0 0.0
    %2234 = vmatpush1.msra.mxu0 0.0
    %2235 = vmatprep.subr.mxu0 0.0
    %2236 = vmatpush1.msra.mxu0 %v1119
    %2237 = vmatprep.subr.mxu0 0.0
    %2238 = vmatpush1.msra.mxu0 %v1118
    %2239 = vmatprep.subr.mxu0 0.0
    %2240 = vmatpush1.msra.mxu0 %v1117
    %2241 = vmatprep.subr.mxu0 0.0
    %2242 = vmatpush1.msra.mxu0 %v1116
    %2243 = vmatprep.subr.mxu0 0.0
    %2244 = vmatpush2.msra.mxu0 0.0
    %2245 = vmatprep.subr.mxu0 0.0
    %2246 = vmatpush2.msra.mxu0 0.0
    %2247 = vmatprep.subr.mxu0 0.0
    %2248 = vmatpush2.msra.mxu0 0.0
    %2249 = vmatprep.subr.mxu0 0.0
    %2250 = vmatpush2.msra.mxu0 0.0
    %2251 = vmatprep.subr.mxu0 0.0
    %2252 = vmatpush2.msra.mxu0 0.0
    %2253 = vmatprep.subr.mxu0 0.0
    %2254 = vmatpush2.msra.mxu0 0.0
    %2255 = vmatprep.subr.mxu0 0.0
    %2256 = vmatpush2.msra.mxu0 0.0
    %2257 = vmatprep.subr.mxu0 0.0
    %2258 = vmatpush2.msra.mxu0 0.0
    %2259 = vmatprep.subr.mxu0 0.0
    %2260 = vmatpush2.msra.mxu0 0.0
    %2261 = vmatprep.subr.mxu0 0.0
    %2262 = vmatpush2.msra.mxu0 0.0
    %2263 = vmatprep.subr.mxu0 0.0
    %2264 = vmatpush2.msra.mxu0 0.0
    %2265 = vmatprep.subr.mxu0 0.0
    %2266 = vmatpush2.msra.mxu0 0.0
    %2267 = vmatprep.subr.mxu0 0.0
    %2268 = vmatpush2.msra.mxu0 0.0
    %2269 = vmatprep.subr.mxu0 0.0
    %2270 = vmatpush2.msra.mxu0 0.0
    %2271 = vmatprep.subr.mxu0 0.0
    %2272 = vmatpush2.msra.mxu0 0.0
    %2273 = vmatprep.subr.mxu0 0.0
    %2274 = vmatpush2.msra.mxu0 0.0
    %2275 = vmatprep.mubr.f32.mxu0 0.0
    %2276 = vmatmul.mubr.f32.gmra.mxu0 %v2209
    %v2277 = vpop.f32.mrf.mxu0
    %v2278 = vadd.f32 %v1193, %v2277
    %v2279 = vpop.f32.mrf.mxu0
    %2280 = vdwg.mxu0
    %v2281 = vxor.u32 %v2278, 2147483648
    %v2282 = vmul.f32 %v2281, 1.442695
    %v2283 = vpow.pop %v2282
    %v2284 = vadd.f32 %v2283, 1.0
    %v2285 = vrcp.pop %v2284
    %v2286 = vmul.f32 1.0, %v2285
    %v2287 = vtanh.pop %v2278
    %v2288 = vmul.f32 %v2286, %v2197
    %2290 = vrot.lane.b32.xlu0 %v2287, 64
    %v2291 = vpop.permute.xlu0 %2290
    %v2293 = vmul.f32 %v2286, %v2291
    %2295 = vrot.lane.b32.xlu0 %v2293, 32
    %v2296 = vpop.permute.xlu0 %2295
    %v2298 = vadd.f32 %v2288, %v2296
    %v2299 = vtanh.pop %v2298
    %2301 = vrot.lane.b32.xlu0 %v2299, 64
    %v2302 = vpop.permute.xlu0 %2301
    %v2304 = vmul.f32 %v2286, %v2302
    %2306 = vrot.lane.b32.xlu0 %v2304, 32
    %v2307 = vpop.permute.xlu0 %2306
    %2309 = vst.msk [vmem:[#allocation2 + $0xa] sm:$0x1] %vm1298, %v2307
    %v2310 = vsel %vm167, %v2307, 0
    %2312 = vmatprep.subr.mxu0 0.0
    %2313 = vmatpush1.msra.mxu0 0.0
    %2314 = vmatprep.subr.mxu0 0.0
    %2315 = vmatpush1.msra.mxu0 0.0
    %2316 = vmatprep.subr.mxu0 0.0
    %2317 = vmatpush1.msra.mxu0 0.0
    %2318 = vmatprep.subr.mxu0 0.0
    %2319 = vmatpush1.msra.mxu0 0.0
    %2320 = vmatprep.subr.mxu0 0.0
    %2321 = vmatpush1.msra.mxu0 0.0
    %2322 = vmatprep.subr.mxu0 0.0
    %2323 = vmatpush1.msra.mxu0 0.0
    %2324 = vmatprep.subr.mxu0 0.0
    %2325 = vmatpush1.msra.mxu0 0.0
    %2326 = vmatprep.subr.mxu0 0.0
    %2327 = vmatpush1.msra.mxu0 0.0
    %2328 = vmatprep.subr.mxu0 0.0
    %2329 = vmatpush1.msra.mxu0 0.0
    %2330 = vmatprep.subr.mxu0 0.0
    %2331 = vmatpush1.msra.mxu0 0.0
    %2332 = vmatprep.subr.mxu0 0.0
    %2333 = vmatpush1.msra.mxu0 0.0
    %2334 = vmatprep.subr.mxu0 0.0
    %2335 = vmatpush1.msra.mxu0 0.0
    %2336 = vmatprep.subr.mxu0 0.0
    %2337 = vmatpush1.msra.mxu0 %v1119
    %2338 = vmatprep.subr.mxu0 0.0
    %2339 = vmatpush1.msra.mxu0 %v1118
    %2340 = vmatprep.subr.mxu0 0.0
    %2341 = vmatpush1.msra.mxu0 %v1117
    %2342 = vmatprep.subr.mxu0 0.0
    %2343 = vmatpush1.msra.mxu0 %v1116
    %2344 = vmatprep.subr.mxu0 0.0
    %2345 = vmatpush2.msra.mxu0 0.0
    %2346 = vmatprep.subr.mxu0 0.0
    %2347 = vmatpush2.msra.mxu0 0.0
    %2348 = vmatprep.subr.mxu0 0.0
    %2349 = vmatpush2.msra.mxu0 0.0
    %2350 = vmatprep.subr.mxu0 0.0
    %2351 = vmatpush2.msra.mxu0 0.0
    %2352 = vmatprep.subr.mxu0 0.0
    %2353 = vmatpush2.msra.mxu0 0.0
    %2354 = vmatprep.subr.mxu0 0.0
    %2355 = vmatpush2.msra.mxu0 0.0
    %2356 = vmatprep.subr.mxu0 0.0
    %2357 = vmatpush2.msra.mxu0 0.0
    %2358 = vmatprep.subr.mxu0 0.0
    %2359 = vmatpush2.msra.mxu0 0.0
    %2360 = vmatprep.subr.mxu0 0.0
    %2361 = vmatpush2.msra.mxu0 0.0
    %2362 = vmatprep.subr.mxu0 0.0
    %2363 = vmatpush2.msra.mxu0 0.0
    %2364 = vmatprep.subr.mxu0 0.0
    %2365 = vmatpush2.msra.mxu0 0.0
    %2366 = vmatprep.subr.mxu0 0.0
    %2367 = vmatpush2.msra.mxu0 0.0
    %2368 = vmatprep.subr.mxu0 0.0
    %2369 = vmatpush2.msra.mxu0 0.0
    %2370 = vmatprep.subr.mxu0 0.0
    %2371 = vmatpush2.msra.mxu0 0.0
    %2372 = vmatprep.subr.mxu0 0.0
    %2373 = vmatpush2.msra.mxu0 0.0
    %2374 = vmatprep.subr.mxu0 0.0
    %2375 = vmatpush2.msra.mxu0 0.0
    %2376 = vmatprep.mubr.f32.mxu0 0.0
    %2377 = vmatmul.mubr.f32.gmra.mxu0 %v2310
    %v2378 = vpop.f32.mrf.mxu0
    %v2379 = vadd.f32 %v1193, %v2378
    %v2380 = vpop.f32.mrf.mxu0
    %2381 = vdwg.mxu0
    %v2382 = vxor.u32 %v2379, 2147483648
    %v2383 = vmul.f32 %v2382, 1.442695
    %v2384 = vpow.pop %v2383
    %v2385 = vadd.f32 %v2384, 1.0
    %v2386 = vrcp.pop %v2385
    %v2387 = vmul.f32 1.0, %v2386
    %v2388 = vtanh.pop %v2379
    %v2389 = vmul.f32 %v2387, %v2298
    %2391 = vrot.lane.b32.xlu0 %v2388, 64
    %v2392 = vpop.permute.xlu0 %2391
    %v2394 = vmul.f32 %v2387, %v2392
    %2396 = vrot.lane.b32.xlu0 %v2394, 32
    %v2397 = vpop.permute.xlu0 %2396
    %v2399 = vadd.f32 %v2389, %v2397
    %v2400 = vtanh.pop %v2399
    %2402 = vrot.lane.b32.xlu0 %v2400, 64
    %v2403 = vpop.permute.xlu0 %2402
    %v2405 = vmul.f32 %v2387, %v2403
    %2407 = vrot.lane.b32.xlu0 %v2405, 32
    %v2408 = vpop.permute.xlu0 %2407
    %2410 = vst.msk [vmem:[#allocation2 + $0xb] sm:$0x1] %vm1298, %v2408
    %v2411 = vsel %vm167, %v2408, 0
    %2413 = vmatprep.subr.mxu0 0.0
    %2414 = vmatpush1.msra.mxu0 0.0
    %2415 = vmatprep.subr.mxu0 0.0
    %2416 = vmatpush1.msra.mxu0 0.0
    %2417 = vmatprep.subr.mxu0 0.0
    %2418 = vmatpush1.msra.mxu0 0.0
    %2419 = vmatprep.subr.mxu0 0.0
    %2420 = vmatpush1.msra.mxu0 0.0
    %2421 = vmatprep.subr.mxu0 0.0
    %2422 = vmatpush1.msra.mxu0 0.0
    %2423 = vmatprep.subr.mxu0 0.0
    %2424 = vmatpush1.msra.mxu0 0.0
    %2425 = vmatprep.subr.mxu0 0.0
    %2426 = vmatpush1.msra.mxu0 0.0
    %2427 = vmatprep.subr.mxu0 0.0
    %2428 = vmatpush1.msra.mxu0 0.0
    %2429 = vmatprep.subr.mxu0 0.0
    %2430 = vmatpush1.msra.mxu0 0.0
    %2431 = vmatprep.subr.mxu0 0.0
    %2432 = vmatpush1.msra.mxu0 0.0
    %2433 = vmatprep.subr.mxu0 0.0
    %2434 = vmatpush1.msra.mxu0 0.0
    %2435 = vmatprep.subr.mxu0 0.0
    %2436 = vmatpush1.msra.mxu0 0.0
    %2437 = vmatprep.subr.mxu0 0.0
    %2438 = vmatpush1.msra.mxu0 %v1119
    %2439 = vmatprep.subr.mxu0 0.0
    %2440 = vmatpush1.msra.mxu0 %v1118
    %2441 = vmatprep.subr.mxu0 0.0
    %2442 = vmatpush1.msra.mxu0 %v1117
    %2443 = vmatprep.subr.mxu0 0.0
    %2444 = vmatpush1.msra.mxu0 %v1116
    %2445 = vmatprep.subr.mxu0 0.0
    %2446 = vmatpush2.msra.mxu0 0.0
    %2447 = vmatprep.subr.mxu0 0.0
    %2448 = vmatpush2.msra.mxu0 0.0
    %2449 = vmatprep.subr.mxu0 0.0
    %2450 = vmatpush2.msra.mxu0 0.0
    %2451 = vmatprep.subr.mxu0 0.0
    %2452 = vmatpush2.msra.mxu0 0.0
    %2453 = vmatprep.subr.mxu0 0.0
    %2454 = vmatpush2.msra.mxu0 0.0
    %2455 = vmatprep.subr.mxu0 0.0
    %2456 = vmatpush2.msra.mxu0 0.0
    %2457 = vmatprep.subr.mxu0 0.0
    %2458 = vmatpush2.msra.mxu0 0.0
    %2459 = vmatprep.subr.mxu0 0.0
    %2460 = vmatpush2.msra.mxu0 0.0
    %2461 = vmatprep.subr.mxu0 0.0
    %2462 = vmatpush2.msra.mxu0 0.0
    %2463 = vmatprep.subr.mxu0 0.0
    %2464 = vmatpush2.msra.mxu0 0.0
    %2465 = vmatprep.subr.mxu0 0.0
    %2466 = vmatpush2.msra.mxu0 0.0
    %2467 = vmatprep.subr.mxu0 0.0
    %2468 = vmatpush2.msra.mxu0 0.0
    %2469 = vmatprep.subr.mxu0 0.0
    %2470 = vmatpush2.msra.mxu0 0.0
    %2471 = vmatprep.subr.mxu0 0.0
    %2472 = vmatpush2.msra.mxu0 0.0
    %2473 = vmatprep.subr.mxu0 0.0
    %2474 = vmatpush2.msra.mxu0 0.0
    %2475 = vmatprep.subr.mxu0 0.0
    %2476 = vmatpush2.msra.mxu0 0.0
    %2477 = vmatprep.mubr.f32.mxu0 0.0
    %2478 = vmatmul.mubr.f32.gmra.mxu0 %v2411
    %v2479 = vpop.f32.mrf.mxu0
    %v2480 = vadd.f32 %v1193, %v2479
    %v2481 = vpop.f32.mrf.mxu0
    %2482 = vdwg.mxu0
    %v2483 = vxor.u32 %v2480, 2147483648
    %v2484 = vmul.f32 %v2483, 1.442695
    %v2485 = vpow.pop %v2484
    %v2486 = vadd.f32 %v2485, 1.0
    %v2487 = vrcp.pop %v2486
    %v2488 = vmul.f32 1.0, %v2487
    %v2489 = vtanh.pop %v2480
    %v2490 = vmul.f32 %v2488, %v2399
    %2492 = vrot.lane.b32.xlu0 %v2489, 64
    %v2493 = vpop.permute.xlu0 %2492
    %v2495 = vmul.f32 %v2488, %v2493
    %2497 = vrot.lane.b32.xlu0 %v2495, 32
    %v2498 = vpop.permute.xlu0 %2497
    %v2500 = vadd.f32 %v2490, %v2498
    %v2501 = vtanh.pop %v2500
    %2503 = vrot.lane.b32.xlu0 %v2501, 64
    %v2504 = vpop.permute.xlu0 %2503
    %v2506 = vmul.f32 %v2488, %v2504
    %2508 = vrot.lane.b32.xlu0 %v2506, 32
    %v2509 = vpop.permute.xlu0 %2508
    %2511 = vst.msk [vmem:[#allocation2 + $0xc] sm:$0x1] %vm1298, %v2509
    %v2512 = vsel %vm167, %v2509, 0
    %2514 = vmatprep.subr.mxu0 0.0
    %2515 = vmatpush1.msra.mxu0 0.0
    %2516 = vmatprep.subr.mxu0 0.0
    %2517 = vmatpush1.msra.mxu0 0.0
    %2518 = vmatprep.subr.mxu0 0.0
    %2519 = vmatpush1.msra.mxu0 0.0
    %2520 = vmatprep.subr.mxu0 0.0
    %2521 = vmatpush1.msra.mxu0 0.0
    %2522 = vmatprep.subr.mxu0 0.0
    %2523 = vmatpush1.msra.mxu0 0.0
    %2524 = vmatprep.subr.mxu0 0.0
    %2525 = vmatpush1.msra.mxu0 0.0
    %2526 = vmatprep.subr.mxu0 0.0
    %2527 = vmatpush1.msra.mxu0 0.0
    %2528 = vmatprep.subr.mxu0 0.0
    %2529 = vmatpush1.msra.mxu0 0.0
    %2530 = vmatprep.subr.mxu0 0.0
    %2531 = vmatpush1.msra.mxu0 0.0
    %2532 = vmatprep.subr.mxu0 0.0
    %2533 = vmatpush1.msra.mxu0 0.0
    %2534 = vmatprep.subr.mxu0 0.0
    %2535 = vmatpush1.msra.mxu0 0.0
    %2536 = vmatprep.subr.mxu0 0.0
    %2537 = vmatpush1.msra.mxu0 0.0
    %2538 = vmatprep.subr.mxu0 0.0
    %2539 = vmatpush1.msra.mxu0 %v1119
    %2540 = vmatprep.subr.mxu0 0.0
    %2541 = vmatpush1.msra.mxu0 %v1118
    %2542 = vmatprep.subr.mxu0 0.0
    %2543 = vmatpush1.msra.mxu0 %v1117
    %2544 = vmatprep.subr.mxu0 0.0
    %2545 = vmatpush1.msra.mxu0 %v1116
    %2546 = vmatprep.subr.mxu0 0.0
    %2547 = vmatpush2.msra.mxu0 0.0
    %2548 = vmatprep.subr.mxu0 0.0
    %2549 = vmatpush2.msra.mxu0 0.0
    %2550 = vmatprep.subr.mxu0 0.0
    %2551 = vmatpush2.msra.mxu0 0.0
    %2552 = vmatprep.subr.mxu0 0.0
    %2553 = vmatpush2.msra.mxu0 0.0
    %2554 = vmatprep.subr.mxu0 0.0
    %2555 = vmatpush2.msra.mxu0 0.0
    %2556 = vmatprep.subr.mxu0 0.0
    %2557 = vmatpush2.msra.mxu0 0.0
    %2558 = vmatprep.subr.mxu0 0.0
    %2559 = vmatpush2.msra.mxu0 0.0
    %2560 = vmatprep.subr.mxu0 0.0
    %2561 = vmatpush2.msra.mxu0 0.0
    %2562 = vmatprep.subr.mxu0 0.0
    %2563 = vmatpush2.msra.mxu0 0.0
    %2564 = vmatprep.subr.mxu0 0.0
    %2565 = vmatpush2.msra.mxu0 0.0
    %2566 = vmatprep.subr.mxu0 0.0
    %2567 = vmatpush2.msra.mxu0 0.0
    %2568 = vmatprep.subr.mxu0 0.0
    %2569 = vmatpush2.msra.mxu0 0.0
    %2570 = vmatprep.subr.mxu0 0.0
    %2571 = vmatpush2.msra.mxu0 0.0
    %2572 = vmatprep.subr.mxu0 0.0
    %2573 = vmatpush2.msra.mxu0 0.0
    %2574 = vmatprep.subr.mxu0 0.0
    %2575 = vmatpush2.msra.mxu0 0.0
    %2576 = vmatprep.subr.mxu0 0.0
    %2577 = vmatpush2.msra.mxu0 0.0
    %2578 = vmatprep.mubr.f32.mxu0 0.0
    %2579 = vmatmul.mubr.f32.gmra.mxu0 %v2512
    %v2580 = vpop.f32.mrf.mxu0
    %v2581 = vadd.f32 %v1193, %v2580
    %v2582 = vpop.f32.mrf.mxu0
    %2583 = vdwg.mxu0
    %v2584 = vxor.u32 %v2581, 2147483648
    %v2585 = vmul.f32 %v2584, 1.442695
    %v2586 = vpow.pop %v2585
    %v2587 = vadd.f32 %v2586, 1.0
    %v2588 = vrcp.pop %v2587
    %v2589 = vmul.f32 1.0, %v2588
    %v2590 = vtanh.pop %v2581
    %v2591 = vmul.f32 %v2589, %v2500
    %2593 = vrot.lane.b32.xlu0 %v2590, 64
    %v2594 = vpop.permute.xlu0 %2593
    %v2596 = vmul.f32 %v2589, %v2594
    %2598 = vrot.lane.b32.xlu0 %v2596, 32
    %v2599 = vpop.permute.xlu0 %2598
    %v2601 = vadd.f32 %v2591, %v2599
    %v2602 = vtanh.pop %v2601
    %2604 = vrot.lane.b32.xlu0 %v2602, 64
    %v2605 = vpop.permute.xlu0 %2604
    %v2607 = vmul.f32 %v2589, %v2605
    %2609 = vrot.lane.b32.xlu0 %v2607, 32
    %v2610 = vpop.permute.xlu0 %2609
    %2612 = vst.msk [vmem:[#allocation2 + $0xd] sm:$0x1] %vm1298, %v2610
    %v2613 = vsel %vm167, %v2610, 0
    %2615 = vmatprep.subr.mxu0 0.0
    %2616 = vmatpush1.msra.mxu0 0.0
    %2617 = vmatprep.subr.mxu0 0.0
    %2618 = vmatpush1.msra.mxu0 0.0
    %2619 = vmatprep.subr.mxu0 0.0
    %2620 = vmatpush1.msra.mxu0 0.0
    %2621 = vmatprep.subr.mxu0 0.0
    %2622 = vmatpush1.msra.mxu0 0.0
    %2623 = vmatprep.subr.mxu0 0.0
    %2624 = vmatpush1.msra.mxu0 0.0
    %2625 = vmatprep.subr.mxu0 0.0
    %2626 = vmatpush1.msra.mxu0 0.0
    %2627 = vmatprep.subr.mxu0 0.0
    %2628 = vmatpush1.msra.mxu0 0.0
    %2629 = vmatprep.subr.mxu0 0.0
    %2630 = vmatpush1.msra.mxu0 0.0
    %2631 = vmatprep.subr.mxu0 0.0
    %2632 = vmatpush1.msra.mxu0 0.0
    %2633 = vmatprep.subr.mxu0 0.0
    %2634 = vmatpush1.msra.mxu0 0.0
    %2635 = vmatprep.subr.mxu0 0.0
    %2636 = vmatpush1.msra.mxu0 0.0
    %2637 = vmatprep.subr.mxu0 0.0
    %2638 = vmatpush1.msra.mxu0 0.0
    %2639 = vmatprep.subr.mxu0 0.0
    %2640 = vmatpush1.msra.mxu0 %v1119
    %2641 = vmatprep.subr.mxu0 0.0
    %2642 = vmatpush1.msra.mxu0 %v1118
    %2643 = vmatprep.subr.mxu0 0.0
    %2644 = vmatpush1.msra.mxu0 %v1117
    %2645 = vmatprep.subr.mxu0 0.0
    %2646 = vmatpush1.msra.mxu0 %v1116
    %2647 = vmatprep.subr.mxu0 0.0
    %2648 = vmatpush2.msra.mxu0 0.0
    %2649 = vmatprep.subr.mxu0 0.0
    %2650 = vmatpush2.msra.mxu0 0.0
    %2651 = vmatprep.subr.mxu0 0.0
    %2652 = vmatpush2.msra.mxu0 0.0
    %2653 = vmatprep.subr.mxu0 0.0
    %2654 = vmatpush2.msra.mxu0 0.0
    %2655 = vmatprep.subr.mxu0 0.0
    %2656 = vmatpush2.msra.mxu0 0.0
    %2657 = vmatprep.subr.mxu0 0.0
    %2658 = vmatpush2.msra.mxu0 0.0
    %2659 = vmatprep.subr.mxu0 0.0
    %2660 = vmatpush2.msra.mxu0 0.0
    %2661 = vmatprep.subr.mxu0 0.0
    %2662 = vmatpush2.msra.mxu0 0.0
    %2663 = vmatprep.subr.mxu0 0.0
    %2664 = vmatpush2.msra.mxu0 0.0
    %2665 = vmatprep.subr.mxu0 0.0
    %2666 = vmatpush2.msra.mxu0 0.0
    %2667 = vmatprep.subr.mxu0 0.0
    %2668 = vmatpush2.msra.mxu0 0.0
    %2669 = vmatprep.subr.mxu0 0.0
    %2670 = vmatpush2.msra.mxu0 0.0
    %2671 = vmatprep.subr.mxu0 0.0
    %2672 = vmatpush2.msra.mxu0 0.0
    %2673 = vmatprep.subr.mxu0 0.0
    %2674 = vmatpush2.msra.mxu0 0.0
    %2675 = vmatprep.subr.mxu0 0.0
    %2676 = vmatpush2.msra.mxu0 0.0
    %2677 = vmatprep.subr.mxu0 0.0
    %2678 = vmatpush2.msra.mxu0 0.0
    %2679 = vmatprep.mubr.f32.mxu0 0.0
    %2680 = vmatmul.mubr.f32.gmra.mxu0 %v2613
    %v2681 = vpop.f32.mrf.mxu0
    %v2682 = vadd.f32 %v1193, %v2681
    %v2683 = vpop.f32.mrf.mxu0
    %2684 = vdwg.mxu0
    %v2685 = vxor.u32 %v2682, 2147483648
    %v2686 = vmul.f32 %v2685, 1.442695
    %v2687 = vpow.pop %v2686
    %v2688 = vadd.f32 %v2687, 1.0
    %v2689 = vrcp.pop %v2688
    %v2690 = vmul.f32 1.0, %v2689
    %v2691 = vtanh.pop %v2682
    %v2692 = vmul.f32 %v2690, %v2601
    %2694 = vrot.lane.b32.xlu0 %v2691, 64
    %v2695 = vpop.permute.xlu0 %2694
    %v2697 = vmul.f32 %v2690, %v2695
    %2699 = vrot.lane.b32.xlu0 %v2697, 32
    %v2700 = vpop.permute.xlu0 %2699
    %v2702 = vadd.f32 %v2692, %v2700
    %v2703 = vtanh.pop %v2702
    %2705 = vrot.lane.b32.xlu0 %v2703, 64
    %v2706 = vpop.permute.xlu0 %2705
    %v2708 = vmul.f32 %v2690, %v2706
    %2710 = vrot.lane.b32.xlu0 %v2708, 32
    %v2711 = vpop.permute.xlu0 %2710
    %2713 = vst.msk [vmem:[#allocation2 + $0xe] sm:$0x1] %vm1298, %v2711
    %v2714 = vsel %vm167, %v2711, 0
    %2716 = vmatprep.subr.mxu0 0.0
    %2717 = vmatpush1.msra.mxu0 0.0
    %2718 = vmatprep.subr.mxu0 0.0
    %2719 = vmatpush1.msra.mxu0 0.0
    %2720 = vmatprep.subr.mxu0 0.0
    %2721 = vmatpush1.msra.mxu0 0.0
    %2722 = vmatprep.subr.mxu0 0.0
    %2723 = vmatpush1.msra.mxu0 0.0
    %2724 = vmatprep.subr.mxu0 0.0
    %2725 = vmatpush1.msra.mxu0 0.0
    %2726 = vmatprep.subr.mxu0 0.0
    %2727 = vmatpush1.msra.mxu0 0.0
    %2728 = vmatprep.subr.mxu0 0.0
    %2729 = vmatpush1.msra.mxu0 0.0
    %2730 = vmatprep.subr.mxu0 0.0
    %2731 = vmatpush1.msra.mxu0 0.0
    %2732 = vmatprep.subr.mxu0 0.0
    %2733 = vmatpush1.msra.mxu0 0.0
    %2734 = vmatprep.subr.mxu0 0.0
    %2735 = vmatpush1.msra.mxu0 0.0
    %2736 = vmatprep.subr.mxu0 0.0
    %2737 = vmatpush1.msra.mxu0 0.0
    %2738 = vmatprep.subr.mxu0 0.0
    %2739 = vmatpush1.msra.mxu0 0.0
    %2740 = vmatprep.subr.mxu0 0.0
    %2741 = vmatpush1.msra.mxu0 %v1119
    %2742 = vmatprep.subr.mxu0 0.0
    %2743 = vmatpush1.msra.mxu0 %v1118
    %2744 = vmatprep.subr.mxu0 0.0
    %2745 = vmatpush1.msra.mxu0 %v1117
    %2746 = vmatprep.subr.mxu0 0.0
    %2747 = vmatpush1.msra.mxu0 %v1116
    %2748 = vmatprep.subr.mxu0 0.0
    %2749 = vmatpush2.msra.mxu0 0.0
    %2750 = vmatprep.subr.mxu0 0.0
    %2751 = vmatpush2.msra.mxu0 0.0
    %2752 = vmatprep.subr.mxu0 0.0
    %2753 = vmatpush2.msra.mxu0 0.0
    %2754 = vmatprep.subr.mxu0 0.0
    %2755 = vmatpush2.msra.mxu0 0.0
    %2756 = vmatprep.subr.mxu0 0.0
    %2757 = vmatpush2.msra.mxu0 0.0
    %2758 = vmatprep.subr.mxu0 0.0
    %2759 = vmatpush2.msra.mxu0 0.0
    %2760 = vmatprep.subr.mxu0 0.0
    %2761 = vmatpush2.msra.mxu0 0.0
    %2762 = vmatprep.subr.mxu0 0.0
    %2763 = vmatpush2.msra.mxu0 0.0
    %2764 = vmatprep.subr.mxu0 0.0
    %2765 = vmatpush2.msra.mxu0 0.0
    %2766 = vmatprep.subr.mxu0 0.0
    %2767 = vmatpush2.msra.mxu0 0.0
    %2768 = vmatprep.subr.mxu0 0.0
    %2769 = vmatpush2.msra.mxu0 0.0
    %2770 = vmatprep.subr.mxu0 0.0
    %2771 = vmatpush2.msra.mxu0 0.0
    %2772 = vmatprep.subr.mxu0 0.0
    %2773 = vmatpush2.msra.mxu0 0.0
    %2774 = vmatprep.subr.mxu0 0.0
    %2775 = vmatpush2.msra.mxu0 0.0
    %2776 = vmatprep.subr.mxu0 0.0
    %2777 = vmatpush2.msra.mxu0 0.0
    %2778 = vmatprep.subr.mxu0 0.0
    %2779 = vmatpush2.msra.mxu0 0.0
    %2780 = vmatprep.mubr.f32.mxu0 0.0
    %2781 = vmatmul.mubr.f32.gmra.mxu0 %v2714
    %v2782 = vpop.f32.mrf.mxu0
    %v2783 = vadd.f32 %v1193, %v2782
    %v2784 = vpop.f32.mrf.mxu0
    %2785 = vdwg.mxu0
    %v2786 = vxor.u32 %v2783, 2147483648
    %v2787 = vmul.f32 %v2786, 1.442695
    %v2788 = vpow.pop %v2787
    %v2789 = vadd.f32 %v2788, 1.0
    %v2790 = vrcp.pop %v2789
    %v2791 = vmul.f32 1.0, %v2790
    %v2792 = vtanh.pop %v2783
    %v2793 = vmul.f32 %v2791, %v2702
    %2795 = vrot.lane.b32.xlu0 %v2792, 64
    %v2796 = vpop.permute.xlu0 %2795
    %v2798 = vmul.f32 %v2791, %v2796
    %2800 = vrot.lane.b32.xlu0 %v2798, 32
    %v2801 = vpop.permute.xlu0 %2800
    %v2803 = vadd.f32 %v2793, %v2801
    %v2804 = vtanh.pop %v2803
    %2806 = vrot.lane.b32.xlu0 %v2804, 64
    %v2807 = vpop.permute.xlu0 %2806
    %v2809 = vmul.f32 %v2791, %v2807
    %2811 = vrot.lane.b32.xlu0 %v2809, 32
    %v2812 = vpop.permute.xlu0 %2811
    %2814 = vst.msk [vmem:[#allocation2 + $0xf] sm:$0x1] %vm1298, %v2812
    %v2815 = vsel %vm167, %v2812, 0
    %2817 = vmatprep.subr.mxu0 0.0
    %2818 = vmatpush1.msra.mxu0 0.0
    %2819 = vmatprep.subr.mxu0 0.0
    %2820 = vmatpush1.msra.mxu0 0.0
    %2821 = vmatprep.subr.mxu0 0.0
    %2822 = vmatpush1.msra.mxu0 0.0
    %2823 = vmatprep.subr.mxu0 0.0
    %2824 = vmatpush1.msra.mxu0 0.0
    %2825 = vmatprep.subr.mxu0 0.0
    %2826 = vmatpush1.msra.mxu0 0.0
    %2827 = vmatprep.subr.mxu0 0.0
    %2828 = vmatpush1.msra.mxu0 0.0
    %2829 = vmatprep.subr.mxu0 0.0
    %2830 = vmatpush1.msra.mxu0 0.0
    %2831 = vmatprep.subr.mxu0 0.0
    %2832 = vmatpush1.msra.mxu0 0.0
    %2833 = vmatprep.subr.mxu0 0.0
    %2834 = vmatpush1.msra.mxu0 0.0
    %2835 = vmatprep.subr.mxu0 0.0
    %2836 = vmatpush1.msra.mxu0 0.0
    %2837 = vmatprep.subr.mxu0 0.0
    %2838 = vmatpush1.msra.mxu0 0.0
    %2839 = vmatprep.subr.mxu0 0.0
    %2840 = vmatpush1.msra.mxu0 0.0
    %2841 = vmatprep.subr.mxu0 0.0
    %2842 = vmatpush1.msra.mxu0 %v1119
    %2843 = vmatprep.subr.mxu0 0.0
    %2844 = vmatpush1.msra.mxu0 %v1118
    %2845 = vmatprep.subr.mxu0 0.0
    %2846 = vmatpush1.msra.mxu0 %v1117
    %2847 = vmatprep.subr.mxu0 0.0
    %2848 = vmatpush1.msra.mxu0 %v1116
    %2849 = vmatprep.subr.mxu0 0.0
    %2850 = vmatpush2.msra.mxu0 0.0
    %2851 = vmatprep.subr.mxu0 0.0
    %2852 = vmatpush2.msra.mxu0 0.0
    %2853 = vmatprep.subr.mxu0 0.0
    %2854 = vmatpush2.msra.mxu0 0.0
    %2855 = vmatprep.subr.mxu0 0.0
    %2856 = vmatpush2.msra.mxu0 0.0
    %2857 = vmatprep.subr.mxu0 0.0
    %2858 = vmatpush2.msra.mxu0 0.0
    %2859 = vmatprep.subr.mxu0 0.0
    %2860 = vmatpush2.msra.mxu0 0.0
    %2861 = vmatprep.subr.mxu0 0.0
    %2862 = vmatpush2.msra.mxu0 0.0
    %2863 = vmatprep.subr.mxu0 0.0
    %2864 = vmatpush2.msra.mxu0 0.0
    %2865 = vmatprep.subr.mxu0 0.0
    %2866 = vmatpush2.msra.mxu0 0.0
    %2867 = vmatprep.subr.mxu0 0.0
    %2868 = vmatpush2.msra.mxu0 0.0
    %2869 = vmatprep.subr.mxu0 0.0
    %2870 = vmatpush2.msra.mxu0 0.0
    %2871 = vmatprep.subr.mxu0 0.0
    %2872 = vmatpush2.msra.mxu0 0.0
    %2873 = vmatprep.subr.mxu0 0.0
    %2874 = vmatpush2.msra.mxu0 0.0
    %2875 = vmatprep.subr.mxu0 0.0
    %2876 = vmatpush2.msra.mxu0 0.0
    %2877 = vmatprep.subr.mxu0 0.0
    %2878 = vmatpush2.msra.mxu0 0.0
    %2879 = vmatprep.subr.mxu0 0.0
    %2880 = vmatpush2.msra.mxu0 0.0
    %2881 = vmatprep.mubr.f32.mxu0 0.0
    %2882 = vmatmul.mubr.f32.gmra.mxu0 %v2815
    %v2883 = vpop.f32.mrf.mxu0
    %v2884 = vadd.f32 %v1193, %v2883
    %v2885 = vpop.f32.mrf.mxu0
    %2886 = vdwg.mxu0
    %v2887 = vxor.u32 %v2884, 2147483648
    %v2888 = vmul.f32 %v2887, 1.442695
    %v2889 = vpow.pop %v2888
    %v2890 = vadd.f32 %v2889, 1.0
    %v2891 = vrcp.pop %v2890
    %v2892 = vmul.f32 1.0, %v2891
    %v2893 = vtanh.pop %v2884
    %v2894 = vmul.f32 %v2892, %v2803
    %2896 = vrot.lane.b32.xlu0 %v2893, 64
    %v2897 = vpop.permute.xlu0 %2896
    %v2899 = vmul.f32 %v2892, %v2897
    %2901 = vrot.lane.b32.xlu0 %v2899, 32
    %v2902 = vpop.permute.xlu0 %2901
    %v2904 = vadd.f32 %v2894, %v2902
    %v2905 = vtanh.pop %v2904
    %2907 = vrot.lane.b32.xlu0 %v2905, 64
    %v2908 = vpop.permute.xlu0 %2907
    %v2910 = vmul.f32 %v2892, %v2908
    %2912 = vrot.lane.b32.xlu0 %v2910, 32
    %v2913 = vpop.permute.xlu0 %2912
    %2915 = vst.msk [vmem:[#allocation2 + $0x10] sm:$0x1] %vm1298, %v2913
    %v2916 = vsel %vm167, %v2913, 0
    %2918 = vmatprep.subr.mxu0 0.0
    %2919 = vmatpush1.msra.mxu0 0.0
    %2920 = vmatprep.subr.mxu0 0.0
    %2921 = vmatpush1.msra.mxu0 0.0
    %2922 = vmatprep.subr.mxu0 0.0
    %2923 = vmatpush1.msra.mxu0 0.0
    %2924 = vmatprep.subr.mxu0 0.0
    %2925 = vmatpush1.msra.mxu0 0.0
    %2926 = vmatprep.subr.mxu0 0.0
    %2927 = vmatpush1.msra.mxu0 0.0
    %2928 = vmatprep.subr.mxu0 0.0
    %2929 = vmatpush1.msra.mxu0 0.0
    %2930 = vmatprep.subr.mxu0 0.0
    %2931 = vmatpush1.msra.mxu0 0.0
    %2932 = vmatprep.subr.mxu0 0.0
    %2933 = vmatpush1.msra.mxu0 0.0
    %2934 = vmatprep.subr.mxu0 0.0
    %2935 = vmatpush1.msra.mxu0 0.0
    %2936 = vmatprep.subr.mxu0 0.0
    %2937 = vmatpush1.msra.mxu0 0.0
    %2938 = vmatprep.subr.mxu0 0.0
    %2939 = vmatpush1.msra.mxu0 0.0
    %2940 = vmatprep.subr.mxu0 0.0
    %2941 = vmatpush1.msra.mxu0 0.0
    %2942 = vmatprep.subr.mxu0 0.0
    %2943 = vmatpush1.msra.mxu0 %v1119
    %2944 = vmatprep.subr.mxu0 0.0
    %2945 = vmatpush1.msra.mxu0 %v1118
    %2946 = vmatprep.subr.mxu0 0.0
    %2947 = vmatpush1.msra.mxu0 %v1117
    %2948 = vmatprep.subr.mxu0 0.0
    %2949 = vmatpush1.msra.mxu0 %v1116
    %2950 = vmatprep.subr.mxu0 0.0
    %2951 = vmatpush2.msra.mxu0 0.0
    %2952 = vmatprep.subr.mxu0 0.0
    %2953 = vmatpush2.msra.mxu0 0.0
    %2954 = vmatprep.subr.mxu0 0.0
    %2955 = vmatpush2.msra.mxu0 0.0
    %2956 = vmatprep.subr.mxu0 0.0
    %2957 = vmatpush2.msra.mxu0 0.0
    %2958 = vmatprep.subr.mxu0 0.0
    %2959 = vmatpush2.msra.mxu0 0.0
    %2960 = vmatprep.subr.mxu0 0.0
    %2961 = vmatpush2.msra.mxu0 0.0
    %2962 = vmatprep.subr.mxu0 0.0
    %2963 = vmatpush2.msra.mxu0 0.0
    %2964 = vmatprep.subr.mxu0 0.0
    %2965 = vmatpush2.msra.mxu0 0.0
    %2966 = vmatprep.subr.mxu0 0.0
    %2967 = vmatpush2.msra.mxu0 0.0
    %2968 = vmatprep.subr.mxu0 0.0
    %2969 = vmatpush2.msra.mxu0 0.0
    %2970 = vmatprep.subr.mxu0 0.0
    %2971 = vmatpush2.msra.mxu0 0.0
    %2972 = vmatprep.subr.mxu0 0.0
    %2973 = vmatpush2.msra.mxu0 0.0
    %2974 = vmatprep.subr.mxu0 0.0
    %2975 = vmatpush2.msra.mxu0 0.0
    %2976 = vmatprep.subr.mxu0 0.0
    %2977 = vmatpush2.msra.mxu0 0.0
    %2978 = vmatprep.subr.mxu0 0.0
    %2979 = vmatpush2.msra.mxu0 0.0
    %2980 = vmatprep.subr.mxu0 0.0
    %2981 = vmatpush2.msra.mxu0 0.0
    %2982 = vmatprep.mubr.f32.mxu0 0.0
    %2983 = vmatmul.mubr.f32.gmra.mxu0 %v2916
    %v2984 = vpop.f32.mrf.mxu0
    %v2985 = vadd.f32 %v1193, %v2984
    %v2986 = vpop.f32.mrf.mxu0
    %2987 = vdwg.mxu0
    %v2988 = vxor.u32 %v2985, 2147483648
    %v2989 = vmul.f32 %v2988, 1.442695
    %v2990 = vpow.pop %v2989
    %v2991 = vadd.f32 %v2990, 1.0
    %v2992 = vrcp.pop %v2991
    %v2993 = vmul.f32 1.0, %v2992
    %v2994 = vtanh.pop %v2985
    %v2995 = vmul.f32 %v2993, %v2904
    %2997 = vrot.lane.b32.xlu0 %v2994, 64
    %v2998 = vpop.permute.xlu0 %2997
    %v3000 = vmul.f32 %v2993, %v2998
    %3002 = vrot.lane.b32.xlu0 %v3000, 32
    %v3003 = vpop.permute.xlu0 %3002
    %v3005 = vadd.f32 %v2995, %v3003
    %v3006 = vtanh.pop %v3005
    %3008 = vrot.lane.b32.xlu0 %v3006, 64
    %v3009 = vpop.permute.xlu0 %3008
    %v3011 = vmul.f32 %v2993, %v3009
    %3013 = vrot.lane.b32.xlu0 %v3011, 32
    %v3014 = vpop.permute.xlu0 %3013
    %3016 = vst.msk [vmem:[#allocation2 + $0x11] sm:$0x1] %vm1298, %v3014
    %v3017 = vsel %vm167, %v3014, 0
    %3019 = vmatprep.subr.mxu0 0.0
    %3020 = vmatpush1.msra.mxu0 0.0
    %3021 = vmatprep.subr.mxu0 0.0
    %3022 = vmatpush1.msra.mxu0 0.0
    %3023 = vmatprep.subr.mxu0 0.0
    %3024 = vmatpush1.msra.mxu0 0.0
    %3025 = vmatprep.subr.mxu0 0.0
    %3026 = vmatpush1.msra.mxu0 0.0
    %3027 = vmatprep.subr.mxu0 0.0
    %3028 = vmatpush1.msra.mxu0 0.0
    %3029 = vmatprep.subr.mxu0 0.0
    %3030 = vmatpush1.msra.mxu0 0.0
    %3031 = vmatprep.subr.mxu0 0.0
    %3032 = vmatpush1.msra.mxu0 0.0
    %3033 = vmatprep.subr.mxu0 0.0
    %3034 = vmatpush1.msra.mxu0 0.0
    %3035 = vmatprep.subr.mxu0 0.0
    %3036 = vmatpush1.msra.mxu0 0.0
    %3037 = vmatprep.subr.mxu0 0.0
    %3038 = vmatpush1.msra.mxu0 0.0
    %3039 = vmatprep.subr.mxu0 0.0
    %3040 = vmatpush1.msra.mxu0 0.0
    %3041 = vmatprep.subr.mxu0 0.0
    %3042 = vmatpush1.msra.mxu0 0.0
    %3043 = vmatprep.subr.mxu0 0.0
    %3044 = vmatpush1.msra.mxu0 %v1119
    %3045 = vmatprep.subr.mxu0 0.0
    %3046 = vmatpush1.msra.mxu0 %v1118
    %3047 = vmatprep.subr.mxu0 0.0
    %3048 = vmatpush1.msra.mxu0 %v1117
    %3049 = vmatprep.subr.mxu0 0.0
    %3050 = vmatpush1.msra.mxu0 %v1116
    %3051 = vmatprep.subr.mxu0 0.0
    %3052 = vmatpush2.msra.mxu0 0.0
    %3053 = vmatprep.subr.mxu0 0.0
    %3054 = vmatpush2.msra.mxu0 0.0
    %3055 = vmatprep.subr.mxu0 0.0
    %3056 = vmatpush2.msra.mxu0 0.0
    %3057 = vmatprep.subr.mxu0 0.0
    %3058 = vmatpush2.msra.mxu0 0.0
    %3059 = vmatprep.subr.mxu0 0.0
    %3060 = vmatpush2.msra.mxu0 0.0
    %3061 = vmatprep.subr.mxu0 0.0
    %3062 = vmatpush2.msra.mxu0 0.0
    %3063 = vmatprep.subr.mxu0 0.0
    %3064 = vmatpush2.msra.mxu0 0.0
    %3065 = vmatprep.subr.mxu0 0.0
    %3066 = vmatpush2.msra.mxu0 0.0
    %3067 = vmatprep.subr.mxu0 0.0
    %3068 = vmatpush2.msra.mxu0 0.0
    %3069 = vmatprep.subr.mxu0 0.0
    %3070 = vmatpush2.msra.mxu0 0.0
    %3071 = vmatprep.subr.mxu0 0.0
    %3072 = vmatpush2.msra.mxu0 0.0
    %3073 = vmatprep.subr.mxu0 0.0
    %3074 = vmatpush2.msra.mxu0 0.0
    %3075 = vmatprep.subr.mxu0 0.0
    %3076 = vmatpush2.msra.mxu0 0.0
    %3077 = vmatprep.subr.mxu0 0.0
    %3078 = vmatpush2.msra.mxu0 0.0
    %3079 = vmatprep.subr.mxu0 0.0
    %3080 = vmatpush2.msra.mxu0 0.0
    %3081 = vmatprep.subr.mxu0 0.0
    %3082 = vmatpush2.msra.mxu0 0.0
    %3083 = vmatprep.mubr.f32.mxu0 0.0
    %3084 = vmatmul.mubr.f32.gmra.mxu0 %v3017
    %v3085 = vpop.f32.mrf.mxu0
    %v3086 = vadd.f32 %v1193, %v3085
    %v3087 = vpop.f32.mrf.mxu0
    %3088 = vdwg.mxu0
    %v3089 = vxor.u32 %v3086, 2147483648
    %v3090 = vmul.f32 %v3089, 1.442695
    %v3091 = vpow.pop %v3090
    %v3092 = vadd.f32 %v3091, 1.0
    %v3093 = vrcp.pop %v3092
    %v3094 = vmul.f32 1.0, %v3093
    %v3095 = vtanh.pop %v3086
    %v3096 = vmul.f32 %v3094, %v3005
    %3098 = vrot.lane.b32.xlu0 %v3095, 64
    %v3099 = vpop.permute.xlu0 %3098
    %v3101 = vmul.f32 %v3094, %v3099
    %3103 = vrot.lane.b32.xlu0 %v3101, 32
    %v3104 = vpop.permute.xlu0 %3103
    %v3106 = vadd.f32 %v3096, %v3104
    %v3107 = vtanh.pop %v3106
    %3109 = vrot.lane.b32.xlu0 %v3107, 64
    %v3110 = vpop.permute.xlu0 %3109
    %v3112 = vmul.f32 %v3094, %v3110
    %3114 = vrot.lane.b32.xlu0 %v3112, 32
    %v3115 = vpop.permute.xlu0 %3114
    %3117 = vst.msk [vmem:[#allocation2 + $0x12] sm:$0x1] %vm1298, %v3115
    %v3118 = vsel %vm167, %v3115, 0
    %3120 = vmatprep.subr.mxu0 0.0
    %3121 = vmatpush1.msra.mxu0 0.0
    %3122 = vmatprep.subr.mxu0 0.0
    %3123 = vmatpush1.msra.mxu0 0.0
    %3124 = vmatprep.subr.mxu0 0.0
    %3125 = vmatpush1.msra.mxu0 0.0
    %3126 = vmatprep.subr.mxu0 0.0
    %3127 = vmatpush1.msra.mxu0 0.0
    %3128 = vmatprep.subr.mxu0 0.0
    %3129 = vmatpush1.msra.mxu0 0.0
    %3130 = vmatprep.subr.mxu0 0.0
    %3131 = vmatpush1.msra.mxu0 0.0
    %3132 = vmatprep.subr.mxu0 0.0
    %3133 = vmatpush1.msra.mxu0 0.0
    %3134 = vmatprep.subr.mxu0 0.0
    %3135 = vmatpush1.msra.mxu0 0.0
    %3136 = vmatprep.subr.mxu0 0.0
    %3137 = vmatpush1.msra.mxu0 0.0
    %3138 = vmatprep.subr.mxu0 0.0
    %3139 = vmatpush1.msra.mxu0 0.0
    %3140 = vmatprep.subr.mxu0 0.0
    %3141 = vmatpush1.msra.mxu0 0.0
    %3142 = vmatprep.subr.mxu0 0.0
    %3143 = vmatpush1.msra.mxu0 0.0
    %3144 = vmatprep.subr.mxu0 0.0
    %3145 = vmatpush1.msra.mxu0 %v1119
    %3146 = vmatprep.subr.mxu0 0.0
    %3147 = vmatpush1.msra.mxu0 %v1118
    %3148 = vmatprep.subr.mxu0 0.0
    %3149 = vmatpush1.msra.mxu0 %v1117
    %3150 = vmatprep.subr.mxu0 0.0
    %3151 = vmatpush1.msra.mxu0 %v1116
    %3152 = vmatprep.subr.mxu0 0.0
    %3153 = vmatpush2.msra.mxu0 0.0
    %3154 = vmatprep.subr.mxu0 0.0
    %3155 = vmatpush2.msra.mxu0 0.0
    %3156 = vmatprep.subr.mxu0 0.0
    %3157 = vmatpush2.msra.mxu0 0.0
    %3158 = vmatprep.subr.mxu0 0.0
    %3159 = vmatpush2.msra.mxu0 0.0
    %3160 = vmatprep.subr.mxu0 0.0
    %3161 = vmatpush2.msra.mxu0 0.0
    %3162 = vmatprep.subr.mxu0 0.0
    %3163 = vmatpush2.msra.mxu0 0.0
    %3164 = vmatprep.subr.mxu0 0.0
    %3165 = vmatpush2.msra.mxu0 0.0
    %3166 = vmatprep.subr.mxu0 0.0
    %3167 = vmatpush2.msra.mxu0 0.0
    %3168 = vmatprep.subr.mxu0 0.0
    %3169 = vmatpush2.msra.mxu0 0.0
    %3170 = vmatprep.subr.mxu0 0.0
    %3171 = vmatpush2.msra.mxu0 0.0
    %3172 = vmatprep.subr.mxu0 0.0
    %3173 = vmatpush2.msra.mxu0 0.0
    %3174 = vmatprep.subr.mxu0 0.0
    %3175 = vmatpush2.msra.mxu0 0.0
    %3176 = vmatprep.subr.mxu0 0.0
    %3177 = vmatpush2.msra.mxu0 0.0
    %3178 = vmatprep.subr.mxu0 0.0
    %3179 = vmatpush2.msra.mxu0 0.0
    %3180 = vmatprep.subr.mxu0 0.0
    %3181 = vmatpush2.msra.mxu0 0.0
    %3182 = vmatprep.subr.mxu0 0.0
    %3183 = vmatpush2.msra.mxu0 0.0
    %3184 = vmatprep.mubr.f32.mxu0 0.0
    %3185 = vmatmul.mubr.f32.gmra.mxu0 %v3118
    %v3186 = vpop.f32.mrf.mxu0
    %v3187 = vadd.f32 %v1193, %v3186
    %v3188 = vpop.f32.mrf.mxu0
    %3189 = vdwg.mxu0
    %v3190 = vxor.u32 %v3187, 2147483648
    %v3191 = vmul.f32 %v3190, 1.442695
    %v3192 = vpow.pop %v3191
    %v3193 = vadd.f32 %v3192, 1.0
    %v3194 = vrcp.pop %v3193
    %v3195 = vmul.f32 1.0, %v3194
    %v3196 = vtanh.pop %v3187
    %v3197 = vmul.f32 %v3195, %v3106
    %3199 = vrot.lane.b32.xlu0 %v3196, 64
    %v3200 = vpop.permute.xlu0 %3199
    %v3202 = vmul.f32 %v3195, %v3200
    %3204 = vrot.lane.b32.xlu0 %v3202, 32
    %v3205 = vpop.permute.xlu0 %3204
    %v3207 = vadd.f32 %v3197, %v3205
    %v3208 = vtanh.pop %v3207
    %3210 = vrot.lane.b32.xlu0 %v3208, 64
    %v3211 = vpop.permute.xlu0 %3210
    %v3213 = vmul.f32 %v3195, %v3211
    %3215 = vrot.lane.b32.xlu0 %v3213, 32
    %v3216 = vpop.permute.xlu0 %3215
    %3218 = vst.msk [vmem:[#allocation2 + $0x13] sm:$0x1] %vm1298, %v3216
    %v3219 = vsel %vm167, %v3216, 0
    %3221 = vmatprep.subr.mxu0 0.0
    %3222 = vmatpush1.msra.mxu0 0.0
    %3223 = vmatprep.subr.mxu0 0.0
    %3224 = vmatpush1.msra.mxu0 0.0
    %3225 = vmatprep.subr.mxu0 0.0
    %3226 = vmatpush1.msra.mxu0 0.0
    %3227 = vmatprep.subr.mxu0 0.0
    %3228 = vmatpush1.msra.mxu0 0.0
    %3229 = vmatprep.subr.mxu0 0.0
    %3230 = vmatpush1.msra.mxu0 0.0
    %3231 = vmatprep.subr.mxu0 0.0
    %3232 = vmatpush1.msra.mxu0 0.0
    %3233 = vmatprep.subr.mxu0 0.0
    %3234 = vmatpush1.msra.mxu0 0.0
    %3235 = vmatprep.subr.mxu0 0.0
    %3236 = vmatpush1.msra.mxu0 0.0
    %3237 = vmatprep.subr.mxu0 0.0
    %3238 = vmatpush1.msra.mxu0 0.0
    %3239 = vmatprep.subr.mxu0 0.0
    %3240 = vmatpush1.msra.mxu0 0.0
    %3241 = vmatprep.subr.mxu0 0.0
    %3242 = vmatpush1.msra.mxu0 0.0
    %3243 = vmatprep.subr.mxu0 0.0
    %3244 = vmatpush1.msra.mxu0 0.0
    %3245 = vmatprep.subr.mxu0 0.0
    %3246 = vmatpush1.msra.mxu0 %v1119
    %3247 = vmatprep.subr.mxu0 0.0
    %3248 = vmatpush1.msra.mxu0 %v1118
    %3249 = vmatprep.subr.mxu0 0.0
    %3250 = vmatpush1.msra.mxu0 %v1117
    %3251 = vmatprep.subr.mxu0 0.0
    %3252 = vmatpush1.msra.mxu0 %v1116
    %3253 = vmatprep.subr.mxu0 0.0
    %3254 = vmatpush2.msra.mxu0 0.0
    %3255 = vmatprep.subr.mxu0 0.0
    %3256 = vmatpush2.msra.mxu0 0.0
    %3257 = vmatprep.subr.mxu0 0.0
    %3258 = vmatpush2.msra.mxu0 0.0
    %3259 = vmatprep.subr.mxu0 0.0
    %3260 = vmatpush2.msra.mxu0 0.0
    %3261 = vmatprep.subr.mxu0 0.0
    %3262 = vmatpush2.msra.mxu0 0.0
    %3263 = vmatprep.subr.mxu0 0.0
    %3264 = vmatpush2.msra.mxu0 0.0
    %3265 = vmatprep.subr.mxu0 0.0
    %3266 = vmatpush2.msra.mxu0 0.0
    %3267 = vmatprep.subr.mxu0 0.0
    %3268 = vmatpush2.msra.mxu0 0.0
    %3269 = vmatprep.subr.mxu0 0.0
    %3270 = vmatpush2.msra.mxu0 0.0
    %3271 = vmatprep.subr.mxu0 0.0
    %3272 = vmatpush2.msra.mxu0 0.0
    %3273 = vmatprep.subr.mxu0 0.0
    %3274 = vmatpush2.msra.mxu0 0.0
    %3275 = vmatprep.subr.mxu0 0.0
    %3276 = vmatpush2.msra.mxu0 0.0
    %3277 = vmatprep.subr.mxu0 0.0
    %3278 = vmatpush2.msra.mxu0 0.0
    %3279 = vmatprep.subr.mxu0 0.0
    %3280 = vmatpush2.msra.mxu0 0.0
    %3281 = vmatprep.subr.mxu0 0.0
    %3282 = vmatpush2.msra.mxu0 0.0
    %3283 = vmatprep.subr.mxu0 0.0
    %3284 = vmatpush2.msra.mxu0 0.0
    %3285 = vmatprep.mubr.f32.mxu0 0.0
    %3286 = vmatmul.mubr.f32.gmra.mxu0 %v3219
    %v3287 = vpop.f32.mrf.mxu0
    %v3288 = vadd.f32 %v1193, %v3287
    %v3289 = vpop.f32.mrf.mxu0
    %3290 = vdwg.mxu0
    %v3291 = vxor.u32 %v3288, 2147483648
    %v3292 = vmul.f32 %v3291, 1.442695
    %v3293 = vpow.pop %v3292
    %v3294 = vadd.f32 %v3293, 1.0
    %v3295 = vrcp.pop %v3294
    %v3296 = vmul.f32 1.0, %v3295
    %v3297 = vtanh.pop %v3288
    %v3298 = vmul.f32 %v3296, %v3207
    %3300 = vrot.lane.b32.xlu0 %v3297, 64
    %v3301 = vpop.permute.xlu0 %3300
    %v3303 = vmul.f32 %v3296, %v3301
    %3305 = vrot.lane.b32.xlu0 %v3303, 32
    %v3306 = vpop.permute.xlu0 %3305
    %v3308 = vadd.f32 %v3298, %v3306
    %v3309 = vtanh.pop %v3308
    %3311 = vrot.lane.b32.xlu0 %v3309, 64
    %v3312 = vpop.permute.xlu0 %3311
    %v3314 = vmul.f32 %v3296, %v3312
    %3316 = vrot.lane.b32.xlu0 %v3314, 32
    %v3317 = vpop.permute.xlu0 %3316
    %3319 = vst.msk [vmem:[#allocation2 + $0x14] sm:$0x1] %vm1298, %v3317
    %v3320 = vsel %vm167, %v3317, 0
    %3322 = vmatprep.subr.mxu0 0.0
    %3323 = vmatpush1.msra.mxu0 0.0
    %3324 = vmatprep.subr.mxu0 0.0
    %3325 = vmatpush1.msra.mxu0 0.0
    %3326 = vmatprep.subr.mxu0 0.0
    %3327 = vmatpush1.msra.mxu0 0.0
    %3328 = vmatprep.subr.mxu0 0.0
    %3329 = vmatpush1.msra.mxu0 0.0
    %3330 = vmatprep.subr.mxu0 0.0
    %3331 = vmatpush1.msra.mxu0 0.0
    %3332 = vmatprep.subr.mxu0 0.0
    %3333 = vmatpush1.msra.mxu0 0.0
    %3334 = vmatprep.subr.mxu0 0.0
    %3335 = vmatpush1.msra.mxu0 0.0
    %3336 = vmatprep.subr.mxu0 0.0
    %3337 = vmatpush1.msra.mxu0 0.0
    %3338 = vmatprep.subr.mxu0 0.0
    %3339 = vmatpush1.msra.mxu0 0.0
    %3340 = vmatprep.subr.mxu0 0.0
    %3341 = vmatpush1.msra.mxu0 0.0
    %3342 = vmatprep.subr.mxu0 0.0
    %3343 = vmatpush1.msra.mxu0 0.0
    %3344 = vmatprep.subr.mxu0 0.0
    %3345 = vmatpush1.msra.mxu0 0.0
    %3346 = vmatprep.subr.mxu0 0.0
    %3347 = vmatpush1.msra.mxu0 %v1119
    %3348 = vmatprep.subr.mxu0 0.0
    %3349 = vmatpush1.msra.mxu0 %v1118
    %3350 = vmatprep.subr.mxu0 0.0
    %3351 = vmatpush1.msra.mxu0 %v1117
    %3352 = vmatprep.subr.mxu0 0.0
    %3353 = vmatpush1.msra.mxu0 %v1116
    %3354 = vmatprep.subr.mxu0 0.0
    %3355 = vmatpush2.msra.mxu0 0.0
    %3356 = vmatprep.subr.mxu0 0.0
    %3357 = vmatpush2.msra.mxu0 0.0
    %3358 = vmatprep.subr.mxu0 0.0
    %3359 = vmatpush2.msra.mxu0 0.0
    %3360 = vmatprep.subr.mxu0 0.0
    %3361 = vmatpush2.msra.mxu0 0.0
    %3362 = vmatprep.subr.mxu0 0.0
    %3363 = vmatpush2.msra.mxu0 0.0
    %3364 = vmatprep.subr.mxu0 0.0
    %3365 = vmatpush2.msra.mxu0 0.0
    %3366 = vmatprep.subr.mxu0 0.0
    %3367 = vmatpush2.msra.mxu0 0.0
    %3368 = vmatprep.subr.mxu0 0.0
    %3369 = vmatpush2.msra.mxu0 0.0
    %3370 = vmatprep.subr.mxu0 0.0
    %3371 = vmatpush2.msra.mxu0 0.0
    %3372 = vmatprep.subr.mxu0 0.0
    %3373 = vmatpush2.msra.mxu0 0.0
    %3374 = vmatprep.subr.mxu0 0.0
    %3375 = vmatpush2.msra.mxu0 0.0
    %3376 = vmatprep.subr.mxu0 0.0
    %3377 = vmatpush2.msra.mxu0 0.0
    %3378 = vmatprep.subr.mxu0 0.0
    %3379 = vmatpush2.msra.mxu0 0.0
    %3380 = vmatprep.subr.mxu0 0.0
    %3381 = vmatpush2.msra.mxu0 0.0
    %3382 = vmatprep.subr.mxu0 0.0
    %3383 = vmatpush2.msra.mxu0 0.0
    %3384 = vmatprep.subr.mxu0 0.0
    %3385 = vmatpush2.msra.mxu0 0.0
    %3386 = vmatprep.mubr.f32.mxu0 0.0
    %3387 = vmatmul.mubr.f32.gmra.mxu0 %v3320
    %v3388 = vpop.f32.mrf.mxu0
    %v3389 = vadd.f32 %v1193, %v3388
    %v3390 = vpop.f32.mrf.mxu0
    %3391 = vdwg.mxu0
    %v3392 = vxor.u32 %v3389, 2147483648
    %v3393 = vmul.f32 %v3392, 1.442695
    %v3394 = vpow.pop %v3393
    %v3395 = vadd.f32 %v3394, 1.0
    %v3396 = vrcp.pop %v3395
    %v3397 = vmul.f32 1.0, %v3396
    %v3398 = vtanh.pop %v3389
    %v3399 = vmul.f32 %v3397, %v3308
    %3401 = vrot.lane.b32.xlu0 %v3398, 64
    %v3402 = vpop.permute.xlu0 %3401
    %v3404 = vmul.f32 %v3397, %v3402
    %3406 = vrot.lane.b32.xlu0 %v3404, 32
    %v3407 = vpop.permute.xlu0 %3406
    %v3409 = vadd.f32 %v3399, %v3407
    %v3410 = vtanh.pop %v3409
    %3412 = vrot.lane.b32.xlu0 %v3410, 64
    %v3413 = vpop.permute.xlu0 %3412
    %v3415 = vmul.f32 %v3397, %v3413
    %3417 = vrot.lane.b32.xlu0 %v3415, 32
    %v3418 = vpop.permute.xlu0 %3417
    %3420 = vst.msk [vmem:[#allocation2 + $0x15] sm:$0x1] %vm1298, %v3418
    %v3421 = vsel %vm167, %v3418, 0
    %3423 = vmatprep.subr.mxu0 0.0
    %3424 = vmatpush1.msra.mxu0 0.0
    %3425 = vmatprep.subr.mxu0 0.0
    %3426 = vmatpush1.msra.mxu0 0.0
    %3427 = vmatprep.subr.mxu0 0.0
    %3428 = vmatpush1.msra.mxu0 0.0
    %3429 = vmatprep.subr.mxu0 0.0
    %3430 = vmatpush1.msra.mxu0 0.0
    %3431 = vmatprep.subr.mxu0 0.0
    %3432 = vmatpush1.msra.mxu0 0.0
    %3433 = vmatprep.subr.mxu0 0.0
    %3434 = vmatpush1.msra.mxu0 0.0
    %3435 = vmatprep.subr.mxu0 0.0
    %3436 = vmatpush1.msra.mxu0 0.0
    %3437 = vmatprep.subr.mxu0 0.0
    %3438 = vmatpush1.msra.mxu0 0.0
    %3439 = vmatprep.subr.mxu0 0.0
    %3440 = vmatpush1.msra.mxu0 0.0
    %3441 = vmatprep.subr.mxu0 0.0
    %3442 = vmatpush1.msra.mxu0 0.0
    %3443 = vmatprep.subr.mxu0 0.0
    %3444 = vmatpush1.msra.mxu0 0.0
    %3445 = vmatprep.subr.mxu0 0.0
    %3446 = vmatpush1.msra.mxu0 0.0
    %3447 = vmatprep.subr.mxu0 0.0
    %3448 = vmatpush1.msra.mxu0 %v1119
    %3449 = vmatprep.subr.mxu0 0.0
    %3450 = vmatpush1.msra.mxu0 %v1118
    %3451 = vmatprep.subr.mxu0 0.0
    %3452 = vmatpush1.msra.mxu0 %v1117
    %3453 = vmatprep.subr.mxu0 0.0
    %3454 = vmatpush1.msra.mxu0 %v1116
    %3455 = vmatprep.subr.mxu0 0.0
    %3456 = vmatpush2.msra.mxu0 0.0
    %3457 = vmatprep.subr.mxu0 0.0
    %3458 = vmatpush2.msra.mxu0 0.0
    %3459 = vmatprep.subr.mxu0 0.0
    %3460 = vmatpush2.msra.mxu0 0.0
    %3461 = vmatprep.subr.mxu0 0.0
    %3462 = vmatpush2.msra.mxu0 0.0
    %3463 = vmatprep.subr.mxu0 0.0
    %3464 = vmatpush2.msra.mxu0 0.0
    %3465 = vmatprep.subr.mxu0 0.0
    %3466 = vmatpush2.msra.mxu0 0.0
    %3467 = vmatprep.subr.mxu0 0.0
    %3468 = vmatpush2.msra.mxu0 0.0
    %3469 = vmatprep.subr.mxu0 0.0
    %3470 = vmatpush2.msra.mxu0 0.0
    %3471 = vmatprep.subr.mxu0 0.0
    %3472 = vmatpush2.msra.mxu0 0.0
    %3473 = vmatprep.subr.mxu0 0.0
    %3474 = vmatpush2.msra.mxu0 0.0
    %3475 = vmatprep.subr.mxu0 0.0
    %3476 = vmatpush2.msra.mxu0 0.0
    %3477 = vmatprep.subr.mxu0 0.0
    %3478 = vmatpush2.msra.mxu0 0.0
    %3479 = vmatprep.subr.mxu0 0.0
    %3480 = vmatpush2.msra.mxu0 0.0
    %3481 = vmatprep.subr.mxu0 0.0
    %3482 = vmatpush2.msra.mxu0 0.0
    %3483 = vmatprep.subr.mxu0 0.0
    %3484 = vmatpush2.msra.mxu0 0.0
    %3485 = vmatprep.subr.mxu0 0.0
    %3486 = vmatpush2.msra.mxu0 0.0
    %3487 = vmatprep.mubr.f32.mxu0 0.0
    %3488 = vmatmul.mubr.f32.gmra.mxu0 %v3421
    %v3489 = vpop.f32.mrf.mxu0
    %v3490 = vadd.f32 %v1193, %v3489
    %v3491 = vpop.f32.mrf.mxu0
    %3492 = vdwg.mxu0
    %v3493 = vxor.u32 %v3490, 2147483648
    %v3494 = vmul.f32 %v3493, 1.442695
    %v3495 = vpow.pop %v3494
    %v3496 = vadd.f32 %v3495, 1.0
    %v3497 = vrcp.pop %v3496
    %v3498 = vmul.f32 1.0, %v3497
    %v3499 = vtanh.pop %v3490
    %v3500 = vmul.f32 %v3498, %v3409
    %3502 = vrot.lane.b32.xlu0 %v3499, 64
    %v3503 = vpop.permute.xlu0 %3502
    %v3505 = vmul.f32 %v3498, %v3503
    %3507 = vrot.lane.b32.xlu0 %v3505, 32
    %v3508 = vpop.permute.xlu0 %3507
    %v3510 = vadd.f32 %v3500, %v3508
    %v3511 = vtanh.pop %v3510
    %3513 = vrot.lane.b32.xlu0 %v3511, 64
    %v3514 = vpop.permute.xlu0 %3513
    %v3516 = vmul.f32 %v3498, %v3514
    %3518 = vrot.lane.b32.xlu0 %v3516, 32
    %v3519 = vpop.permute.xlu0 %3518
    %3521 = vst.msk [vmem:[#allocation2 + $0x16] sm:$0x1] %vm1298, %v3519
    %v3522 = vsel %vm167, %v3519, 0
    %3524 = vmatprep.subr.mxu0 0.0
    %3525 = vmatpush1.msra.mxu0 0.0
    %3526 = vmatprep.subr.mxu0 0.0
    %3527 = vmatpush1.msra.mxu0 0.0
    %3528 = vmatprep.subr.mxu0 0.0
    %3529 = vmatpush1.msra.mxu0 0.0
    %3530 = vmatprep.subr.mxu0 0.0
    %3531 = vmatpush1.msra.mxu0 0.0
    %3532 = vmatprep.subr.mxu0 0.0
    %3533 = vmatpush1.msra.mxu0 0.0
    %3534 = vmatprep.subr.mxu0 0.0
    %3535 = vmatpush1.msra.mxu0 0.0
    %3536 = vmatprep.subr.mxu0 0.0
    %3537 = vmatpush1.msra.mxu0 0.0
    %3538 = vmatprep.subr.mxu0 0.0
    %3539 = vmatpush1.msra.mxu0 0.0
    %3540 = vmatprep.subr.mxu0 0.0
    %3541 = vmatpush1.msra.mxu0 0.0
    %3542 = vmatprep.subr.mxu0 0.0
    %3543 = vmatpush1.msra.mxu0 0.0
    %3544 = vmatprep.subr.mxu0 0.0
    %3545 = vmatpush1.msra.mxu0 0.0
    %3546 = vmatprep.subr.mxu0 0.0
    %3547 = vmatpush1.msra.mxu0 0.0
    %3548 = vmatprep.subr.mxu0 0.0
    %3549 = vmatpush1.msra.mxu0 %v1119
    %3550 = vmatprep.subr.mxu0 0.0
    %3551 = vmatpush1.msra.mxu0 %v1118
    %3552 = vmatprep.subr.mxu0 0.0
    %3553 = vmatpush1.msra.mxu0 %v1117
    %3554 = vmatprep.subr.mxu0 0.0
    %3555 = vmatpush1.msra.mxu0 %v1116
    %3556 = vmatprep.subr.mxu0 0.0
    %3557 = vmatpush2.msra.mxu0 0.0
    %3558 = vmatprep.subr.mxu0 0.0
    %3559 = vmatpush2.msra.mxu0 0.0
    %3560 = vmatprep.subr.mxu0 0.0
    %3561 = vmatpush2.msra.mxu0 0.0
    %3562 = vmatprep.subr.mxu0 0.0
    %3563 = vmatpush2.msra.mxu0 0.0
    %3564 = vmatprep.subr.mxu0 0.0
    %3565 = vmatpush2.msra.mxu0 0.0
    %3566 = vmatprep.subr.mxu0 0.0
    %3567 = vmatpush2.msra.mxu0 0.0
    %3568 = vmatprep.subr.mxu0 0.0
    %3569 = vmatpush2.msra.mxu0 0.0
    %3570 = vmatprep.subr.mxu0 0.0
    %3571 = vmatpush2.msra.mxu0 0.0
    %3572 = vmatprep.subr.mxu0 0.0
    %3573 = vmatpush2.msra.mxu0 0.0
    %3574 = vmatprep.subr.mxu0 0.0
    %3575 = vmatpush2.msra.mxu0 0.0
    %3576 = vmatprep.subr.mxu0 0.0
    %3577 = vmatpush2.msra.mxu0 0.0
    %3578 = vmatprep.subr.mxu0 0.0
    %3579 = vmatpush2.msra.mxu0 0.0
    %3580 = vmatprep.subr.mxu0 0.0
    %3581 = vmatpush2.msra.mxu0 0.0
    %3582 = vmatprep.subr.mxu0 0.0
    %3583 = vmatpush2.msra.mxu0 0.0
    %3584 = vmatprep.subr.mxu0 0.0
    %3585 = vmatpush2.msra.mxu0 0.0
    %3586 = vmatprep.subr.mxu0 0.0
    %3587 = vmatpush2.msra.mxu0 0.0
    %3588 = vmatprep.mubr.f32.mxu0 0.0
    %3589 = vmatmul.mubr.f32.gmra.mxu0 %v3522
    %v3590 = vpop.f32.mrf.mxu0
    %v3591 = vadd.f32 %v1193, %v3590
    %v3592 = vpop.f32.mrf.mxu0
    %3593 = vdwg.mxu0
    %v3594 = vxor.u32 %v3591, 2147483648
    %v3595 = vmul.f32 %v3594, 1.442695
    %v3596 = vpow.pop %v3595
    %v3597 = vadd.f32 %v3596, 1.0
    %v3598 = vrcp.pop %v3597
    %v3599 = vmul.f32 1.0, %v3598
    %v3600 = vtanh.pop %v3591
    %v3601 = vmul.f32 %v3599, %v3510
    %3603 = vrot.lane.b32.xlu0 %v3600, 64
    %v3604 = vpop.permute.xlu0 %3603
    %v3606 = vmul.f32 %v3599, %v3604
    %3608 = vrot.lane.b32.xlu0 %v3606, 32
    %v3609 = vpop.permute.xlu0 %3608
    %v3611 = vadd.f32 %v3601, %v3609
    %v3612 = vtanh.pop %v3611
    %3614 = vrot.lane.b32.xlu0 %v3612, 64
    %v3615 = vpop.permute.xlu0 %3614
    %v3617 = vmul.f32 %v3599, %v3615
    %3619 = vrot.lane.b32.xlu0 %v3617, 32
    %v3620 = vpop.permute.xlu0 %3619
    %3622 = vst.msk [vmem:[#allocation2 + $0x17] sm:$0x1] %vm1298, %v3620
    %v3623 = vsel %vm167, %v3620, 0
    %3625 = vmatprep.subr.mxu0 0.0
    %3626 = vmatpush1.msra.mxu0 0.0
    %3627 = vmatprep.subr.mxu0 0.0
    %3628 = vmatpush1.msra.mxu0 0.0
    %3629 = vmatprep.subr.mxu0 0.0
    %3630 = vmatpush1.msra.mxu0 0.0
    %3631 = vmatprep.subr.mxu0 0.0
    %3632 = vmatpush1.msra.mxu0 0.0
    %3633 = vmatprep.subr.mxu0 0.0
    %3634 = vmatpush1.msra.mxu0 0.0
    %3635 = vmatprep.subr.mxu0 0.0
    %3636 = vmatpush1.msra.mxu0 0.0
    %3637 = vmatprep.subr.mxu0 0.0
    %3638 = vmatpush1.msra.mxu0 0.0
    %3639 = vmatprep.subr.mxu0 0.0
    %3640 = vmatpush1.msra.mxu0 0.0
    %3641 = vmatprep.subr.mxu0 0.0
    %3642 = vmatpush1.msra.mxu0 0.0
    %3643 = vmatprep.subr.mxu0 0.0
    %3644 = vmatpush1.msra.mxu0 0.0
    %3645 = vmatprep.subr.mxu0 0.0
    %3646 = vmatpush1.msra.mxu0 0.0
    %3647 = vmatprep.subr.mxu0 0.0
    %3648 = vmatpush1.msra.mxu0 0.0
    %3649 = vmatprep.subr.mxu0 0.0
    %3650 = vmatpush1.msra.mxu0 %v1119
    %3651 = vmatprep.subr.mxu0 0.0
    %3652 = vmatpush1.msra.mxu0 %v1118
    %3653 = vmatprep.subr.mxu0 0.0
    %3654 = vmatpush1.msra.mxu0 %v1117
    %3655 = vmatprep.subr.mxu0 0.0
    %3656 = vmatpush1.msra.mxu0 %v1116
    %3657 = vmatprep.subr.mxu0 0.0
    %3658 = vmatpush2.msra.mxu0 0.0
    %3659 = vmatprep.subr.mxu0 0.0
    %3660 = vmatpush2.msra.mxu0 0.0
    %3661 = vmatprep.subr.mxu0 0.0
    %3662 = vmatpush2.msra.mxu0 0.0
    %3663 = vmatprep.subr.mxu0 0.0
    %3664 = vmatpush2.msra.mxu0 0.0
    %3665 = vmatprep.subr.mxu0 0.0
    %3666 = vmatpush2.msra.mxu0 0.0
    %3667 = vmatprep.subr.mxu0 0.0
    %3668 = vmatpush2.msra.mxu0 0.0
    %3669 = vmatprep.subr.mxu0 0.0
    %3670 = vmatpush2.msra.mxu0 0.0
    %3671 = vmatprep.subr.mxu0 0.0
    %3672 = vmatpush2.msra.mxu0 0.0
    %3673 = vmatprep.subr.mxu0 0.0
    %3674 = vmatpush2.msra.mxu0 0.0
    %3675 = vmatprep.subr.mxu0 0.0
    %3676 = vmatpush2.msra.mxu0 0.0
    %3677 = vmatprep.subr.mxu0 0.0
    %3678 = vmatpush2.msra.mxu0 0.0
    %3679 = vmatprep.subr.mxu0 0.0
    %3680 = vmatpush2.msra.mxu0 0.0
    %3681 = vmatprep.subr.mxu0 0.0
    %3682 = vmatpush2.msra.mxu0 0.0
    %3683 = vmatprep.subr.mxu0 0.0
    %3684 = vmatpush2.msra.mxu0 0.0
    %3685 = vmatprep.subr.mxu0 0.0
    %3686 = vmatpush2.msra.mxu0 0.0
    %3687 = vmatprep.subr.mxu0 0.0
    %3688 = vmatpush2.msra.mxu0 0.0
    %3689 = vmatprep.mubr.f32.mxu0 0.0
    %3690 = vmatmul.mubr.f32.gmra.mxu0 %v3623
    %v3691 = vpop.f32.mrf.mxu0
    %v3692 = vadd.f32 %v1193, %v3691
    %v3693 = vpop.f32.mrf.mxu0
    %3694 = vdwg.mxu0
    %v3695 = vxor.u32 %v3692, 2147483648
    %v3696 = vmul.f32 %v3695, 1.442695
    %v3697 = vpow.pop %v3696
    %v3698 = vadd.f32 %v3697, 1.0
    %v3699 = vrcp.pop %v3698
    %v3700 = vmul.f32 1.0, %v3699
    %v3701 = vtanh.pop %v3692
    %v3702 = vmul.f32 %v3700, %v3611
    %3704 = vrot.lane.b32.xlu0 %v3701, 64
    %v3705 = vpop.permute.xlu0 %3704
    %v3707 = vmul.f32 %v3700, %v3705
    %3709 = vrot.lane.b32.xlu0 %v3707, 32
    %v3710 = vpop.permute.xlu0 %3709
    %v3712 = vadd.f32 %v3702, %v3710
    %v3713 = vtanh.pop %v3712
    %3715 = vrot.lane.b32.xlu0 %v3713, 64
    %v3716 = vpop.permute.xlu0 %3715
    %v3718 = vmul.f32 %v3700, %v3716
    %3720 = vrot.lane.b32.xlu0 %v3718, 32
    %v3721 = vpop.permute.xlu0 %3720
    %3723 = vst.msk [vmem:[#allocation2 + $0x18] sm:$0x1] %vm1298, %v3721
    %v3724 = vsel %vm167, %v3721, 0
    %3726 = vmatprep.subr.mxu0 0.0
    %3727 = vmatpush1.msra.mxu0 0.0
    %3728 = vmatprep.subr.mxu0 0.0
    %3729 = vmatpush1.msra.mxu0 0.0
    %3730 = vmatprep.subr.mxu0 0.0
    %3731 = vmatpush1.msra.mxu0 0.0
    %3732 = vmatprep.subr.mxu0 0.0
    %3733 = vmatpush1.msra.mxu0 0.0
    %3734 = vmatprep.subr.mxu0 0.0
    %3735 = vmatpush1.msra.mxu0 0.0
    %3736 = vmatprep.subr.mxu0 0.0
    %3737 = vmatpush1.msra.mxu0 0.0
    %3738 = vmatprep.subr.mxu0 0.0
    %3739 = vmatpush1.msra.mxu0 0.0
    %3740 = vmatprep.subr.mxu0 0.0
    %3741 = vmatpush1.msra.mxu0 0.0
    %3742 = vmatprep.subr.mxu0 0.0
    %3743 = vmatpush1.msra.mxu0 0.0
    %3744 = vmatprep.subr.mxu0 0.0
    %3745 = vmatpush1.msra.mxu0 0.0
    %3746 = vmatprep.subr.mxu0 0.0
    %3747 = vmatpush1.msra.mxu0 0.0
    %3748 = vmatprep.subr.mxu0 0.0
    %3749 = vmatpush1.msra.mxu0 0.0
    %3750 = vmatprep.subr.mxu0 0.0
    %3751 = vmatpush1.msra.mxu0 %v1119
    %3752 = vmatprep.subr.mxu0 0.0
    %3753 = vmatpush1.msra.mxu0 %v1118
    %3754 = vmatprep.subr.mxu0 0.0
    %3755 = vmatpush1.msra.mxu0 %v1117
    %3756 = vmatprep.subr.mxu0 0.0
    %3757 = vmatpush1.msra.mxu0 %v1116
    %3758 = vmatprep.subr.mxu0 0.0
    %3759 = vmatpush2.msra.mxu0 0.0
    %3760 = vmatprep.subr.mxu0 0.0
    %3761 = vmatpush2.msra.mxu0 0.0
    %3762 = vmatprep.subr.mxu0 0.0
    %3763 = vmatpush2.msra.mxu0 0.0
    %3764 = vmatprep.subr.mxu0 0.0
    %3765 = vmatpush2.msra.mxu0 0.0
    %3766 = vmatprep.subr.mxu0 0.0
    %3767 = vmatpush2.msra.mxu0 0.0
    %3768 = vmatprep.subr.mxu0 0.0
    %3769 = vmatpush2.msra.mxu0 0.0
    %3770 = vmatprep.subr.mxu0 0.0
    %3771 = vmatpush2.msra.mxu0 0.0
    %3772 = vmatprep.subr.mxu0 0.0
    %3773 = vmatpush2.msra.mxu0 0.0
    %3774 = vmatprep.subr.mxu0 0.0
    %3775 = vmatpush2.msra.mxu0 0.0
    %3776 = vmatprep.subr.mxu0 0.0
    %3777 = vmatpush2.msra.mxu0 0.0
    %3778 = vmatprep.subr.mxu0 0.0
    %3779 = vmatpush2.msra.mxu0 0.0
    %3780 = vmatprep.subr.mxu0 0.0
    %3781 = vmatpush2.msra.mxu0 0.0
    %3782 = vmatprep.subr.mxu0 0.0
    %3783 = vmatpush2.msra.mxu0 0.0
    %3784 = vmatprep.subr.mxu0 0.0
    %3785 = vmatpush2.msra.mxu0 0.0
    %3786 = vmatprep.subr.mxu0 0.0
    %3787 = vmatpush2.msra.mxu0 0.0
    %3788 = vmatprep.subr.mxu0 0.0
    %3789 = vmatpush2.msra.mxu0 0.0
    %3790 = vmatprep.mubr.f32.mxu0 0.0
    %3791 = vmatmul.mubr.f32.gmra.mxu0 %v3724
    %v3792 = vpop.f32.mrf.mxu0
    %v3793 = vadd.f32 %v1193, %v3792
    %v3794 = vpop.f32.mrf.mxu0
    %3795 = vdwg.mxu0
    %v3796 = vxor.u32 %v3793, 2147483648
    %v3797 = vmul.f32 %v3796, 1.442695
    %v3798 = vpow.pop %v3797
    %v3799 = vadd.f32 %v3798, 1.0
    %v3800 = vrcp.pop %v3799
    %v3801 = vmul.f32 1.0, %v3800
    %v3802 = vtanh.pop %v3793
    %v3803 = vmul.f32 %v3801, %v3712
    %3805 = vrot.lane.b32.xlu0 %v3802, 64
    %v3806 = vpop.permute.xlu0 %3805
    %v3808 = vmul.f32 %v3801, %v3806
    %3810 = vrot.lane.b32.xlu0 %v3808, 32
    %v3811 = vpop.permute.xlu0 %3810
    %v3813 = vadd.f32 %v3803, %v3811
    %v3814 = vtanh.pop %v3813
    %3816 = vrot.lane.b32.xlu0 %v3814, 64
    %v3817 = vpop.permute.xlu0 %3816
    %v3819 = vmul.f32 %v3801, %v3817
    %3821 = vrot.lane.b32.xlu0 %v3819, 32
    %v3822 = vpop.permute.xlu0 %3821
    %3824 = vst.msk [vmem:[#allocation2 + $0x19] sm:$0x1] %vm1298, %v3822
    %v3825 = vsel %vm167, %v3822, 0
    %3827 = vmatprep.subr.mxu0 0.0
    %3828 = vmatpush1.msra.mxu0 0.0
    %3829 = vmatprep.subr.mxu0 0.0
    %3830 = vmatpush1.msra.mxu0 0.0
    %3831 = vmatprep.subr.mxu0 0.0
    %3832 = vmatpush1.msra.mxu0 0.0
    %3833 = vmatprep.subr.mxu0 0.0
    %3834 = vmatpush1.msra.mxu0 0.0
    %3835 = vmatprep.subr.mxu0 0.0
    %3836 = vmatpush1.msra.mxu0 0.0
    %3837 = vmatprep.subr.mxu0 0.0
    %3838 = vmatpush1.msra.mxu0 0.0
    %3839 = vmatprep.subr.mxu0 0.0
    %3840 = vmatpush1.msra.mxu0 0.0
    %3841 = vmatprep.subr.mxu0 0.0
    %3842 = vmatpush1.msra.mxu0 0.0
    %3843 = vmatprep.subr.mxu0 0.0
    %3844 = vmatpush1.msra.mxu0 0.0
    %3845 = vmatprep.subr.mxu0 0.0
    %3846 = vmatpush1.msra.mxu0 0.0
    %3847 = vmatprep.subr.mxu0 0.0
    %3848 = vmatpush1.msra.mxu0 0.0
    %3849 = vmatprep.subr.mxu0 0.0
    %3850 = vmatpush1.msra.mxu0 0.0
    %3851 = vmatprep.subr.mxu0 0.0
    %3852 = vmatpush1.msra.mxu0 %v1119
    %3853 = vmatprep.subr.mxu0 0.0
    %3854 = vmatpush1.msra.mxu0 %v1118
    %3855 = vmatprep.subr.mxu0 0.0
    %3856 = vmatpush1.msra.mxu0 %v1117
    %3857 = vmatprep.subr.mxu0 0.0
    %3858 = vmatpush1.msra.mxu0 %v1116
    %3859 = vmatprep.subr.mxu0 0.0
    %3860 = vmatpush2.msra.mxu0 0.0
    %3861 = vmatprep.subr.mxu0 0.0
    %3862 = vmatpush2.msra.mxu0 0.0
    %3863 = vmatprep.subr.mxu0 0.0
    %3864 = vmatpush2.msra.mxu0 0.0
    %3865 = vmatprep.subr.mxu0 0.0
    %3866 = vmatpush2.msra.mxu0 0.0
    %3867 = vmatprep.subr.mxu0 0.0
    %3868 = vmatpush2.msra.mxu0 0.0
    %3869 = vmatprep.subr.mxu0 0.0
    %3870 = vmatpush2.msra.mxu0 0.0
    %3871 = vmatprep.subr.mxu0 0.0
    %3872 = vmatpush2.msra.mxu0 0.0
    %3873 = vmatprep.subr.mxu0 0.0
    %3874 = vmatpush2.msra.mxu0 0.0
    %3875 = vmatprep.subr.mxu0 0.0
    %3876 = vmatpush2.msra.mxu0 0.0
    %3877 = vmatprep.subr.mxu0 0.0
    %3878 = vmatpush2.msra.mxu0 0.0
    %3879 = vmatprep.subr.mxu0 0.0
    %3880 = vmatpush2.msra.mxu0 0.0
    %3881 = vmatprep.subr.mxu0 0.0
    %3882 = vmatpush2.msra.mxu0 0.0
    %3883 = vmatprep.subr.mxu0 0.0
    %3884 = vmatpush2.msra.mxu0 0.0
    %3885 = vmatprep.subr.mxu0 0.0
    %3886 = vmatpush2.msra.mxu0 0.0
    %3887 = vmatprep.subr.mxu0 0.0
    %3888 = vmatpush2.msra.mxu0 0.0
    %3889 = vmatprep.subr.mxu0 0.0
    %3890 = vmatpush2.msra.mxu0 0.0
    %3891 = vmatprep.mubr.f32.mxu0 0.0
    %3892 = vmatmul.mubr.f32.gmra.mxu0 %v3825
    %v3893 = vpop.f32.mrf.mxu0
    %v3894 = vadd.f32 %v1193, %v3893
    %v3895 = vpop.f32.mrf.mxu0
    %3896 = vdwg.mxu0
    %v3897 = vxor.u32 %v3894, 2147483648
    %v3898 = vmul.f32 %v3897, 1.442695
    %v3899 = vpow.pop %v3898
    %v3900 = vadd.f32 %v3899, 1.0
    %v3901 = vrcp.pop %v3900
    %v3902 = vmul.f32 1.0, %v3901
    %v3903 = vtanh.pop %v3894
    %v3904 = vmul.f32 %v3902, %v3813
    %3906 = vrot.lane.b32.xlu0 %v3903, 64
    %v3907 = vpop.permute.xlu0 %3906
    %v3909 = vmul.f32 %v3902, %v3907
    %3911 = vrot.lane.b32.xlu0 %v3909, 32
    %v3912 = vpop.permute.xlu0 %3911
    %v3914 = vadd.f32 %v3904, %v3912
    %v3915 = vtanh.pop %v3914
    %3917 = vrot.lane.b32.xlu0 %v3915, 64
    %v3918 = vpop.permute.xlu0 %3917
    %v3920 = vmul.f32 %v3902, %v3918
    %3922 = vrot.lane.b32.xlu0 %v3920, 32
    %v3923 = vpop.permute.xlu0 %3922
    %3925 = vst.msk [vmem:[#allocation2 + $0x1a] sm:$0x1] %vm1298, %v3923
    %v3926 = vsel %vm167, %v3923, 0
    %3928 = vmatprep.subr.mxu0 0.0
    %3929 = vmatpush1.msra.mxu0 0.0
    %3930 = vmatprep.subr.mxu0 0.0
    %3931 = vmatpush1.msra.mxu0 0.0
    %3932 = vmatprep.subr.mxu0 0.0
    %3933 = vmatpush1.msra.mxu0 0.0
    %3934 = vmatprep.subr.mxu0 0.0
    %3935 = vmatpush1.msra.mxu0 0.0
    %3936 = vmatprep.subr.mxu0 0.0
    %3937 = vmatpush1.msra.mxu0 0.0
    %3938 = vmatprep.subr.mxu0 0.0
    %3939 = vmatpush1.msra.mxu0 0.0
    %3940 = vmatprep.subr.mxu0 0.0
    %3941 = vmatpush1.msra.mxu0 0.0
    %3942 = vmatprep.subr.mxu0 0.0
    %3943 = vmatpush1.msra.mxu0 0.0
    %3944 = vmatprep.subr.mxu0 0.0
    %3945 = vmatpush1.msra.mxu0 0.0
    %3946 = vmatprep.subr.mxu0 0.0
    %3947 = vmatpush1.msra.mxu0 0.0
    %3948 = vmatprep.subr.mxu0 0.0
    %3949 = vmatpush1.msra.mxu0 0.0
    %3950 = vmatprep.subr.mxu0 0.0
    %3951 = vmatpush1.msra.mxu0 0.0
    %3952 = vmatprep.subr.mxu0 0.0
    %3953 = vmatpush1.msra.mxu0 %v1119
    %3954 = vmatprep.subr.mxu0 0.0
    %3955 = vmatpush1.msra.mxu0 %v1118
    %3956 = vmatprep.subr.mxu0 0.0
    %3957 = vmatpush1.msra.mxu0 %v1117
    %3958 = vmatprep.subr.mxu0 0.0
    %3959 = vmatpush1.msra.mxu0 %v1116
    %3960 = vmatprep.subr.mxu0 0.0
    %3961 = vmatpush2.msra.mxu0 0.0
    %3962 = vmatprep.subr.mxu0 0.0
    %3963 = vmatpush2.msra.mxu0 0.0
    %3964 = vmatprep.subr.mxu0 0.0
    %3965 = vmatpush2.msra.mxu0 0.0
    %3966 = vmatprep.subr.mxu0 0.0
    %3967 = vmatpush2.msra.mxu0 0.0
    %3968 = vmatprep.subr.mxu0 0.0
    %3969 = vmatpush2.msra.mxu0 0.0
    %3970 = vmatprep.subr.mxu0 0.0
    %3971 = vmatpush2.msra.mxu0 0.0
    %3972 = vmatprep.subr.mxu0 0.0
    %3973 = vmatpush2.msra.mxu0 0.0
    %3974 = vmatprep.subr.mxu0 0.0
    %3975 = vmatpush2.msra.mxu0 0.0
    %3976 = vmatprep.subr.mxu0 0.0
    %3977 = vmatpush2.msra.mxu0 0.0
    %3978 = vmatprep.subr.mxu0 0.0
    %3979 = vmatpush2.msra.mxu0 0.0
    %3980 = vmatprep.subr.mxu0 0.0
    %3981 = vmatpush2.msra.mxu0 0.0
    %3982 = vmatprep.subr.mxu0 0.0
    %3983 = vmatpush2.msra.mxu0 0.0
    %3984 = vmatprep.subr.mxu0 0.0
    %3985 = vmatpush2.msra.mxu0 0.0
    %3986 = vmatprep.subr.mxu0 0.0
    %3987 = vmatpush2.msra.mxu0 0.0
    %3988 = vmatprep.subr.mxu0 0.0
    %3989 = vmatpush2.msra.mxu0 0.0
    %3990 = vmatprep.subr.mxu0 0.0
    %3991 = vmatpush2.msra.mxu0 0.0
    %3992 = vmatprep.mubr.f32.mxu0 0.0
    %3993 = vmatmul.mubr.f32.gmra.mxu0 %v3926
    %v3994 = vpop.f32.mrf.mxu0
    %v3995 = vadd.f32 %v1193, %v3994
    %v3996 = vpop.f32.mrf.mxu0
    %3997 = vdwg.mxu0
    %v3998 = vxor.u32 %v3995, 2147483648
    %v3999 = vmul.f32 %v3998, 1.442695
    %v4000 = vpow.pop %v3999
    %v4001 = vadd.f32 %v4000, 1.0
    %v4002 = vrcp.pop %v4001
    %v4003 = vmul.f32 1.0, %v4002
    %v4004 = vtanh.pop %v3995
    %v4005 = vmul.f32 %v4003, %v3914
    %4007 = vrot.lane.b32.xlu0 %v4004, 64
    %v4008 = vpop.permute.xlu0 %4007
    %v4010 = vmul.f32 %v4003, %v4008
    %4012 = vrot.lane.b32.xlu0 %v4010, 32
    %v4013 = vpop.permute.xlu0 %4012
    %v4015 = vadd.f32 %v4005, %v4013
    %v4016 = vtanh.pop %v4015
    %4018 = vrot.lane.b32.xlu0 %v4016, 64
    %v4019 = vpop.permute.xlu0 %4018
    %v4021 = vmul.f32 %v4003, %v4019
    %4023 = vrot.lane.b32.xlu0 %v4021, 32
    %v4024 = vpop.permute.xlu0 %4023
    %4026 = vst.msk [vmem:[#allocation2 + $0x1b] sm:$0x1] %vm1298, %v4024
    %v4027 = vsel %vm167, %v4024, 0
    %4029 = vmatprep.subr.mxu0 0.0
    %4030 = vmatpush1.msra.mxu0 0.0
    %4031 = vmatprep.subr.mxu0 0.0
    %4032 = vmatpush1.msra.mxu0 0.0
    %4033 = vmatprep.subr.mxu0 0.0
    %4034 = vmatpush1.msra.mxu0 0.0
    %4035 = vmatprep.subr.mxu0 0.0
    %4036 = vmatpush1.msra.mxu0 0.0
    %4037 = vmatprep.subr.mxu0 0.0
    %4038 = vmatpush1.msra.mxu0 0.0
    %4039 = vmatprep.subr.mxu0 0.0
    %4040 = vmatpush1.msra.mxu0 0.0
    %4041 = vmatprep.subr.mxu0 0.0
    %4042 = vmatpush1.msra.mxu0 0.0
    %4043 = vmatprep.subr.mxu0 0.0
    %4044 = vmatpush1.msra.mxu0 0.0
    %4045 = vmatprep.subr.mxu0 0.0
    %4046 = vmatpush1.msra.mxu0 0.0
    %4047 = vmatprep.subr.mxu0 0.0
    %4048 = vmatpush1.msra.mxu0 0.0
    %4049 = vmatprep.subr.mxu0 0.0
    %4050 = vmatpush1.msra.mxu0 0.0
    %4051 = vmatprep.subr.mxu0 0.0
    %4052 = vmatpush1.msra.mxu0 0.0
    %4053 = vmatprep.subr.mxu0 0.0
    %4054 = vmatpush1.msra.mxu0 %v1119
    %4055 = vmatprep.subr.mxu0 0.0
    %4056 = vmatpush1.msra.mxu0 %v1118
    %4057 = vmatprep.subr.mxu0 0.0
    %4058 = vmatpush1.msra.mxu0 %v1117
    %4059 = vmatprep.subr.mxu0 0.0
    %4060 = vmatpush1.msra.mxu0 %v1116
    %4061 = vmatprep.subr.mxu0 0.0
    %4062 = vmatpush2.msra.mxu0 0.0
    %4063 = vmatprep.subr.mxu0 0.0
    %4064 = vmatpush2.msra.mxu0 0.0
    %4065 = vmatprep.subr.mxu0 0.0
    %4066 = vmatpush2.msra.mxu0 0.0
    %4067 = vmatprep.subr.mxu0 0.0
    %4068 = vmatpush2.msra.mxu0 0.0
    %4069 = vmatprep.subr.mxu0 0.0
    %4070 = vmatpush2.msra.mxu0 0.0
    %4071 = vmatprep.subr.mxu0 0.0
    %4072 = vmatpush2.msra.mxu0 0.0
    %4073 = vmatprep.subr.mxu0 0.0
    %4074 = vmatpush2.msra.mxu0 0.0
    %4075 = vmatprep.subr.mxu0 0.0
    %4076 = vmatpush2.msra.mxu0 0.0
    %4077 = vmatprep.subr.mxu0 0.0
    %4078 = vmatpush2.msra.mxu0 0.0
    %4079 = vmatprep.subr.mxu0 0.0
    %4080 = vmatpush2.msra.mxu0 0.0
    %4081 = vmatprep.subr.mxu0 0.0
    %4082 = vmatpush2.msra.mxu0 0.0
    %4083 = vmatprep.subr.mxu0 0.0
    %4084 = vmatpush2.msra.mxu0 0.0
    %4085 = vmatprep.subr.mxu0 0.0
    %4086 = vmatpush2.msra.mxu0 0.0
    %4087 = vmatprep.subr.mxu0 0.0
    %4088 = vmatpush2.msra.mxu0 0.0
    %4089 = vmatprep.subr.mxu0 0.0
    %4090 = vmatpush2.msra.mxu0 0.0
    %4091 = vmatprep.subr.mxu0 0.0
    %4092 = vmatpush2.msra.mxu0 0.0
    %4093 = vmatprep.mubr.f32.mxu0 0.0
    %4094 = vmatmul.mubr.f32.gmra.mxu0 %v4027
    %v4095 = vpop.f32.mrf.mxu0
    %v4096 = vadd.f32 %v1193, %v4095
    %v4097 = vpop.f32.mrf.mxu0
    %4098 = vdwg.mxu0
    %v4099 = vxor.u32 %v4096, 2147483648
    %v4100 = vmul.f32 %v4099, 1.442695
    %v4101 = vpow.pop %v4100
    %v4102 = vadd.f32 %v4101, 1.0
    %v4103 = vrcp.pop %v4102
    %v4104 = vmul.f32 1.0, %v4103
    %v4105 = vtanh.pop %v4096
    %v4106 = vmul.f32 %v4104, %v4015
    %4108 = vrot.lane.b32.xlu0 %v4105, 64
    %v4109 = vpop.permute.xlu0 %4108
    %v4111 = vmul.f32 %v4104, %v4109
    %4113 = vrot.lane.b32.xlu0 %v4111, 32
    %v4114 = vpop.permute.xlu0 %4113
    %v4116 = vadd.f32 %v4106, %v4114
    %v4117 = vtanh.pop %v4116
    %4119 = vrot.lane.b32.xlu0 %v4117, 64
    %v4120 = vpop.permute.xlu0 %4119
    %v4122 = vmul.f32 %v4104, %v4120
    %4124 = vrot.lane.b32.xlu0 %v4122, 32
    %v4125 = vpop.permute.xlu0 %4124
    %4127 = vst.msk [vmem:[#allocation2 + $0x1c] sm:$0x1] %vm1298, %v4125
    %v4128 = vsel %vm167, %v4125, 0
    %4130 = vmatprep.subr.mxu0 0.0
    %4131 = vmatpush1.msra.mxu0 0.0
    %4132 = vmatprep.subr.mxu0 0.0
    %4133 = vmatpush1.msra.mxu0 0.0
    %4134 = vmatprep.subr.mxu0 0.0
    %4135 = vmatpush1.msra.mxu0 0.0
    %4136 = vmatprep.subr.mxu0 0.0
    %4137 = vmatpush1.msra.mxu0 0.0
    %4138 = vmatprep.subr.mxu0 0.0
    %4139 = vmatpush1.msra.mxu0 0.0
    %4140 = vmatprep.subr.mxu0 0.0
    %4141 = vmatpush1.msra.mxu0 0.0
    %4142 = vmatprep.subr.mxu0 0.0
    %4143 = vmatpush1.msra.mxu0 0.0
    %4144 = vmatprep.subr.mxu0 0.0
    %4145 = vmatpush1.msra.mxu0 0.0
    %4146 = vmatprep.subr.mxu0 0.0
    %4147 = vmatpush1.msra.mxu0 0.0
    %4148 = vmatprep.subr.mxu0 0.0
    %4149 = vmatpush1.msra.mxu0 0.0
    %4150 = vmatprep.subr.mxu0 0.0
    %4151 = vmatpush1.msra.mxu0 0.0
    %4152 = vmatprep.subr.mxu0 0.0
    %4153 = vmatpush1.msra.mxu0 0.0
    %4154 = vmatprep.subr.mxu0 0.0
    %4155 = vmatpush1.msra.mxu0 %v1119
    %4156 = vmatprep.subr.mxu0 0.0
    %4157 = vmatpush1.msra.mxu0 %v1118
    %4158 = vmatprep.subr.mxu0 0.0
    %4159 = vmatpush1.msra.mxu0 %v1117
    %4160 = vmatprep.subr.mxu0 0.0
    %4161 = vmatpush1.msra.mxu0 %v1116
    %4162 = vmatprep.subr.mxu0 0.0
    %4163 = vmatpush2.msra.mxu0 0.0
    %4164 = vmatprep.subr.mxu0 0.0
    %4165 = vmatpush2.msra.mxu0 0.0
    %4166 = vmatprep.subr.mxu0 0.0
    %4167 = vmatpush2.msra.mxu0 0.0
    %4168 = vmatprep.subr.mxu0 0.0
    %4169 = vmatpush2.msra.mxu0 0.0
    %4170 = vmatprep.subr.mxu0 0.0
    %4171 = vmatpush2.msra.mxu0 0.0
    %4172 = vmatprep.subr.mxu0 0.0
    %4173 = vmatpush2.msra.mxu0 0.0
    %4174 = vmatprep.subr.mxu0 0.0
    %4175 = vmatpush2.msra.mxu0 0.0
    %4176 = vmatprep.subr.mxu0 0.0
    %4177 = vmatpush2.msra.mxu0 0.0
    %4178 = vmatprep.subr.mxu0 0.0
    %4179 = vmatpush2.msra.mxu0 0.0
    %4180 = vmatprep.subr.mxu0 0.0
    %4181 = vmatpush2.msra.mxu0 0.0
    %4182 = vmatprep.subr.mxu0 0.0
    %4183 = vmatpush2.msra.mxu0 0.0
    %4184 = vmatprep.subr.mxu0 0.0
    %4185 = vmatpush2.msra.mxu0 0.0
    %4186 = vmatprep.subr.mxu0 0.0
    %4187 = vmatpush2.msra.mxu0 0.0
    %4188 = vmatprep.subr.mxu0 0.0
    %4189 = vmatpush2.msra.mxu0 0.0
    %4190 = vmatprep.subr.mxu0 0.0
    %4191 = vmatpush2.msra.mxu0 0.0
    %4192 = vmatprep.subr.mxu0 0.0
    %4193 = vmatpush2.msra.mxu0 0.0
    %4194 = vmatprep.mubr.f32.mxu0 0.0
    %4195 = vmatmul.mubr.f32.gmra.mxu0 %v4128
    %v4196 = vpop.f32.mrf.mxu0
    %v4197 = vadd.f32 %v1193, %v4196
    %v4198 = vpop.f32.mrf.mxu0
    %4199 = vdwg.mxu0
    %v4200 = vxor.u32 %v4197, 2147483648
    %v4201 = vmul.f32 %v4200, 1.442695
    %v4202 = vpow.pop %v4201
    %v4203 = vadd.f32 %v4202, 1.0
    %v4204 = vrcp.pop %v4203
    %v4205 = vmul.f32 1.0, %v4204
    %v4206 = vtanh.pop %v4197
    %v4207 = vmul.f32 %v4205, %v4116
    %4209 = vrot.lane.b32.xlu0 %v4206, 64
    %v4210 = vpop.permute.xlu0 %4209
    %v4212 = vmul.f32 %v4205, %v4210
    %4214 = vrot.lane.b32.xlu0 %v4212, 32
    %v4215 = vpop.permute.xlu0 %4214
    %v4217 = vadd.f32 %v4207, %v4215
    %v4218 = vtanh.pop %v4217
    %4220 = vrot.lane.b32.xlu0 %v4218, 64
    %v4221 = vpop.permute.xlu0 %4220
    %v4223 = vmul.f32 %v4205, %v4221
    %4225 = vrot.lane.b32.xlu0 %v4223, 32
    %v4226 = vpop.permute.xlu0 %4225
    %4228 = vst.msk [vmem:[#allocation2 + $0x1d] sm:$0x1] %vm1298, %v4226
    %v4229 = vld [vmem:[#allocation2] sm:$0xff]
    %v4230 = vld [vmem:[#allocation2 + $0x8] sm:$0xff]
    %v4231 = vld [vmem:[#allocation2 + $0x10] sm:$0xff]
    %v4232 = vld [vmem:[#allocation2 + $0x18] sm:$0x3f]
    %v4233 = vlaneseq
    %v4234 = vshrl.u32 %v4233, 7
    %v4235 = vsub.s32 0, %v4234
    %v4236 = vrot.slane %v83, %v4235
    %v4239 = vsel %vm167, %v4229, 0
    %v4242 = vsel %vm167, %v4230, 0
    %v4245 = vsel %vm167, %v4231, 0
    %v4248 = vsel %vm167, %v4232, 0
    %4250 = vmatprep.subr.mxu0 0.0
    %4251 = vmatpush1.msra.mxu0 0.0
    %4252 = vmatprep.subr.mxu0 0.0
    %4253 = vmatpush1.msra.mxu0 0.0
    %4254 = vmatprep.subr.mxu0 0.0
    %4255 = vmatpush1.msra.mxu0 0.0
    %4256 = vmatprep.subr.mxu0 0.0
    %4257 = vmatpush1.msra.mxu0 0.0
    %4258 = vmatprep.subr.mxu0 0.0
    %4259 = vmatpush1.msra.mxu0 0.0
    %4260 = vmatprep.subr.mxu0 0.0
    %4261 = vmatpush1.msra.mxu0 0.0
    %4262 = vmatprep.subr.mxu0 0.0
    %4263 = vmatpush1.msra.mxu0 0.0
    %4264 = vmatprep.subr.mxu0 0.0
    %4265 = vmatpush1.msra.mxu0 0.0
    %4266 = vmatprep.subr.mxu0 0.0
    %4267 = vmatpush1.msra.mxu0 0.0
    %4268 = vmatprep.subr.mxu0 0.0
    %4269 = vmatpush1.msra.mxu0 0.0
    %4270 = vmatprep.subr.mxu0 0.0
    %4271 = vmatpush1.msra.mxu0 0.0
    %4272 = vmatprep.subr.mxu0 0.0
    %4273 = vmatpush1.msra.mxu0 0.0
    %4274 = vmatprep.subr.mxu0 0.0
    %4275 = vmatpush1.msra.mxu0 %v82
    %4276 = vmatprep.subr.mxu0 0.0
    %4277 = vmatpush1.msra.mxu0 %v81
    %4278 = vmatprep.subr.mxu0 0.0
    %4279 = vmatpush1.msra.mxu0 %v80
    %4280 = vmatprep.subr.mxu0 0.0
    %4281 = vmatpush1.msra.mxu0 %v79
    %4282 = vmatprep.subr.mxu0 0.0
    %4283 = vmatpush2.msra.mxu0 0.0
    %4284 = vmatprep.subr.mxu0 0.0
    %4285 = vmatpush2.msra.mxu0 0.0
    %4286 = vmatprep.subr.mxu0 0.0
    %4287 = vmatpush2.msra.mxu0 0.0
    %4288 = vmatprep.subr.mxu0 0.0
    %4289 = vmatpush2.msra.mxu0 0.0
    %4290 = vmatprep.subr.mxu0 0.0
    %4291 = vmatpush2.msra.mxu0 0.0
    %4292 = vmatprep.subr.mxu0 0.0
    %4293 = vmatpush2.msra.mxu0 0.0
    %4294 = vmatprep.subr.mxu0 0.0
    %4295 = vmatpush2.msra.mxu0 0.0
    %4296 = vmatprep.subr.mxu0 0.0
    %4297 = vmatpush2.msra.mxu0 0.0
    %4298 = vmatprep.subr.mxu0 0.0
    %4299 = vmatpush2.msra.mxu0 0.0
    %4300 = vmatprep.subr.mxu0 0.0
    %4301 = vmatpush2.msra.mxu0 0.0
    %4302 = vmatprep.subr.mxu0 0.0
    %4303 = vmatpush2.msra.mxu0 0.0
    %4304 = vmatprep.subr.mxu0 0.0
    %4305 = vmatpush2.msra.mxu0 0.0
    %4306 = vmatprep.subr.mxu0 0.0
    %4307 = vmatpush2.msra.mxu0 0.0
    %4308 = vmatprep.subr.mxu0 0.0
    %4309 = vmatpush2.msra.mxu0 0.0
    %4310 = vmatprep.subr.mxu0 0.0
    %4311 = vmatpush2.msra.mxu0 0.0
    %4312 = vmatprep.subr.mxu0 0.0
    %4313 = vmatpush2.msra.mxu0 0.0
    %4314 = vmatprep.mubr.f32.mxu0 0.0
    %4315 = vmatmul.mubr.f32.gmra.mxu0 %v4239
    %v4316 = vpop.f32.mrf.mxu0
    %v4317 = vadd.f32 %v4236, %v4316
    %v4318 = vpop.f32.mrf.mxu0
    %4319 = vmatprep.mubr.f32.mxu0 0.0
    %4320 = vmatmul.mubr.f32.gmra.mxu0 %v4242
    %v4321 = vpop.f32.mrf.mxu0
    %v4322 = vadd.f32 %v4236, %v4321
    %v4323 = vpop.f32.mrf.mxu0
    %4324 = vmatprep.mubr.f32.mxu0 0.0
    %4325 = vmatmul.mubr.f32.gmra.mxu0 %v4245
    %v4326 = vpop.f32.mrf.mxu0
    %v4327 = vadd.f32 %v4236, %v4326
    %v4328 = vpop.f32.mrf.mxu0
    %4329 = vmatprep.mubr.f32.mxu0 0.0
    %4330 = vmatmul.mubr.f32.gmra.mxu0 %v4248
    %v4331 = vpop.f32.mrf.mxu0
    %v4332 = vadd.f32 %v4236, %v4331
    %v4333 = vpop.f32.mrf.mxu0
    %4334 = vdwg.mxu0
    %4335 = vst.msk [vmem:[%s9] sm:$0xff] %vm1014, %v4317
    %4336 = vst.msk [vmem:[%s9 + $0x8] sm:$0xff] %vm1014, %v4322
    %4337 = vst.msk [vmem:[%s9 + $0x10] sm:$0xff] %vm1014, %v4327
    %vm4338 = vcmask 29696
    %4339 = vst.msk [vmem:[%s9 + $0x18] sm:$0x3f] %vm4338, %v4332
    // Predicated region
    $region50: #{tpu_custom_call.1} parent=1 // pred_check
      _
    $region51: #{tpu_custom_call.1} parent=1 // pred_check_branch
      %4341 = sbr.rel (0) target = $region53
    $region52: #{tpu_custom_call.1} parent=1 // pred_region
      _
    $region53: #{tpu_custom_call.1} parent=1 // pred_fallthru
      _
    // Predicated region
    $region54: #{tpu_custom_call.1} parent=1 // pred_check
      _
    $region55: #{tpu_custom_call.1} parent=1 // pred_check_branch
      %4343 = sbr.rel (0) target = $region57
    $region56: #{tpu_custom_call.1} parent=1 // pred_region
      _
    $region57: #{tpu_custom_call.1} parent=1 // pred_fallthru
      _
    %4344 = vsyncpa [#allocation4], 1
    %4345 = vsyncpa [#allocation6], 1

</llo_original>
